<compile_context>
chip_gen: v6e
topology: v6e:2x2x1
jax: 0.10.0
libtpu: 0.0.40
codegen_flags: <defaults>
</compile_context>

<pallas_src>
import functools

import jax
import jax.numpy as jnp
from jax import lax
from jax.experimental import pallas as pl
from jax.experimental.pallas import tpu as pltpu


def _spatial_linear_attn_kernel(x_ref, wqkv_ref, wout_ref, bout_ref, mask_ref,
                                o_ref, q_s, k_s, v_s,
                                *, heads, dim_head, tb, n_spatial):
    """One grid step processes `tb` folded-batch samples.

    x_ref    : (C, tb*N)   f32   channels x (samples-flattened spatial)
    wqkv_ref : (3*H*D, C)  bf16  to_qkv 1x1-conv weight (no bias)
    wout_ref : (C, H*D)    bf16  to_out 1x1-conv weight
    bout_ref : (C, 1)      f32   to_out bias
    mask_ref : (H*D, H*D)  f32   block-diag head mask with scale/(h*w) folded in
    o_ref    : (C, tb*N)         output block
    q_s/k_s/v_s : VMEM scratch (H*D, tb*N), bf16 / f32 / bf16
    """
    hidden = heads * dim_head
    n = n_spatial
    m = tb * n

    x = x_ref[...]                                           # (C, m) f32

    # ---- qkv projection: contraction over the tiny channel dim.  bf16 MXU
    #      operands with f32 accumulation (an f32 matmul here costs ~3x the
    #      MXU passes for negligible accuracy gain at K=C).
    qkv = jnp.dot(wqkv_ref[...], x.astype(jnp.bfloat16),
                  preferred_element_type=jnp.float32)        # (3*hidden, m)

    # ---- q softmax over the head-dim axis, batched over heads & samples ----
    q3 = qkv[:hidden].reshape(heads, dim_head, m)
    q3 = q3 - jnp.max(q3, axis=1, keepdims=True)
    q_e = jnp.exp(q3)
    q_inv = pl.reciprocal(jnp.sum(q_e, axis=1, keepdims=True), approx=True)
    q_s[...] = (q_e * q_inv).reshape(hidden, m).astype(jnp.bfloat16)

    # k softmax is over each sample's own spatial axis -> done per sample in
    # the loop below; stash raw k (f32) and v (bf16) in VMEM scratch so the
    # fori_loop can take dynamic lane slices of refs.
    k_s[...] = qkv[hidden:2 * hidden]
    v_s[...] = qkv[2 * hidden:].astype(jnp.bfloat16)

    w_out = wout_ref[...]                                    # (C, hidden) bf16
    mask = mask_ref[...]                                     # (hidden, hidden) f32
    bias = bout_ref[...]                                     # (C, 1) f32

    def per_sample(t, carry):
        if n % 128 == 0:
            start = pl.multiple_of(t * n, 128)               # lane-aligned window
        else:
            start = t * n
        sl = pl.ds(start, n)

        # k softmax over the spatial axis (torch dim=-1).
        k_t = k_s[:, sl]                                     # (hidden, n) f32
        k_t = k_t - jnp.max(k_t, axis=1, keepdims=True)
        k_e = jnp.exp(k_t)
        k_inv = pl.reciprocal(jnp.sum(k_e, axis=1, keepdims=True), approx=True)
        k_bf = (k_e * k_inv).astype(jnp.bfloat16)
        v_bf = v_s[:, sl]                                    # (hidden, n) bf16

        # context[d, e] = sum_n k[d, n] * v[e, n]            -> (hidden, hidden)
        ctx = lax.dot_general(k_bf, v_bf, (((1,), (1,)), ((), ())),
                              preferred_element_type=jnp.float32)
        ctx = (ctx * mask).astype(jnp.bfloat16)              # block-diag + scale/N

        # to_out folded into the tiny context:
        # ctx_f[c, d] = sum_e w_out[c, e] * ctx[d, e]        -> (C, hidden)
        ctx_f = lax.dot_general(w_out, ctx, (((1,), (1,)), ((), ())),
                                preferred_element_type=jnp.float32)

        # y[c, n'] = sum_d ctx_f[c, d] * q[d, n']            -> (C, n)
        y = jnp.dot(ctx_f.astype(jnp.bfloat16), q_s[:, sl],
                    preferred_element_type=jnp.float32)
        o_ref[:, sl] = (y + bias).astype(o_ref.dtype)
        return carry

    lax.fori_loop(0, tb, per_sample, 0, unroll=(tb <= 4))


def _tpu_config():
    """Generation-aware (core count, vmem_limit_bytes, tb-choice budget)."""
    kind = ""
    try:
        kind = jax.devices()[0].device_kind.lower()
    except Exception:
        pass
    if "v5" in kind or "v6" in kind:
        # Single TensorCore per chip, 128 MiB physical VMEM: big fat blocks,
        # no need to keep multiple grid steps alive for parallelism.
        return 1, 96 * 1024 * 1024, 48 * 1024 * 1024
    # v7x (2 TensorCores, 64 MiB VMEM each) and unknown parts: conservative
    # budget, keep >= 2 grid steps so dimension_semantics=("parallel",) can
    # shard across both TensorCores.
    return 2, 48 * 1024 * 1024, 28 * 1024 * 1024


def _choose_tb(batch, c, n, hidden, num_cores, vmem_budget_bytes):
    """Largest per-step sample count that (a) divides `batch`, (b) keeps the
    (C, tb*N) block legal under the (8,128) rule, (c) fits the VMEM budget
    counting blocks + scratch + large intermediates + lane-padded weights, and
    (d) leaves >= num_cores grid steps on multi-TensorCore parts."""

    def pad8(d):
        return ((d + 7) // 8) * 8

    def pad128(d):
        return ((d + 127) // 128) * 128

    def vmem_est(tb):
        m = tb * n
        blocks = 2 * 2 * (c * m * 4)                        # x & o, double-buffered f32
        scratch = m * hidden * (2 + 4 + 2)                  # q bf16 + k f32 + v bf16
        interm = m * (3 * hidden * 4                        # qkv (f32)
                      + 2 * hidden * 4                      # q-softmax temporaries
                      + hidden * 2                          # bf16 staging of q
                      + c * 6)                              # x value + bf16 cast
        loop = (n * hidden * 12                             # per-sample f32 temporaries
                + n * hidden * 2 * 3                        # bf16 k/v/q slices
                + hidden * hidden * 6 + c * n * 8)          # ctx (f32+bf16), y
        weights = 2 * (pad8(3 * hidden) * pad128(c) * 2     # w_qkv bf16 (lane-padded)
                       + pad8(c) * pad128(hidden) * 2       # w_out bf16
                       + pad8(c) * pad128(1) * 4            # bias f32
                       + pad8(hidden) * pad128(hidden) * 4)  # mask f32
        return blocks + scratch + interm + loop + weights

    legal = [tb for tb in range(1, batch + 1)
             if batch % tb == 0 and ((tb * n) % 128 == 0 or tb == batch)]
    fitting = [tb for tb in legal if vmem_est(tb) <= vmem_budget_bytes]
    pool = fitting if fitting else [min(legal)]
    if num_cores >= 2:
        multi = [tb for tb in pool if batch // tb >= num_cores]
        if multi:
            pool = multi
    return max(pool)


def spatial_linear_attention(x, w_qkv, w_out, b_out, *, heads, dim_head):
    """x: (b, c, f, h, w) float32 -> (b, c, f, h, w) float32."""
    b, c, f, h, w = x.shape
    B, N = b * f, h * w
    hidden = heads * dim_head
    scale = dim_head ** (-0.5)

    # 'b c f h w -> c (b f) (h w)'  (channel-major so 1x1 convs are matmuls
    # and the kernel output is lane-dense).
    # TODO(synk): these boundary transposes could be fused into the
    # producer/consumer of this op instead of standalone XLA transposes.
    x2 = jnp.transpose(x, (1, 0, 2, 3, 4)).reshape(c, B * N)

    # Block-diagonal head mask with scale and 1/(h*w) folded in; built once on
    # the host instead of rebuilt with iotas every grid step.
    head_id = jnp.arange(hidden, dtype=jnp.int32) // dim_head
    mask = jnp.where(head_id[:, None] == head_id[None, :],
                     jnp.float32(scale / N), jnp.float32(0.0))

    num_cores, vmem_limit, vmem_budget = _tpu_config()
    tb = _choose_tb(B, c, N, hidden, num_cores, vmem_budget)
    m = tb * N

    kernel = functools.partial(_spatial_linear_attn_kernel,
                               heads=heads, dim_head=dim_head,
                               tb=tb, n_spatial=N)

    flops_per_sample = (2 * 3 * hidden * c * N       # qkv projection
                        + 2 * hidden * hidden * N    # context matmul
                        + 2 * c * hidden * hidden    # w_out folded into context
                        + 2 * c * hidden * N)        # (folded ctx) . q
    cost = pl.CostEstimate(
        flops=int(B * flops_per_sample),
        transcendentals=int(B * 2 * hidden * N),
        bytes_accessed=int(4 * 2 * c * B * N
                           + 2 * (3 * hidden * c + c * hidden)
                           + 4 * (c + hidden * hidden)))

    out = pl.pallas_call(
        kernel,
        out_shape=jax.ShapeDtypeStruct((c, B * N), x.dtype),
        grid=(B // tb,),
        in_specs=[
            pl.BlockSpec((c, m), lambda i: (0, i)),
            pl.BlockSpec((3 * hidden, c), lambda i: (0, 0)),
            pl.BlockSpec((c, hidden), lambda i: (0, 0)),
            pl.BlockSpec((c, 1), lambda i: (0, 0)),
            pl.BlockSpec((hidden, hidden), lambda i: (0, 0)),
        ],
        out_specs=pl.BlockSpec((c, m), lambda i: (0, i)),
        scratch_shapes=[
            pltpu.VMEM((hidden, m), jnp.bfloat16),   # q (post-softmax)
            pltpu.VMEM((hidden, m), jnp.float32),    # k (pre-softmax)
            pltpu.VMEM((hidden, m), jnp.bfloat16),   # v
        ],
        compiler_params=pltpu.CompilerParams(
            dimension_semantics=("parallel",),
            vmem_limit_bytes=vmem_limit),
        cost_estimate=cost,
    )(x2, w_qkv.astype(jnp.bfloat16), w_out.astype(jnp.bfloat16), b_out, mask)

    # 'c (b f) (h w) -> b c f h w'
    out = out.reshape(c, b, f, h, w)
    return jnp.transpose(out, (1, 0, 2, 3, 4))


def _reference(x, w_qkv, w_out, b_out, *, heads, dim_head):
    """Pure-JAX f32 reference mirroring the PyTorch forward."""
    b, c, f, h, w = x.shape
    B, N, hidden = b * f, h * w, heads * dim_head
    scale = dim_head ** (-0.5)
    x2 = jnp.transpose(x, (0, 2, 1, 3, 4)).reshape(B, c, N)
    qkv = jnp.einsum('oc,bcn->bon', w_qkv, x2)
    q, k, v = jnp.split(qkv, 3, axis=1)
    rs = lambda t: t.reshape(B, heads, dim_head, N)
    q, k, v = rs(q), rs(k), rs(v)
    q = jax.nn.softmax(q, axis=-2) * scale
    k = jax.nn.softmax(k, axis=-1)
    v = v / N
    ctx = jnp.einsum('bhdn,bhen->bhde', k, v)
    out = jnp.einsum('bhde,bhdn->bhen', ctx, q)
    out = out.reshape(B, hidden, N)
    out = jnp.einsum('co,bon->bcn', w_out, out) + b_out[None, :, :]
    return jnp.transpose(out.reshape(b, f, c, h, w), (0, 2, 1, 3, 4))


if __name__ == "__main__":
    # Module hyper-params (consistent with __init__ defaults), small 5-D input.
    dim, heads, dim_head = 4, 4, 32
    hidden = heads * dim_head            # 128
    b, c, f, h, w = 2, dim, 2, 16, 16    # (b, c, f, h, w)

    key = jax.random.PRNGKey(0)
    kx, kq, ko, kb = jax.random.split(key, 4)

    x = jax.random.normal(kx, (b, c, f, h, w), dtype=jnp.float32)
    # Shapes match the nn.Conv2d 1x1 weights (squeezed) and bias.
    w_qkv = jax.random.normal(kq, (3 * hidden, dim), dtype=jnp.float32) * 0.1
    w_out = jax.random.normal(ko, (dim, hidden), dtype=jnp.float32) * 0.1
    b_out = jax.random.normal(kb, (dim, 1), dtype=jnp.float32) * 0.1

    y = spatial_linear_attention(x, w_qkv, w_out, b_out,
                                 heads=heads, dim_head=dim_head)
    y = jax.block_until_ready(y)

    y_ref = _reference(x, w_qkv, w_out, b_out, heads=heads, dim_head=dim_head)
    assert y.shape == (b, c, f, h, w)
    # bf16 MXU operands (incl. the qkv projection) + approx-reciprocal softmax
    # denominators => relaxed tolerance.
    assert jnp.allclose(y, y_ref, atol=3e-3, rtol=3e-3), "mismatch vs reference"

    print("KERNEL_OK")
</pallas_src>

<mosaic_0001>
module attributes {stable_mosaic.version = 11 : i64} {
  func.func @_spatial_linear_attn_kernel(%arg0: i32, %arg1: memref<4x512xf32, #tpu.memory_space<vmem>>, %arg2: memref<384x4xbf16, #tpu.memory_space<vmem>>, %arg3: memref<4x128xbf16, #tpu.memory_space<vmem>>, %arg4: memref<4x1xf32, #tpu.memory_space<vmem>>, %arg5: memref<128x128xf32, #tpu.memory_space<vmem>>, %arg6: memref<4x512xf32, #tpu.memory_space<vmem>>, %arg7: memref<128x512xbf16, #tpu.memory_space<vmem>>, %arg8: memref<128x512xf32, #tpu.memory_space<vmem>>, %arg9: memref<128x512xbf16, #tpu.memory_space<vmem>>) attributes {dimension_semantics = [#tpu.dimension_semantics<parallel>], iteration_bounds = array<i64: 2>, scalar_prefetch = 0 : i64, scratch_operands = 3 : i64, tpu.core_type = #tpu.core_type<tc>, window_params = [{transform_indices = @transform_0, window_bounds = array<i64: 4, 512>}, {pipeline_mode = #tpu.pipeline_mode<synchronous>, transform_indices = @transform_1, window_bounds = array<i64: 384, 4>}, {pipeline_mode = #tpu.pipeline_mode<synchronous>, transform_indices = @transform_2, window_bounds = array<i64: 4, 128>}, {pipeline_mode = #tpu.pipeline_mode<synchronous>, transform_indices = @transform_3, window_bounds = array<i64: 4, 1>}, {pipeline_mode = #tpu.pipeline_mode<synchronous>, transform_indices = @transform_4, window_bounds = array<i64: 128, 128>}, {transform_indices = @transform_5, window_bounds = array<i64: 4, 512>}]} {
    %c0 = arith.constant 0 : index
    %c0_0 = arith.constant 0 : index
    %0 = vector.load %arg1[%c0, %c0_0] : memref<4x512xf32, #tpu.memory_space<vmem>>, vector<4x512xf32>
    %c0_1 = arith.constant 0 : index
    %c0_2 = arith.constant 0 : index
    %1 = vector.load %arg2[%c0_1, %c0_2] : memref<384x4xbf16, #tpu.memory_space<vmem>>, vector<384x4xbf16>
    %2 = arith.truncf %0 : vector<4x512xf32> to vector<4x512xbf16>
    %cst = arith.constant dense<0.000000e+00> : vector<384x512xf32>
    %3 = tpu.matmul %1, %2, %cst {dimension_numbers = #tpu.dot_dimension_numbers<[1], [0], [0], [1], [0, 0, 1, 1], [], []>} : vector<384x4xbf16>, vector<4x512xbf16>, vector<384x512xf32> -> vector<384x512xf32>
    %4 = vector.extract_strided_slice %3 {offsets = [0, 0], sizes = [128, 512], strides = [1, 1]} : vector<384x512xf32> to vector<128x512xf32>
    %5 = vector.shape_cast %4 : vector<128x512xf32> to vector<4x32x512xf32>
    %cst_3 = arith.constant dense<0xFF800000> : vector<4x512xf32>
    %6 = vector.multi_reduction <maximumf>, %5, %cst_3 [1] : vector<4x32x512xf32> to vector<4x512xf32>
    %7 = vector.shape_cast %6 : vector<4x512xf32> to vector<4x1x512xf32>
    %8 = vector.broadcast %7 : vector<4x1x512xf32> to vector<4x32x512xf32>
    %9 = arith.subf %5, %8 : vector<4x32x512xf32>
    %10 = math.exp %9 : vector<4x32x512xf32>
    %cst_4 = arith.constant dense<0.000000e+00> : vector<4x512xf32>
    %11 = vector.multi_reduction <add>, %10, %cst_4 [1] : vector<4x32x512xf32> to vector<4x512xf32>
    %12 = vector.shape_cast %11 : vector<4x512xf32> to vector<4x1x512xf32>
    %13 = tpu.reciprocal %12 {approx = true} : vector<4x1x512xf32> -> vector<4x1x512xf32>
    %14 = vector.broadcast %13 : vector<4x1x512xf32> to vector<4x32x512xf32>
    %15 = arith.mulf %10, %14 : vector<4x32x512xf32>
    %16 = vector.shape_cast %15 : vector<4x32x512xf32> to vector<128x512xf32>
    %17 = arith.truncf %16 : vector<128x512xf32> to vector<128x512xbf16>
    %c0_5 = arith.constant 0 : index
    %c0_6 = arith.constant 0 : index
    %18 = vector.load %arg7[%c0_5, %c0_6] : memref<128x512xbf16, #tpu.memory_space<vmem>>, vector<128x512xbf16>
    tpu.vector_store %arg7[%c0_5, %c0_6], %17 {strides = array<i32>} : memref<128x512xbf16, #tpu.memory_space<vmem>>, vector<128x512xbf16>,
    %19 = vector.extract_strided_slice %3 {offsets = [128, 0], sizes = [128, 512], strides = [1, 1]} : vector<384x512xf32> to vector<128x512xf32>
    %c0_7 = arith.constant 0 : index
    %c0_8 = arith.constant 0 : index
    %20 = vector.load %arg8[%c0_7, %c0_8] : memref<128x512xf32, #tpu.memory_space<vmem>>, vector<128x512xf32>
    tpu.vector_store %arg8[%c0_7, %c0_8], %19 {strides = array<i32>} : memref<128x512xf32, #tpu.memory_space<vmem>>, vector<128x512xf32>,
    %21 = vector.extract_strided_slice %3 {offsets = [256, 0], sizes = [128, 512], strides = [1, 1]} : vector<384x512xf32> to vector<128x512xf32>
    %22 = arith.truncf %21 : vector<128x512xf32> to vector<128x512xbf16>
    %c0_9 = arith.constant 0 : index
    %c0_10 = arith.constant 0 : index
    %23 = vector.load %arg9[%c0_9, %c0_10] : memref<128x512xbf16, #tpu.memory_space<vmem>>, vector<128x512xbf16>
    tpu.vector_store %arg9[%c0_9, %c0_10], %22 {strides = array<i32>} : memref<128x512xbf16, #tpu.memory_space<vmem>>, vector<128x512xbf16>,
    %c0_11 = arith.constant 0 : index
    %c0_12 = arith.constant 0 : index
    %24 = vector.load %arg3[%c0_11, %c0_12] : memref<4x128xbf16, #tpu.memory_space<vmem>>, vector<4x128xbf16>
    %c0_13 = arith.constant 0 : index
    %c0_14 = arith.constant 0 : index
    %25 = vector.load %arg5[%c0_13, %c0_14] : memref<128x128xf32, #tpu.memory_space<vmem>>, vector<128x128xf32>
    %c0_15 = arith.constant 0 : index
    %c0_16 = arith.constant 0 : index
    %26 = vector.load %arg4[%c0_15, %c0_16] : memref<4x1xf32, #tpu.memory_space<vmem>>, vector<4x1xf32>
    %c0_i32 = arith.constant 0 : i32
    %c256_i32 = arith.constant 256 : i32
    %27 = arith.muli %c0_i32, %c256_i32 : i32
    %28 = tpu.assume_multiple %27, 128 : i32
    %c0_17 = arith.constant 0 : index
    %29 = arith.index_cast %28 : i32 to index
    %30 = vector.load %arg8[%c0_17, %29] : memref<128x512xf32, #tpu.memory_space<vmem>>, vector<128x256xf32>
    %cst_18 = arith.constant dense<0xFF800000> : vector<128xf32>
    %31 = vector.multi_reduction <maximumf>, %30, %cst_18 [1] : vector<128x256xf32> to vector<128xf32>
    %32 = vector.shape_cast %31 : vector<128xf32> to vector<128x1xf32>
    %33 = vector.broadcast %32 : vector<128x1xf32> to vector<128x256xf32>
    %34 = arith.subf %30, %33 : vector<128x256xf32>
    %35 = math.exp %34 : vector<128x256xf32>
    %cst_19 = arith.constant dense<0.000000e+00> : vector<128xf32>
    %36 = vector.multi_reduction <add>, %35, %cst_19 [1] : vector<128x256xf32> to vector<128xf32>
    %37 = vector.shape_cast %36 : vector<128xf32> to vector<128x1xf32>
    %38 = tpu.reciprocal %37 {approx = true} : vector<128x1xf32> -> vector<128x1xf32>
    %39 = vector.broadcast %38 : vector<128x1xf32> to vector<128x256xf32>
    %40 = arith.mulf %35, %39 : vector<128x256xf32>
    %41 = arith.truncf %40 : vector<128x256xf32> to vector<128x256xbf16>
    %c0_20 = arith.constant 0 : index
    %42 = arith.index_cast %28 : i32 to index
    %43 = vector.load %arg9[%c0_20, %42] : memref<128x512xbf16, #tpu.memory_space<vmem>>, vector<128x256xbf16>
    %cst_21 = arith.constant dense<0.000000e+00> : vector<128x128xf32>
    %44 = tpu.matmul %41, %43, %cst_21 {dimension_numbers = #tpu.dot_dimension_numbers<[1], [1], [0], [0], [0, 0, 1, 0], [], []>} : vector<128x256xbf16>, vector<128x256xbf16>, vector<128x128xf32> -> vector<128x128xf32>
    %45 = arith.mulf %44, %25 : vector<128x128xf32>
    %46 = arith.truncf %45 : vector<128x128xf32> to vector<128x128xbf16>
    %cst_22 = arith.constant dense<0.000000e+00> : vector<4x128xf32>
    %47 = tpu.matmul %24, %46, %cst_22 {dimension_numbers = #tpu.dot_dimension_numbers<[1], [1], [0], [0], [0, 0, 1, 0], [], []>} : vector<4x128xbf16>, vector<128x128xbf16>, vector<4x128xf32> -> vector<4x128xf32>
    %48 = arith.truncf %47 : vector<4x128xf32> to vector<4x128xbf16>
    %c0_23 = arith.constant 0 : index
    %49 = arith.index_cast %28 : i32 to index
    %50 = vector.load %arg7[%c0_23, %49] : memref<128x512xbf16, #tpu.memory_space<vmem>>, vector<128x256xbf16>
    %cst_24 = arith.constant dense<0.000000e+00> : vector<4x256xf32>
    %51 = tpu.matmul %48, %50, %cst_24 {dimension_numbers = #tpu.dot_dimension_numbers<[1], [0], [0], [1], [0, 0, 1, 1], [], []>} : vector<4x128xbf16>, vector<128x256xbf16>, vector<4x256xf32> -> vector<4x256xf32>
    %52 = vector.broadcast %26 : vector<4x1xf32> to vector<4x256xf32>
    %53 = arith.addf %51, %52 : vector<4x256xf32>
    %c0_25 = arith.constant 0 : index
    %54 = arith.index_cast %28 : i32 to index
    %55 = vector.load %arg6[%c0_25, %54] : memref<4x512xf32, #tpu.memory_space<vmem>>, vector<4x256xf32>
    tpu.vector_store %arg6[%c0_25, %54], %53 {strides = array<i32>} : memref<4x512xf32, #tpu.memory_space<vmem>>, vector<4x256xf32>,
    %c1_i32 = arith.constant 1 : i32
    %c256_i32_26 = arith.constant 256 : i32
    %56 = arith.muli %c1_i32, %c256_i32_26 : i32
    %57 = tpu.assume_multiple %56, 128 : i32
    %c0_27 = arith.constant 0 : index
    %58 = arith.index_cast %57 : i32 to index
    %59 = vector.load %arg8[%c0_27, %58] : memref<128x512xf32, #tpu.memory_space<vmem>>, vector<128x256xf32>
    %cst_28 = arith.constant dense<0xFF800000> : vector<128xf32>
    %60 = vector.multi_reduction <maximumf>, %59, %cst_28 [1] : vector<128x256xf32> to vector<128xf32>
    %61 = vector.shape_cast %60 : vector<128xf32> to vector<128x1xf32>
    %62 = vector.broadcast %61 : vector<128x1xf32> to vector<128x256xf32>
    %63 = arith.subf %59, %62 : vector<128x256xf32>
    %64 = math.exp %63 : vector<128x256xf32>
    %cst_29 = arith.constant dense<0.000000e+00> : vector<128xf32>
    %65 = vector.multi_reduction <add>, %64, %cst_29 [1] : vector<128x256xf32> to vector<128xf32>
    %66 = vector.shape_cast %65 : vector<128xf32> to vector<128x1xf32>
    %67 = tpu.reciprocal %66 {approx = true} : vector<128x1xf32> -> vector<128x1xf32>
    %68 = vector.broadcast %67 : vector<128x1xf32> to vector<128x256xf32>
    %69 = arith.mulf %64, %68 : vector<128x256xf32>
    %70 = arith.truncf %69 : vector<128x256xf32> to vector<128x256xbf16>
    %c0_30 = arith.constant 0 : index
    %71 = arith.index_cast %57 : i32 to index
    %72 = vector.load %arg9[%c0_30, %71] : memref<128x512xbf16, #tpu.memory_space<vmem>>, vector<128x256xbf16>
    %cst_31 = arith.constant dense<0.000000e+00> : vector<128x128xf32>
    %73 = tpu.matmul %70, %72, %cst_31 {dimension_numbers = #tpu.dot_dimension_numbers<[1], [1], [0], [0], [0, 0, 1, 0], [], []>} : vector<128x256xbf16>, vector<128x256xbf16>, vector<128x128xf32> -> vector<128x128xf32>
    %74 = arith.mulf %73, %25 : vector<128x128xf32>
    %75 = arith.truncf %74 : vector<128x128xf32> to vector<128x128xbf16>
    %cst_32 = arith.constant dense<0.000000e+00> : vector<4x128xf32>
    %76 = tpu.matmul %24, %75, %cst_32 {dimension_numbers = #tpu.dot_dimension_numbers<[1], [1], [0], [0], [0, 0, 1, 0], [], []>} : vector<4x128xbf16>, vector<128x128xbf16>, vector<4x128xf32> -> vector<4x128xf32>
    %77 = arith.truncf %76 : vector<4x128xf32> to vector<4x128xbf16>
    %c0_33 = arith.constant 0 : index
    %78 = arith.index_cast %57 : i32 to index
    %79 = vector.load %arg7[%c0_33, %78] : memref<128x512xbf16, #tpu.memory_space<vmem>>, vector<128x256xbf16>
    %cst_34 = arith.constant dense<0.000000e+00> : vector<4x256xf32>
    %80 = tpu.matmul %77, %79, %cst_34 {dimension_numbers = #tpu.dot_dimension_numbers<[1], [0], [0], [1], [0, 0, 1, 1], [], []>} : vector<4x128xbf16>, vector<128x256xbf16>, vector<4x256xf32> -> vector<4x256xf32>
    %81 = vector.broadcast %26 : vector<4x1xf32> to vector<4x256xf32>
    %82 = arith.addf %80, %81 : vector<4x256xf32>
    %c0_35 = arith.constant 0 : index
    %83 = arith.index_cast %57 : i32 to index
    %84 = vector.load %arg6[%c0_35, %83] : memref<4x512xf32, #tpu.memory_space<vmem>>, vector<4x256xf32>
    tpu.vector_store %arg6[%c0_35, %83], %82 {strides = array<i32>} : memref<4x512xf32, #tpu.memory_space<vmem>>, vector<4x256xf32>,
    %c2_i32 = arith.constant 2 : i32
    return
  }
  func.func @transform_0(%arg0: i32) -> (i32, i32) {
    %c0_i32 = arith.constant 0 : i32
    %c0_i32_0 = arith.constant 0 : i32
    return %c0_i32, %arg0 : i32, i32
  }
  func.func @transform_1(%arg0: i32) -> (i32, i32) {
    %c0_i32 = arith.constant 0 : i32
    %c0_i32_0 = arith.constant 0 : i32
    %c0_i32_1 = arith.constant 0 : i32
    return %c0_i32, %c0_i32_0 : i32, i32
  }
  func.func @transform_2(%arg0: i32) -> (i32, i32) {
    %c0_i32 = arith.constant 0 : i32
    %c0_i32_0 = arith.constant 0 : i32
    %c0_i32_1 = arith.constant 0 : i32
    return %c0_i32, %c0_i32_0 : i32, i32
  }
  func.func @transform_3(%arg0: i32) -> (i32, i32) {
    %c0_i32 = arith.constant 0 : i32
    %c0_i32_0 = arith.constant 0 : i32
    %c0_i32_1 = arith.constant 0 : i32
    return %c0_i32, %c0_i32_0 : i32, i32
  }
  func.func @transform_4(%arg0: i32) -> (i32, i32) {
    %c0_i32 = arith.constant 0 : i32
    %c0_i32_0 = arith.constant 0 : i32
    %c0_i32_1 = arith.constant 0 : i32
    return %c0_i32, %c0_i32_0 : i32, i32
  }
  func.func @transform_5(%arg0: i32) -> (i32, i32) {
    %c0_i32 = arith.constant 0 : i32
    %c0_i32_0 = arith.constant 0 : i32
    return %c0_i32, %arg0 : i32, i32
  }
}

</mosaic_0001>

<llo_original>
// kernel: tpu_custom_call.1
$region0: #{tpu_custom_call.1}
  #allocation0 [shape = 'u32[]', space=smem, size = 0x4, offset = 0x4, fixed_abs, tag = 'smem constant byte address 0x4 - core index']
  #allocation1 [shape = 'u32[144,128]{1,0:T(1,128)}', space=vmem, size = 0x12000, scoped, tag = 'internal scratch']
  #allocation2 [shape = 'bf16[128,512]{1,0:T(8,128)(2,1)}', space=vmem, size = 0x20000, scoped, tag = 'scratch operand']
  #allocation3 [shape = 'f32[128,512]{1,0:T(8,128)}', space=vmem, size = 0x40000, scoped, tag = 'scratch operand']
  #allocation4 [shape = 'bf16[128,512]{1,0:T(8,128)(2,1)}', space=vmem, size = 0x20000, scoped, tag = 'scratch operand']
  %s0 = inlined_call_operand.vmem [shape: f32[4,1024], index: 0, kind: input, shape index: {}]
  %s1 = inlined_call_operand.vmem [shape: bf16[384,4], index: 1, kind: input, shape index: {}]
  %s2 = inlined_call_operand.vmem [shape: bf16[4,128], index: 2, kind: input, shape index: {}]
  %s3 = inlined_call_operand.vmem [shape: f32[4,1], index: 3, kind: input, shape index: {}]
  %s4 = inlined_call_operand.vmem [shape: f32[128,128], index: 4, kind: input, shape index: {}]
  %s5 = inlined_call_operand.hbm [shape: f32[4,1024], index: 5, kind: output, shape index: {}]
  %s6 = sld [smem:[#allocation0]]
  $region53: #{tpu_custom_call.1} parent=0
    _
  %s8 = ssub.s32 1, %s6
  %s9 = scalar_select 0, %s8, %s6
  $region1: #{tpu_custom_call.1} parent=0
    #allocation5 [shape = 'u8[16384]{0}', space=vmem, size = 0x4000, scoped, tag = 'output window, operand 0']
    #allocation6 [shape = 's32[2]{0}', space=sflag, size = 0x8, scoped, tag = 'scoped memory for tpu_custom_call.1']
    %10 = vsyncpa [#allocation6], 0
    %s11 = scalar_lea.sflag [#allocation6], 1
    %12 = vsyncpa %s11, 0
    loop: start=0, step=1, limit=4
    $region2: #{tpu_custom_call.1} parent=1 // loop_pre_header
      _
    $region3: #{tpu_custom_call.1} parent=1 // loop_header
      %s14 = sphi 0, %s18
      %p15 = scmp.ge.s32.totalorder %s14, 4
      %s24 = sphi 0, %s26
      %s27 = sphi 0, %s24
      %s28 = sphi 0, %s27
      %s44 = sphi 0, %s28
      %s48 = sphi 0, %s48
      %s50 = sphi 0, %s48
      %s51 = sphi 0, %s50
      %s65 = sphi 0, %s51
      %s69 = sphi 0, %s69
      %s71 = sphi 0, %s69
      %s72 = sphi 0, %s71
      %s86 = sphi 0, %s72
      %s90 = sphi 0, %s90
      %s92 = sphi 0, %s90
      %s93 = sphi 0, %s92
      %s107 = sphi 0, %s93
      %s111 = sphi 0, %s111
      %s113 = sphi 0, %s111
      %s114 = sphi 0, %s113
      %s128 = sphi 0, %s114
      %s134 = sphi 0, %s136
      %s137 = sphi 0, %s134
      %s138 = sphi 0, %s137
      %s154 = sphi 0, %s138
    $region4: #{tpu_custom_call.1} parent=1 // loop_header_branch
      %17 = sbr.rel (%p15) target = $region8
    $region5: #{tpu_custom_call.1} parent=1 // loop_body
      %s19 = ssub.s32 %s14, 1
      %s20 = ssub.s32 %s14, 2
      %s21 = sadd.s32 %s14, 1
      %s22 = ssub.s32 %s14, %s21
      %p23 = scmp.eq.s32.totalorder %s22, 0
      %s25 = sadd.s32 %s24, 1
      %s26 = scalar_select %p23, %s24, %s25
      %p29 = pneg %p23
      %p30 = scmp.eq.s32.totalorder %s14, 1
      %p31 = por %p29, %p30
      %p32 = scmp.ne.s32.totalorder %s24, %s27
      %p33 = scmp.eq.s32.totalorder %s14, 0
      %p34 = por %p32, %p33
      %p35 = scmp.ne.s32.totalorder %s24, %s27
      %p36 = scmp.eq.s32.totalorder %s19, 1
      %p37 = por %p35, %p36
      %p38 = scmp.ne.s32.totalorder %s27, %s28
      %p39 = scmp.eq.s32.totalorder %s19, 0
      %p40 = por %p38, %p39
      %p41 = scmp.ne.s32.totalorder %s27, %s28
      %p42 = scmp.eq.s32.totalorder %s20, 1
      %p43 = por %p41, %p42
      %p45 = scmp.ne.s32.totalorder %s28, %s44
      %p46 = scmp.eq.s32.totalorder %s20, 0
      %p47 = por %p45, %p46
      %s49 = sadd.s32 %s48, 1
      %p52 = scmp.eq.s32.totalorder %s14, 1
      %p53 = scmp.ne.s32.totalorder %s48, %s50
      %p54 = scmp.eq.s32.totalorder %s14, 0
      %p55 = por %p53, %p54
      %p56 = scmp.ne.s32.totalorder %s48, %s50
      %p57 = scmp.eq.s32.totalorder %s19, 1
      %p58 = por %p56, %p57
      %p59 = scmp.ne.s32.totalorder %s50, %s51
      %p60 = scmp.eq.s32.totalorder %s19, 0
      %p61 = por %p59, %p60
      %p62 = scmp.ne.s32.totalorder %s50, %s51
      %p63 = scmp.eq.s32.totalorder %s20, 1
      %p64 = por %p62, %p63
      %p66 = scmp.ne.s32.totalorder %s51, %s65
      %p67 = scmp.eq.s32.totalorder %s20, 0
      %p68 = por %p66, %p67
      %s70 = sadd.s32 %s69, 1
      %p73 = scmp.eq.s32.totalorder %s14, 1
      %p74 = scmp.ne.s32.totalorder %s69, %s71
      %p75 = scmp.eq.s32.totalorder %s14, 0
      %p76 = por %p74, %p75
      %p77 = scmp.ne.s32.totalorder %s69, %s71
      %p78 = scmp.eq.s32.totalorder %s19, 1
      %p79 = por %p77, %p78
      %p80 = scmp.ne.s32.totalorder %s71, %s72
      %p81 = scmp.eq.s32.totalorder %s19, 0
      %p82 = por %p80, %p81
      %p83 = scmp.ne.s32.totalorder %s71, %s72
      %p84 = scmp.eq.s32.totalorder %s20, 1
      %p85 = por %p83, %p84
      %p87 = scmp.ne.s32.totalorder %s72, %s86
      %p88 = scmp.eq.s32.totalorder %s20, 0
      %p89 = por %p87, %p88
      %s91 = sadd.s32 %s90, 1
      %p94 = scmp.eq.s32.totalorder %s14, 1
      %p95 = scmp.ne.s32.totalorder %s90, %s92
      %p96 = scmp.eq.s32.totalorder %s14, 0
      %p97 = por %p95, %p96
      %p98 = scmp.ne.s32.totalorder %s90, %s92
      %p99 = scmp.eq.s32.totalorder %s19, 1
      %p100 = por %p98, %p99
      %p101 = scmp.ne.s32.totalorder %s92, %s93
      %p102 = scmp.eq.s32.totalorder %s19, 0
      %p103 = por %p101, %p102
      %p104 = scmp.ne.s32.totalorder %s92, %s93
      %p105 = scmp.eq.s32.totalorder %s20, 1
      %p106 = por %p104, %p105
      %p108 = scmp.ne.s32.totalorder %s93, %s107
      %p109 = scmp.eq.s32.totalorder %s20, 0
      %p110 = por %p108, %p109
      %s112 = sadd.s32 %s111, 1
      %p115 = scmp.eq.s32.totalorder %s14, 1
      %p116 = scmp.ne.s32.totalorder %s111, %s113
      %p117 = scmp.eq.s32.totalorder %s14, 0
      %p118 = por %p116, %p117
      %p119 = scmp.ne.s32.totalorder %s111, %s113
      %p120 = scmp.eq.s32.totalorder %s19, 1
      %p121 = por %p119, %p120
      %p122 = scmp.ne.s32.totalorder %s113, %s114
      %p123 = scmp.eq.s32.totalorder %s19, 0
      %p124 = por %p122, %p123
      %p125 = scmp.ne.s32.totalorder %s113, %s114
      %p126 = scmp.eq.s32.totalorder %s20, 1
      %p127 = por %p125, %p126
      %p129 = scmp.ne.s32.totalorder %s114, %s128
      %p130 = scmp.eq.s32.totalorder %s20, 0
      %p131 = por %p129, %p130
      %s132 = ssub.s32 %s14, %s21
      %p133 = scmp.eq.s32.totalorder %s132, 0
      %s135 = sadd.s32 %s134, 1
      %s136 = scalar_select %p133, %s134, %s135
      %p139 = pneg %p133
      %p140 = scmp.eq.s32.totalorder %s14, 1
      %p141 = por %p139, %p140
      %p142 = scmp.ne.s32.totalorder %s134, %s137
      %p143 = scmp.eq.s32.totalorder %s14, 0
      %p144 = por %p142, %p143
      %p145 = scmp.ne.s32.totalorder %s134, %s137
      %p146 = scmp.eq.s32.totalorder %s19, 1
      %p147 = por %p145, %p146
      %p148 = scmp.ne.s32.totalorder %s137, %s138
      %p149 = scmp.eq.s32.totalorder %s19, 0
      %p150 = por %p148, %p149
      %p151 = scmp.ne.s32.totalorder %s137, %s138
      %p152 = scmp.eq.s32.totalorder %s20, 1
      %p153 = por %p151, %p152
      %p155 = scmp.ne.s32.totalorder %s138, %s154
      %p156 = scmp.eq.s32.totalorder %s20, 0
      %p157 = por %p155, %p156
      %p158 = scmp.le.s32.totalorder 1, %s14
      %p159 = scmp.lt.s32.totalorder %s14, 3
      %p160 = pnand %p158, %p159
      %p161 = pneg %p160
      // Predicated region
      $region9: #{tpu_custom_call.1} parent=5 // pred_check
        _
      $region10: #{tpu_custom_call.1} parent=5 // pred_check_branch
        %163 = sbr.rel (%p160) target = $region12
      $region11: #{tpu_custom_call.1} parent=5 // pred_region
        %s164 = ssub.s32 %s14, 1
        // Predicated region
        $region13: #{tpu_custom_call.1} parent=11 // pred_check
          %p165 = pneg %p61
        $region14: #{tpu_custom_call.1} parent=11 // pred_check_branch
          %167 = sbr.rel (%p165) target = $region16
        $region15: #{tpu_custom_call.1} parent=11 // pred_region
          _
        $region16: #{tpu_custom_call.1} parent=11 // pred_fallthru
          _
        // Predicated region
        $region17: #{tpu_custom_call.1} parent=11 // pred_check
          %p168 = pneg %p82
        $region18: #{tpu_custom_call.1} parent=11 // pred_check_branch
          %170 = sbr.rel (%p168) target = $region20
        $region19: #{tpu_custom_call.1} parent=11 // pred_region
          _
        $region20: #{tpu_custom_call.1} parent=11 // pred_fallthru
          _
        // Predicated region
        $region21: #{tpu_custom_call.1} parent=11 // pred_check
          %p171 = pneg %p103
        $region22: #{tpu_custom_call.1} parent=11 // pred_check_branch
          %173 = sbr.rel (%p171) target = $region24
        $region23: #{tpu_custom_call.1} parent=11 // pred_region
          _
        $region24: #{tpu_custom_call.1} parent=11 // pred_fallthru
          _
        // Predicated region
        $region25: #{tpu_custom_call.1} parent=11 // pred_check
          %p174 = pneg %p124
        $region26: #{tpu_custom_call.1} parent=11 // pred_check_branch
          %176 = sbr.rel (%p174) target = $region28
        $region27: #{tpu_custom_call.1} parent=11 // pred_region
          _
        $region28: #{tpu_custom_call.1} parent=11 // pred_fallthru
          _
      $region12: #{tpu_custom_call.1} parent=5 // pred_fallthru
        _
      %p177 = scmp.lt.s32.totalorder %s14, 2
      // Predicated region
      $region29: #{tpu_custom_call.1} parent=5 // pred_check
        %p178 = pneg %p177
      $region30: #{tpu_custom_call.1} parent=5 // pred_check_branch
        %180 = sbr.rel (%p178) target = $region32
      $region31: #{tpu_custom_call.1} parent=5 // pred_region
        // Predicated region
        $region33: #{tpu_custom_call.1} parent=31 // pred_check
          %p181 = pneg %p34
        $region34: #{tpu_custom_call.1} parent=31 // pred_check_branch
          %183 = sbr.rel (%p181) target = $region36
        $region35: #{tpu_custom_call.1} parent=31 // pred_region
          %s184 = smul.u32 4, %s14
          %p185 = scmp.lt.s32.totalorder %s184, 7
          %s186 = scalar_select %p185, %s184, 7
          %s187 = smul.addr %s186, 4
          %s188 = scalar_lea.vmem %s0, %s187
          %s189 = smul.u32 4, %s14
        $region36: #{tpu_custom_call.1} parent=31 // pred_fallthru
          _
      $region32: #{tpu_custom_call.1} parent=5 // pred_fallthru
        _
      %p190 = scmp.le.s32.totalorder 1, %s14
      %p191 = scmp.lt.s32.totalorder %s14, 3
      %p192 = pnand %p190, %p191
      %p193 = pneg %p192
      // Predicated region
      $region37: #{tpu_custom_call.1} parent=5 // pred_check
        _
      $region38: #{tpu_custom_call.1} parent=5 // pred_check_branch
        %195 = sbr.rel (%p192) target = $region40
      $region39: #{tpu_custom_call.1} parent=5 // pred_region
        %s196 = ssub.s32 %s14, 1
        %s197 = smul.u32 4, %s19
        %p198 = scmp.lt.s32.totalorder %s197, 7
        %s199 = scalar_select %p198, %s197, 7
        %s200 = smul.addr %s199, 4
        %s201 = scalar_lea.vmem %s0, %s200
        %p202 = pneg %p40
        %p203 = pneg %p37
        %p204 = pneg %p61
        %p205 = pneg %p58
        %p206 = pneg %p82
        %p207 = pneg %p79
        %p208 = pneg %p103
        %p209 = pneg %p100
        %p210 = pneg %p124
        %p211 = pneg %p121
        %p212 = pneg %p150
        %p213 = pneg %p147
        %s214 = sand.u32 %s137, 1
        %s215 = scalar_lea.sflag [#allocation6], %s214
        %s216 = sand.u32 %s137, 1
        %s217 = smul.addr %s216, 16
        %s218 = scalar_lea.vmem [#allocation5], %s217
        %s219 = smul.u32 4, %s19
        %p220 = scmp.lt.s32.totalorder %s219, 7
        %s221 = scalar_select %p220, %s219, 7
        %s222 = smul.addr %s221, 4
        %s223 = scalar_lea.vmem %s0, %s222
        %s224 = smul.u32 4, %s19
        %s225 = smul.u32 4, %s19
        %v227 = vld [vmem:[%s223] sm:$0xff]
        %v228 = vld [vmem:[%s223 + $0x8] sm:$0xff]
        %v229 = vld [vmem:[%s1] sm:$0xf]
        %v230 = vld [vmem:[%s1 + $0x4] sm:$0xf]
        %v231 = vld [vmem:[%s1 + $0x8] sm:$0xf]
        %v232 = vld [vmem:[%s1 + $0xc] sm:$0xf]
        %v233 = vld [vmem:[%s1 + $0x10] sm:$0xf]
        %v234 = vld [vmem:[%s1 + $0x14] sm:$0xf]
        %v235 = vld [vmem:[%s1 + $0x18] sm:$0xf]
        %v236 = vld [vmem:[%s1 + $0x1c] sm:$0xf]
        %v237 = vld [vmem:[%s1 + $0x20] sm:$0xf]
        %v238 = vld [vmem:[%s1 + $0x24] sm:$0xf]
        %v239 = vld [vmem:[%s1 + $0x28] sm:$0xf]
        %v240 = vld [vmem:[%s1 + $0x2c] sm:$0xf]
        %v241 = vld [vmem:[%s1 + $0x30] sm:$0xf]
        %v242 = vld [vmem:[%s1 + $0x34] sm:$0xf]
        %v243 = vld [vmem:[%s1 + $0x38] sm:$0xf]
        %v244 = vld [vmem:[%s1 + $0x3c] sm:$0xf]
        %v245 = vld [vmem:[%s1 + $0x40] sm:$0xf]
        %v246 = vld [vmem:[%s1 + $0x44] sm:$0xf]
        %v247 = vld [vmem:[%s1 + $0x48] sm:$0xf]
        %v248 = vld [vmem:[%s1 + $0x4c] sm:$0xf]
        %v249 = vld [vmem:[%s1 + $0x50] sm:$0xf]
        %v250 = vld [vmem:[%s1 + $0x54] sm:$0xf]
        %v251 = vld [vmem:[%s1 + $0x58] sm:$0xf]
        %v252 = vld [vmem:[%s1 + $0x5c] sm:$0xf]
        %v253 = vld [vmem:[%s1 + $0x60] sm:$0xf]
        %v254 = vld [vmem:[%s1 + $0x64] sm:$0xf]
        %v255 = vld [vmem:[%s1 + $0x68] sm:$0xf]
        %v256 = vld [vmem:[%s1 + $0x6c] sm:$0xf]
        %v257 = vld [vmem:[%s1 + $0x70] sm:$0xf]
        %v258 = vld [vmem:[%s1 + $0x74] sm:$0xf]
        %v259 = vld [vmem:[%s1 + $0x78] sm:$0xf]
        %v260 = vld [vmem:[%s1 + $0x7c] sm:$0xf]
        %v261 = vld [vmem:[%s1 + $0x80] sm:$0xf]
        %v262 = vld [vmem:[%s1 + $0x84] sm:$0xf]
        %v263 = vld [vmem:[%s1 + $0x88] sm:$0xf]
        %v264 = vld [vmem:[%s1 + $0x8c] sm:$0xf]
        %v265 = vld [vmem:[%s1 + $0x90] sm:$0xf]
        %v266 = vld [vmem:[%s1 + $0x94] sm:$0xf]
        %v267 = vld [vmem:[%s1 + $0x98] sm:$0xf]
        %v268 = vld [vmem:[%s1 + $0x9c] sm:$0xf]
        %v269 = vld [vmem:[%s1 + $0xa0] sm:$0xf]
        %v270 = vld [vmem:[%s1 + $0xa4] sm:$0xf]
        %v271 = vld [vmem:[%s1 + $0xa8] sm:$0xf]
        %v272 = vld [vmem:[%s1 + $0xac] sm:$0xf]
        %v273 = vld [vmem:[%s1 + $0xb0] sm:$0xf]
        %v274 = vld [vmem:[%s1 + $0xb4] sm:$0xf]
        %v275 = vld [vmem:[%s1 + $0xb8] sm:$0xf]
        %v276 = vld [vmem:[%s1 + $0xbc] sm:$0xf]
        %v279 = vcombine.high %v227, %v227
        %v280 = vcombine.high %v228, %v228
        %v283 = vpack.c.bf16 %v227, %v227
        %v284 = vpack.c.bf16 %v279, %v279
        %v285 = vpack.c.bf16 %v228, %v228
        %v286 = vpack.c.bf16 %v280, %v280
        %v335 = vunpack.c.l.b16 %v229
        %v336 = vunpack.c.l.b16 %v230
        %v337 = vunpack.c.l.b16 %v231
        %v338 = vunpack.c.l.b16 %v232
        %v339 = vunpack.c.l.b16 %v233
        %v340 = vunpack.c.l.b16 %v234
        %v341 = vunpack.c.l.b16 %v235
        %v342 = vunpack.c.l.b16 %v236
        %v343 = vunpack.c.l.b16 %v237
        %v344 = vunpack.c.l.b16 %v238
        %v345 = vunpack.c.l.b16 %v239
        %v346 = vunpack.c.l.b16 %v240
        %v347 = vunpack.c.l.b16 %v241
        %v348 = vunpack.c.l.b16 %v242
        %v349 = vunpack.c.l.b16 %v243
        %v350 = vunpack.c.l.b16 %v244
        %v351 = vunpack.c.l.b16 %v245
        %v352 = vunpack.c.l.b16 %v246
        %v353 = vunpack.c.l.b16 %v247
        %v354 = vunpack.c.l.b16 %v248
        %v355 = vunpack.c.l.b16 %v249
        %v356 = vunpack.c.l.b16 %v250
        %v357 = vunpack.c.l.b16 %v251
        %v358 = vunpack.c.l.b16 %v252
        %v359 = vunpack.c.l.b16 %v253
        %v360 = vunpack.c.l.b16 %v254
        %v361 = vunpack.c.l.b16 %v255
        %v362 = vunpack.c.l.b16 %v256
        %v363 = vunpack.c.l.b16 %v257
        %v364 = vunpack.c.l.b16 %v258
        %v365 = vunpack.c.l.b16 %v259
        %v366 = vunpack.c.l.b16 %v260
        %v367 = vunpack.c.l.b16 %v261
        %v368 = vunpack.c.l.b16 %v262
        %v369 = vunpack.c.l.b16 %v263
        %v370 = vunpack.c.l.b16 %v264
        %v371 = vunpack.c.l.b16 %v265
        %v372 = vunpack.c.l.b16 %v266
        %v373 = vunpack.c.l.b16 %v267
        %v374 = vunpack.c.l.b16 %v268
        %v375 = vunpack.c.l.b16 %v269
        %v376 = vunpack.c.l.b16 %v270
        %v377 = vunpack.c.l.b16 %v271
        %v378 = vunpack.c.l.b16 %v272
        %v379 = vunpack.c.l.b16 %v273
        %v380 = vunpack.c.l.b16 %v274
        %v381 = vunpack.c.l.b16 %v275
        %v382 = vunpack.c.l.b16 %v276
        %v383 = vpack.c.b16 %v336, %v335
        %v384 = vpack.c.b16 %v338, %v337
        %v385 = vpack.c.b16 %v340, %v339
        %v386 = vpack.c.b16 %v342, %v341
        %v387 = vpack.c.b16 %v344, %v343
        %v388 = vpack.c.b16 %v346, %v345
        %v389 = vpack.c.b16 %v348, %v347
        %v390 = vpack.c.b16 %v350, %v349
        %v391 = vpack.c.b16 %v352, %v351
        %v392 = vpack.c.b16 %v354, %v353
        %v393 = vpack.c.b16 %v356, %v355
        %v394 = vpack.c.b16 %v358, %v357
        %v395 = vpack.c.b16 %v360, %v359
        %v396 = vpack.c.b16 %v362, %v361
        %v397 = vpack.c.b16 %v364, %v363
        %v398 = vpack.c.b16 %v366, %v365
        %v399 = vpack.c.b16 %v368, %v367
        %v400 = vpack.c.b16 %v370, %v369
        %v401 = vpack.c.b16 %v372, %v371
        %v402 = vpack.c.b16 %v374, %v373
        %v403 = vpack.c.b16 %v376, %v375
        %v404 = vpack.c.b16 %v378, %v377
        %v405 = vpack.c.b16 %v380, %v379
        %v406 = vpack.c.b16 %v382, %v381
        %vm407 = vcmask 31744
        %v409 = vsel %vm407, %v383, 0
        %v412 = vsel %vm407, %v384, 0
        %v415 = vsel %vm407, %v385, 0
        %v418 = vsel %vm407, %v386, 0
        %v421 = vsel %vm407, %v387, 0
        %v424 = vsel %vm407, %v388, 0
        %v427 = vsel %vm407, %v389, 0
        %v430 = vsel %vm407, %v390, 0
        %v433 = vsel %vm407, %v391, 0
        %v436 = vsel %vm407, %v392, 0
        %v439 = vsel %vm407, %v393, 0
        %v442 = vsel %vm407, %v394, 0
        %v445 = vsel %vm407, %v395, 0
        %v448 = vsel %vm407, %v396, 0
        %v451 = vsel %vm407, %v397, 0
        %v454 = vsel %vm407, %v398, 0
        %v457 = vsel %vm407, %v399, 0
        %v460 = vsel %vm407, %v400, 0
        %v463 = vsel %vm407, %v401, 0
        %v466 = vsel %vm407, %v402, 0
        %v469 = vsel %vm407, %v403, 0
        %v472 = vsel %vm407, %v404, 0
        %v475 = vsel %vm407, %v405, 0
        %v478 = vsel %vm407, %v406, 0
        %vm480 = vcmask 1041408
        %v482 = vsel %vm480, %v283, 0
        %v485 = vsel %vm480, %v284, 0
        %v488 = vsel %vm480, %v285, 0
        %v491 = vsel %vm480, %v286, 0
        %493 = vmatprep.subr.bf16.mxu0 0
        %494 = vmatpush1.bf16.msra.mxu0 0
        %495 = vmatprep.subr.bf16.mxu0 0
        %496 = vmatpush1.bf16.msra.mxu0 0
        %497 = vmatprep.subr.bf16.mxu0 0
        %498 = vmatpush1.bf16.msra.mxu0 0
        %499 = vmatprep.subr.bf16.mxu0 0
        %500 = vmatpush1.bf16.msra.mxu0 0
        %501 = vmatprep.subr.bf16.mxu0 0
        %502 = vmatpush1.bf16.msra.mxu0 0
        %503 = vmatprep.subr.bf16.mxu0 0
        %504 = vmatpush1.bf16.msra.mxu0 0
        %505 = vmatprep.subr.bf16.mxu0 0
        %506 = vmatpush1.bf16.msra.mxu0 0
        %507 = vmatprep.subr.bf16.mxu0 %v485
        %508 = vmatpush1.bf16.msra.mxu0 %v482
        %509 = vmatprep.subr.bf16.mxu0 0
        %510 = vmatpush2.bf16.msra.mxu0 0
        %511 = vmatprep.subr.bf16.mxu0 0
        %512 = vmatpush2.bf16.msra.mxu0 0
        %513 = vmatprep.subr.bf16.mxu0 0
        %514 = vmatpush2.bf16.msra.mxu0 0
        %515 = vmatprep.subr.bf16.mxu0 0
        %516 = vmatpush2.bf16.msra.mxu0 0
        %517 = vmatprep.subr.bf16.mxu0 0
        %518 = vmatpush2.bf16.msra.mxu0 0
        %519 = vmatprep.subr.bf16.mxu0 0
        %520 = vmatpush2.bf16.msra.mxu0 0
        %521 = vmatprep.subr.bf16.mxu0 0
        %522 = vmatpush2.bf16.msra.mxu0 0
        %523 = vmatprep.subr.bf16.mxu0 0
        %524 = vmatpush2.bf16.msra.mxu0 0
        %525 = vmatprep.mubr.bf16.mxu0 0
        %526 = vmatmul.mubr.bf16.gmra.mxu0 %v409
        %v527 = vpop.f32.mrf.mxu0
        %v528 = vadd.f32 0.0, %v527
        %v529 = vpop.f32.mrf.mxu0
        %v530 = vadd.f32 0.0, %v529
        %v531 = vpop.f32.mrf.mxu0
        %v532 = vadd.f32 0.0, %v531
        %v533 = vpop.f32.mrf.mxu0
        %v534 = vadd.f32 0.0, %v533
        %535 = vmatprep.mubr.bf16.mxu0 0
        %536 = vmatmul.mubr.bf16.gmra.mxu0 %v412
        %v537 = vpop.f32.mrf.mxu0
        %v538 = vadd.f32 0.0, %v537
        %v539 = vpop.f32.mrf.mxu0
        %v540 = vadd.f32 0.0, %v539
        %v541 = vpop.f32.mrf.mxu0
        %v542 = vadd.f32 0.0, %v541
        %v543 = vpop.f32.mrf.mxu0
        %v544 = vadd.f32 0.0, %v543
        %545 = vmatprep.mubr.bf16.mxu0 0
        %546 = vmatmul.mubr.bf16.gmra.mxu0 %v415
        %v547 = vpop.f32.mrf.mxu0
        %v548 = vadd.f32 0.0, %v547
        %v549 = vpop.f32.mrf.mxu0
        %v550 = vadd.f32 0.0, %v549
        %v551 = vpop.f32.mrf.mxu0
        %v552 = vadd.f32 0.0, %v551
        %v553 = vpop.f32.mrf.mxu0
        %v554 = vadd.f32 0.0, %v553
        %555 = vmatprep.mubr.bf16.mxu0 0
        %556 = vmatmul.mubr.bf16.gmra.mxu0 %v418
        %v557 = vpop.f32.mrf.mxu0
        %v558 = vadd.f32 0.0, %v557
        %v559 = vpop.f32.mrf.mxu0
        %v560 = vadd.f32 0.0, %v559
        %v561 = vpop.f32.mrf.mxu0
        %v562 = vadd.f32 0.0, %v561
        %v563 = vpop.f32.mrf.mxu0
        %v564 = vadd.f32 0.0, %v563
        %565 = vmatprep.mubr.bf16.mxu0 0
        %566 = vmatmul.mubr.bf16.gmra.mxu0 %v421
        %v567 = vpop.f32.mrf.mxu0
        %v568 = vadd.f32 0.0, %v567
        %v569 = vpop.f32.mrf.mxu0
        %v570 = vadd.f32 0.0, %v569
        %v571 = vpop.f32.mrf.mxu0
        %v572 = vadd.f32 0.0, %v571
        %v573 = vpop.f32.mrf.mxu0
        %v574 = vadd.f32 0.0, %v573
        %575 = vmatprep.mubr.bf16.mxu0 0
        %576 = vmatmul.mubr.bf16.gmra.mxu0 %v424
        %v577 = vpop.f32.mrf.mxu0
        %v578 = vadd.f32 0.0, %v577
        %v579 = vpop.f32.mrf.mxu0
        %v580 = vadd.f32 0.0, %v579
        %v581 = vpop.f32.mrf.mxu0
        %v582 = vadd.f32 0.0, %v581
        %v583 = vpop.f32.mrf.mxu0
        %v584 = vadd.f32 0.0, %v583
        %585 = vmatprep.mubr.bf16.mxu0 0
        %586 = vmatmul.mubr.bf16.gmra.mxu0 %v427
        %v587 = vpop.f32.mrf.mxu0
        %v588 = vadd.f32 0.0, %v587
        %v589 = vpop.f32.mrf.mxu0
        %v590 = vadd.f32 0.0, %v589
        %v591 = vpop.f32.mrf.mxu0
        %v592 = vadd.f32 0.0, %v591
        %v593 = vpop.f32.mrf.mxu0
        %v594 = vadd.f32 0.0, %v593
        %595 = vmatprep.mubr.bf16.mxu0 0
        %596 = vmatmul.mubr.bf16.gmra.mxu0 %v430
        %v597 = vpop.f32.mrf.mxu0
        %v598 = vadd.f32 0.0, %v597
        %v599 = vpop.f32.mrf.mxu0
        %v600 = vadd.f32 0.0, %v599
        %v601 = vpop.f32.mrf.mxu0
        %v602 = vadd.f32 0.0, %v601
        %v603 = vpop.f32.mrf.mxu0
        %v604 = vadd.f32 0.0, %v603
        %605 = vmatprep.mubr.bf16.mxu0 0
        %606 = vmatmul.mubr.bf16.gmra.mxu0 %v433
        %v607 = vpop.f32.mrf.mxu0
        %v608 = vadd.f32 0.0, %v607
        %v609 = vpop.f32.mrf.mxu0
        %v610 = vadd.f32 0.0, %v609
        %v611 = vpop.f32.mrf.mxu0
        %v612 = vadd.f32 0.0, %v611
        %v613 = vpop.f32.mrf.mxu0
        %v614 = vadd.f32 0.0, %v613
        %615 = vmatprep.mubr.bf16.mxu0 0
        %616 = vmatmul.mubr.bf16.gmra.mxu0 %v436
        %v617 = vpop.f32.mrf.mxu0
        %v618 = vadd.f32 0.0, %v617
        %v619 = vpop.f32.mrf.mxu0
        %v620 = vadd.f32 0.0, %v619
        %v621 = vpop.f32.mrf.mxu0
        %v622 = vadd.f32 0.0, %v621
        %v623 = vpop.f32.mrf.mxu0
        %v624 = vadd.f32 0.0, %v623
        %625 = vmatprep.mubr.bf16.mxu0 0
        %626 = vmatmul.mubr.bf16.gmra.mxu0 %v439
        %v627 = vpop.f32.mrf.mxu0
        %v628 = vadd.f32 0.0, %v627
        %v629 = vpop.f32.mrf.mxu0
        %v630 = vadd.f32 0.0, %v629
        %v631 = vpop.f32.mrf.mxu0
        %v632 = vadd.f32 0.0, %v631
        %v633 = vpop.f32.mrf.mxu0
        %v634 = vadd.f32 0.0, %v633
        %635 = vmatprep.mubr.bf16.mxu0 0
        %636 = vmatmul.mubr.bf16.gmra.mxu0 %v442
        %v637 = vpop.f32.mrf.mxu0
        %v638 = vadd.f32 0.0, %v637
        %v639 = vpop.f32.mrf.mxu0
        %v640 = vadd.f32 0.0, %v639
        %v641 = vpop.f32.mrf.mxu0
        %v642 = vadd.f32 0.0, %v641
        %v643 = vpop.f32.mrf.mxu0
        %v644 = vadd.f32 0.0, %v643
        %645 = vmatprep.mubr.bf16.mxu0 0
        %646 = vmatmul.mubr.bf16.gmra.mxu0 %v445
        %v647 = vpop.f32.mrf.mxu0
        %v648 = vadd.f32 0.0, %v647
        %v649 = vpop.f32.mrf.mxu0
        %v650 = vadd.f32 0.0, %v649
        %v651 = vpop.f32.mrf.mxu0
        %v652 = vadd.f32 0.0, %v651
        %v653 = vpop.f32.mrf.mxu0
        %v654 = vadd.f32 0.0, %v653
        %655 = vmatprep.mubr.bf16.mxu0 0
        %656 = vmatmul.mubr.bf16.gmra.mxu0 %v448
        %v657 = vpop.f32.mrf.mxu0
        %v658 = vadd.f32 0.0, %v657
        %v659 = vpop.f32.mrf.mxu0
        %v660 = vadd.f32 0.0, %v659
        %v661 = vpop.f32.mrf.mxu0
        %v662 = vadd.f32 0.0, %v661
        %v663 = vpop.f32.mrf.mxu0
        %v664 = vadd.f32 0.0, %v663
        %665 = vmatprep.mubr.bf16.mxu0 0
        %666 = vmatmul.mubr.bf16.gmra.mxu0 %v451
        %v667 = vpop.f32.mrf.mxu0
        %v668 = vadd.f32 0.0, %v667
        %v669 = vpop.f32.mrf.mxu0
        %v670 = vadd.f32 0.0, %v669
        %v671 = vpop.f32.mrf.mxu0
        %v672 = vadd.f32 0.0, %v671
        %v673 = vpop.f32.mrf.mxu0
        %v674 = vadd.f32 0.0, %v673
        %675 = vmatprep.mubr.bf16.mxu0 0
        %676 = vmatmul.mubr.bf16.gmra.mxu0 %v454
        %v677 = vpop.f32.mrf.mxu0
        %v678 = vadd.f32 0.0, %v677
        %v679 = vpop.f32.mrf.mxu0
        %v680 = vadd.f32 0.0, %v679
        %v681 = vpop.f32.mrf.mxu0
        %v682 = vadd.f32 0.0, %v681
        %v683 = vpop.f32.mrf.mxu0
        %v684 = vadd.f32 0.0, %v683
        %685 = vmatprep.mubr.bf16.mxu0 0
        %686 = vmatmul.mubr.bf16.gmra.mxu0 %v457
        %v687 = vpop.f32.mrf.mxu0
        %v688 = vadd.f32 0.0, %v687
        %v689 = vpop.f32.mrf.mxu0
        %v690 = vadd.f32 0.0, %v689
        %v691 = vpop.f32.mrf.mxu0
        %v692 = vadd.f32 0.0, %v691
        %v693 = vpop.f32.mrf.mxu0
        %v694 = vadd.f32 0.0, %v693
        %695 = vmatprep.mubr.bf16.mxu0 0
        %696 = vmatmul.mubr.bf16.gmra.mxu0 %v460
        %v697 = vpop.f32.mrf.mxu0
        %v698 = vadd.f32 0.0, %v697
        %v699 = vpop.f32.mrf.mxu0
        %v700 = vadd.f32 0.0, %v699
        %v701 = vpop.f32.mrf.mxu0
        %v702 = vadd.f32 0.0, %v701
        %v703 = vpop.f32.mrf.mxu0
        %v704 = vadd.f32 0.0, %v703
        %705 = vmatprep.mubr.bf16.mxu0 0
        %706 = vmatmul.mubr.bf16.gmra.mxu0 %v463
        %v707 = vpop.f32.mrf.mxu0
        %v708 = vadd.f32 0.0, %v707
        %v709 = vpop.f32.mrf.mxu0
        %v710 = vadd.f32 0.0, %v709
        %v711 = vpop.f32.mrf.mxu0
        %v712 = vadd.f32 0.0, %v711
        %v713 = vpop.f32.mrf.mxu0
        %v714 = vadd.f32 0.0, %v713
        %715 = vmatprep.mubr.bf16.mxu0 0
        %716 = vmatmul.mubr.bf16.gmra.mxu0 %v466
        %v717 = vpop.f32.mrf.mxu0
        %v718 = vadd.f32 0.0, %v717
        %v719 = vpop.f32.mrf.mxu0
        %v720 = vadd.f32 0.0, %v719
        %v721 = vpop.f32.mrf.mxu0
        %v722 = vadd.f32 0.0, %v721
        %v723 = vpop.f32.mrf.mxu0
        %v724 = vadd.f32 0.0, %v723
        %725 = vmatprep.mubr.bf16.mxu0 0
        %726 = vmatmul.mubr.bf16.gmra.mxu0 %v469
        %v727 = vpop.f32.mrf.mxu0
        %v728 = vadd.f32 0.0, %v727
        %v729 = vpop.f32.mrf.mxu0
        %v730 = vadd.f32 0.0, %v729
        %v731 = vpop.f32.mrf.mxu0
        %v732 = vadd.f32 0.0, %v731
        %v733 = vpop.f32.mrf.mxu0
        %v734 = vadd.f32 0.0, %v733
        %735 = vmatprep.mubr.bf16.mxu0 0
        %736 = vmatmul.mubr.bf16.gmra.mxu0 %v472
        %v737 = vpop.f32.mrf.mxu0
        %v738 = vadd.f32 0.0, %v737
        %v739 = vpop.f32.mrf.mxu0
        %v740 = vadd.f32 0.0, %v739
        %v741 = vpop.f32.mrf.mxu0
        %v742 = vadd.f32 0.0, %v741
        %v743 = vpop.f32.mrf.mxu0
        %v744 = vadd.f32 0.0, %v743
        %745 = vmatprep.mubr.bf16.mxu0 0
        %746 = vmatmul.mubr.bf16.gmra.mxu0 %v475
        %v747 = vpop.f32.mrf.mxu0
        %v748 = vadd.f32 0.0, %v747
        %v749 = vpop.f32.mrf.mxu0
        %v750 = vadd.f32 0.0, %v749
        %v751 = vpop.f32.mrf.mxu0
        %v752 = vadd.f32 0.0, %v751
        %v753 = vpop.f32.mrf.mxu0
        %v754 = vadd.f32 0.0, %v753
        %755 = vmatprep.mubr.bf16.mxu0 0
        %756 = vmatmul.mubr.bf16.gmra.mxu0 %v478
        %v757 = vpop.f32.mrf.mxu0
        %v758 = vadd.f32 0.0, %v757
        %v759 = vpop.f32.mrf.mxu0
        %v760 = vadd.f32 0.0, %v759
        %v761 = vpop.f32.mrf.mxu0
        %v762 = vadd.f32 0.0, %v761
        %v763 = vpop.f32.mrf.mxu0
        %v764 = vadd.f32 0.0, %v763
        %765 = vdwg.mxu0
        %766 = vmatprep.subr.bf16.mxu0 0
        %767 = vmatpush1.bf16.msra.mxu0 0
        %768 = vmatprep.subr.bf16.mxu0 0
        %769 = vmatpush1.bf16.msra.mxu0 0
        %770 = vmatprep.subr.bf16.mxu0 0
        %771 = vmatpush1.bf16.msra.mxu0 0
        %772 = vmatprep.subr.bf16.mxu0 0
        %773 = vmatpush1.bf16.msra.mxu0 0
        %774 = vmatprep.subr.bf16.mxu0 0
        %775 = vmatpush1.bf16.msra.mxu0 0
        %776 = vmatprep.subr.bf16.mxu0 0
        %777 = vmatpush1.bf16.msra.mxu0 0
        %778 = vmatprep.subr.bf16.mxu0 0
        %779 = vmatpush1.bf16.msra.mxu0 0
        %780 = vmatprep.subr.bf16.mxu0 %v491
        %781 = vmatpush1.bf16.msra.mxu0 %v488
        %782 = vmatprep.subr.bf16.mxu0 0
        %783 = vmatpush2.bf16.msra.mxu0 0
        %784 = vmatprep.subr.bf16.mxu0 0
        %785 = vmatpush2.bf16.msra.mxu0 0
        %786 = vmatprep.subr.bf16.mxu0 0
        %787 = vmatpush2.bf16.msra.mxu0 0
        %788 = vmatprep.subr.bf16.mxu0 0
        %789 = vmatpush2.bf16.msra.mxu0 0
        %790 = vmatprep.subr.bf16.mxu0 0
        %791 = vmatpush2.bf16.msra.mxu0 0
        %792 = vmatprep.subr.bf16.mxu0 0
        %793 = vmatpush2.bf16.msra.mxu0 0
        %794 = vmatprep.subr.bf16.mxu0 0
        %795 = vmatpush2.bf16.msra.mxu0 0
        %796 = vmatprep.subr.bf16.mxu0 0
        %797 = vmatpush2.bf16.msra.mxu0 0
        %798 = vmatprep.mubr.bf16.mxu0 0
        %799 = vmatmul.mubr.bf16.gmra.mxu0 %v409
        %v800 = vpop.f32.mrf.mxu0
        %v801 = vadd.f32 0.0, %v800
        %v802 = vpop.f32.mrf.mxu0
        %v803 = vadd.f32 0.0, %v802
        %v804 = vpop.f32.mrf.mxu0
        %v805 = vadd.f32 0.0, %v804
        %v806 = vpop.f32.mrf.mxu0
        %v807 = vadd.f32 0.0, %v806
        %808 = vmatprep.mubr.bf16.mxu0 0
        %809 = vmatmul.mubr.bf16.gmra.mxu0 %v412
        %v810 = vpop.f32.mrf.mxu0
        %v811 = vadd.f32 0.0, %v810
        %v812 = vpop.f32.mrf.mxu0
        %v813 = vadd.f32 0.0, %v812
        %v814 = vpop.f32.mrf.mxu0
        %v815 = vadd.f32 0.0, %v814
        %v816 = vpop.f32.mrf.mxu0
        %v817 = vadd.f32 0.0, %v816
        %818 = vmatprep.mubr.bf16.mxu0 0
        %819 = vmatmul.mubr.bf16.gmra.mxu0 %v415
        %v820 = vpop.f32.mrf.mxu0
        %v821 = vadd.f32 0.0, %v820
        %v822 = vpop.f32.mrf.mxu0
        %v823 = vadd.f32 0.0, %v822
        %v824 = vpop.f32.mrf.mxu0
        %v825 = vadd.f32 0.0, %v824
        %v826 = vpop.f32.mrf.mxu0
        %v827 = vadd.f32 0.0, %v826
        %828 = vmatprep.mubr.bf16.mxu0 0
        %829 = vmatmul.mubr.bf16.gmra.mxu0 %v418
        %v830 = vpop.f32.mrf.mxu0
        %v831 = vadd.f32 0.0, %v830
        %v832 = vpop.f32.mrf.mxu0
        %v833 = vadd.f32 0.0, %v832
        %v834 = vpop.f32.mrf.mxu0
        %v835 = vadd.f32 0.0, %v834
        %v836 = vpop.f32.mrf.mxu0
        %v837 = vadd.f32 0.0, %v836
        %838 = vmatprep.mubr.bf16.mxu0 0
        %839 = vmatmul.mubr.bf16.gmra.mxu0 %v421
        %v840 = vpop.f32.mrf.mxu0
        %v841 = vadd.f32 0.0, %v840
        %v842 = vpop.f32.mrf.mxu0
        %v843 = vadd.f32 0.0, %v842
        %v844 = vpop.f32.mrf.mxu0
        %v845 = vadd.f32 0.0, %v844
        %v846 = vpop.f32.mrf.mxu0
        %v847 = vadd.f32 0.0, %v846
        %848 = vmatprep.mubr.bf16.mxu0 0
        %849 = vmatmul.mubr.bf16.gmra.mxu0 %v424
        %v850 = vpop.f32.mrf.mxu0
        %v851 = vadd.f32 0.0, %v850
        %v852 = vpop.f32.mrf.mxu0
        %v853 = vadd.f32 0.0, %v852
        %v854 = vpop.f32.mrf.mxu0
        %v855 = vadd.f32 0.0, %v854
        %v856 = vpop.f32.mrf.mxu0
        %v857 = vadd.f32 0.0, %v856
        %858 = vmatprep.mubr.bf16.mxu0 0
        %859 = vmatmul.mubr.bf16.gmra.mxu0 %v427
        %v860 = vpop.f32.mrf.mxu0
        %v861 = vadd.f32 0.0, %v860
        %v862 = vpop.f32.mrf.mxu0
        %v863 = vadd.f32 0.0, %v862
        %v864 = vpop.f32.mrf.mxu0
        %v865 = vadd.f32 0.0, %v864
        %v866 = vpop.f32.mrf.mxu0
        %v867 = vadd.f32 0.0, %v866
        %868 = vmatprep.mubr.bf16.mxu0 0
        %869 = vmatmul.mubr.bf16.gmra.mxu0 %v430
        %v870 = vpop.f32.mrf.mxu0
        %v871 = vadd.f32 0.0, %v870
        %v872 = vpop.f32.mrf.mxu0
        %v873 = vadd.f32 0.0, %v872
        %v874 = vpop.f32.mrf.mxu0
        %v875 = vadd.f32 0.0, %v874
        %v876 = vpop.f32.mrf.mxu0
        %v877 = vadd.f32 0.0, %v876
        %878 = vmatprep.mubr.bf16.mxu0 0
        %879 = vmatmul.mubr.bf16.gmra.mxu0 %v433
        %v880 = vpop.f32.mrf.mxu0
        %v881 = vadd.f32 0.0, %v880
        %v882 = vpop.f32.mrf.mxu0
        %v883 = vadd.f32 0.0, %v882
        %v884 = vpop.f32.mrf.mxu0
        %v885 = vadd.f32 0.0, %v884
        %v886 = vpop.f32.mrf.mxu0
        %v887 = vadd.f32 0.0, %v886
        %888 = vmatprep.mubr.bf16.mxu0 0
        %889 = vmatmul.mubr.bf16.gmra.mxu0 %v436
        %v890 = vpop.f32.mrf.mxu0
        %v891 = vadd.f32 0.0, %v890
        %v892 = vpop.f32.mrf.mxu0
        %v893 = vadd.f32 0.0, %v892
        %v894 = vpop.f32.mrf.mxu0
        %v895 = vadd.f32 0.0, %v894
        %v896 = vpop.f32.mrf.mxu0
        %v897 = vadd.f32 0.0, %v896
        %898 = vmatprep.mubr.bf16.mxu0 0
        %899 = vmatmul.mubr.bf16.gmra.mxu0 %v439
        %v900 = vpop.f32.mrf.mxu0
        %v901 = vadd.f32 0.0, %v900
        %v902 = vpop.f32.mrf.mxu0
        %v903 = vadd.f32 0.0, %v902
        %v904 = vpop.f32.mrf.mxu0
        %v905 = vadd.f32 0.0, %v904
        %v906 = vpop.f32.mrf.mxu0
        %v907 = vadd.f32 0.0, %v906
        %908 = vmatprep.mubr.bf16.mxu0 0
        %909 = vmatmul.mubr.bf16.gmra.mxu0 %v442
        %v910 = vpop.f32.mrf.mxu0
        %v911 = vadd.f32 0.0, %v910
        %v912 = vpop.f32.mrf.mxu0
        %v913 = vadd.f32 0.0, %v912
        %v914 = vpop.f32.mrf.mxu0
        %v915 = vadd.f32 0.0, %v914
        %v916 = vpop.f32.mrf.mxu0
        %v917 = vadd.f32 0.0, %v916
        %918 = vmatprep.mubr.bf16.mxu0 0
        %919 = vmatmul.mubr.bf16.gmra.mxu0 %v445
        %v920 = vpop.f32.mrf.mxu0
        %v921 = vadd.f32 0.0, %v920
        %v922 = vpop.f32.mrf.mxu0
        %v923 = vadd.f32 0.0, %v922
        %v924 = vpop.f32.mrf.mxu0
        %v925 = vadd.f32 0.0, %v924
        %v926 = vpop.f32.mrf.mxu0
        %v927 = vadd.f32 0.0, %v926
        %928 = vmatprep.mubr.bf16.mxu0 0
        %929 = vmatmul.mubr.bf16.gmra.mxu0 %v448
        %v930 = vpop.f32.mrf.mxu0
        %v931 = vadd.f32 0.0, %v930
        %v932 = vpop.f32.mrf.mxu0
        %v933 = vadd.f32 0.0, %v932
        %v934 = vpop.f32.mrf.mxu0
        %v935 = vadd.f32 0.0, %v934
        %v936 = vpop.f32.mrf.mxu0
        %v937 = vadd.f32 0.0, %v936
        %938 = vmatprep.mubr.bf16.mxu0 0
        %939 = vmatmul.mubr.bf16.gmra.mxu0 %v451
        %v940 = vpop.f32.mrf.mxu0
        %v941 = vadd.f32 0.0, %v940
        %v942 = vpop.f32.mrf.mxu0
        %v943 = vadd.f32 0.0, %v942
        %v944 = vpop.f32.mrf.mxu0
        %v945 = vadd.f32 0.0, %v944
        %v946 = vpop.f32.mrf.mxu0
        %v947 = vadd.f32 0.0, %v946
        %948 = vmatprep.mubr.bf16.mxu0 0
        %949 = vmatmul.mubr.bf16.gmra.mxu0 %v454
        %v950 = vpop.f32.mrf.mxu0
        %v951 = vadd.f32 0.0, %v950
        %v952 = vpop.f32.mrf.mxu0
        %v953 = vadd.f32 0.0, %v952
        %v954 = vpop.f32.mrf.mxu0
        %v955 = vadd.f32 0.0, %v954
        %v956 = vpop.f32.mrf.mxu0
        %v957 = vadd.f32 0.0, %v956
        %958 = vmatprep.mubr.bf16.mxu0 0
        %959 = vmatmul.mubr.bf16.gmra.mxu0 %v457
        %v960 = vpop.f32.mrf.mxu0
        %v961 = vadd.f32 0.0, %v960
        %v962 = vpop.f32.mrf.mxu0
        %v963 = vadd.f32 0.0, %v962
        %v964 = vpop.f32.mrf.mxu0
        %v965 = vadd.f32 0.0, %v964
        %v966 = vpop.f32.mrf.mxu0
        %v967 = vadd.f32 0.0, %v966
        %968 = vmatprep.mubr.bf16.mxu0 0
        %969 = vmatmul.mubr.bf16.gmra.mxu0 %v460
        %v970 = vpop.f32.mrf.mxu0
        %v971 = vadd.f32 0.0, %v970
        %v972 = vpop.f32.mrf.mxu0
        %v973 = vadd.f32 0.0, %v972
        %v974 = vpop.f32.mrf.mxu0
        %v975 = vadd.f32 0.0, %v974
        %v976 = vpop.f32.mrf.mxu0
        %v977 = vadd.f32 0.0, %v976
        %978 = vmatprep.mubr.bf16.mxu0 0
        %979 = vmatmul.mubr.bf16.gmra.mxu0 %v463
        %v980 = vpop.f32.mrf.mxu0
        %v981 = vadd.f32 0.0, %v980
        %v982 = vpop.f32.mrf.mxu0
        %v983 = vadd.f32 0.0, %v982
        %v984 = vpop.f32.mrf.mxu0
        %v985 = vadd.f32 0.0, %v984
        %v986 = vpop.f32.mrf.mxu0
        %v987 = vadd.f32 0.0, %v986
        %988 = vmatprep.mubr.bf16.mxu0 0
        %989 = vmatmul.mubr.bf16.gmra.mxu0 %v466
        %v990 = vpop.f32.mrf.mxu0
        %v991 = vadd.f32 0.0, %v990
        %v992 = vpop.f32.mrf.mxu0
        %v993 = vadd.f32 0.0, %v992
        %v994 = vpop.f32.mrf.mxu0
        %v995 = vadd.f32 0.0, %v994
        %v996 = vpop.f32.mrf.mxu0
        %v997 = vadd.f32 0.0, %v996
        %998 = vmatprep.mubr.bf16.mxu0 0
        %999 = vmatmul.mubr.bf16.gmra.mxu0 %v469
        %v1000 = vpop.f32.mrf.mxu0
        %v1001 = vadd.f32 0.0, %v1000
        %v1002 = vpop.f32.mrf.mxu0
        %v1003 = vadd.f32 0.0, %v1002
        %v1004 = vpop.f32.mrf.mxu0
        %v1005 = vadd.f32 0.0, %v1004
        %v1006 = vpop.f32.mrf.mxu0
        %v1007 = vadd.f32 0.0, %v1006
        %1008 = vmatprep.mubr.bf16.mxu0 0
        %1009 = vmatmul.mubr.bf16.gmra.mxu0 %v472
        %v1010 = vpop.f32.mrf.mxu0
        %v1011 = vadd.f32 0.0, %v1010
        %v1012 = vpop.f32.mrf.mxu0
        %v1013 = vadd.f32 0.0, %v1012
        %v1014 = vpop.f32.mrf.mxu0
        %v1015 = vadd.f32 0.0, %v1014
        %v1016 = vpop.f32.mrf.mxu0
        %v1017 = vadd.f32 0.0, %v1016
        %1018 = vmatprep.mubr.bf16.mxu0 0
        %1019 = vmatmul.mubr.bf16.gmra.mxu0 %v475
        %v1020 = vpop.f32.mrf.mxu0
        %v1021 = vadd.f32 0.0, %v1020
        %v1022 = vpop.f32.mrf.mxu0
        %v1023 = vadd.f32 0.0, %v1022
        %v1024 = vpop.f32.mrf.mxu0
        %v1025 = vadd.f32 0.0, %v1024
        %v1026 = vpop.f32.mrf.mxu0
        %v1027 = vadd.f32 0.0, %v1026
        %1028 = vmatprep.mubr.bf16.mxu0 0
        %1029 = vmatmul.mubr.bf16.gmra.mxu0 %v478
        %v1030 = vpop.f32.mrf.mxu0
        %v1031 = vadd.f32 0.0, %v1030
        %v1032 = vpop.f32.mrf.mxu0
        %v1033 = vadd.f32 0.0, %v1032
        %v1034 = vpop.f32.mrf.mxu0
        %v1035 = vadd.f32 0.0, %v1034
        %v1036 = vpop.f32.mrf.mxu0
        %v1037 = vadd.f32 0.0, %v1036
        %1038 = vdwg.mxu0
        %v1039 = vmax.f32 %v528, %v532
        %v1040 = vmax.f32 %v1039, %v538
        %v1041 = vmax.f32 %v1040, %v542
        %v1042 = vrot.slane %v1041, 4
        %v1043 = vmax.f32 %v1041, %v1042
        %v1044 = vrot.slane %v1043, 2
        %v1045 = vmax.f32 %v1043, %v1044
        %v1046 = vrot.slane %v1045, 1
        %v1047 = vmax.f32 %v1045, %v1046
        %v1048 = vmax.f32 %v530, %v534
        %v1049 = vmax.f32 %v1048, %v540
        %v1050 = vmax.f32 %v1049, %v544
        %v1051 = vrot.slane %v1050, 4
        %v1052 = vmax.f32 %v1050, %v1051
        %v1053 = vrot.slane %v1052, 2
        %v1054 = vmax.f32 %v1052, %v1053
        %v1055 = vrot.slane %v1054, 1
        %v1056 = vmax.f32 %v1054, %v1055
        %v1057 = vmax.f32 %v801, %v805
        %v1058 = vmax.f32 %v1057, %v811
        %v1059 = vmax.f32 %v1058, %v815
        %v1060 = vrot.slane %v1059, 4
        %v1061 = vmax.f32 %v1059, %v1060
        %v1062 = vrot.slane %v1061, 2
        %v1063 = vmax.f32 %v1061, %v1062
        %v1064 = vrot.slane %v1063, 1
        %v1065 = vmax.f32 %v1063, %v1064
        %v1066 = vmax.f32 %v803, %v807
        %v1067 = vmax.f32 %v1066, %v813
        %v1068 = vmax.f32 %v1067, %v817
        %v1069 = vrot.slane %v1068, 4
        %v1070 = vmax.f32 %v1068, %v1069
        %v1071 = vrot.slane %v1070, 2
        %v1072 = vmax.f32 %v1070, %v1071
        %v1073 = vrot.slane %v1072, 1
        %v1074 = vmax.f32 %v1072, %v1073
        %v1075 = vmax.f32 %v548, %v552
        %v1076 = vmax.f32 %v1075, %v558
        %v1077 = vmax.f32 %v1076, %v562
        %v1078 = vrot.slane %v1077, 4
        %v1079 = vmax.f32 %v1077, %v1078
        %v1080 = vrot.slane %v1079, 2
        %v1081 = vmax.f32 %v1079, %v1080
        %v1082 = vrot.slane %v1081, 1
        %v1083 = vmax.f32 %v1081, %v1082
        %v1084 = vmax.f32 %v550, %v554
        %v1085 = vmax.f32 %v1084, %v560
        %v1086 = vmax.f32 %v1085, %v564
        %v1087 = vrot.slane %v1086, 4
        %v1088 = vmax.f32 %v1086, %v1087
        %v1089 = vrot.slane %v1088, 2
        %v1090 = vmax.f32 %v1088, %v1089
        %v1091 = vrot.slane %v1090, 1
        %v1092 = vmax.f32 %v1090, %v1091
        %v1093 = vmax.f32 %v821, %v825
        %v1094 = vmax.f32 %v1093, %v831
        %v1095 = vmax.f32 %v1094, %v835
        %v1096 = vrot.slane %v1095, 4
        %v1097 = vmax.f32 %v1095, %v1096
        %v1098 = vrot.slane %v1097, 2
        %v1099 = vmax.f32 %v1097, %v1098
        %v1100 = vrot.slane %v1099, 1
        %v1101 = vmax.f32 %v1099, %v1100
        %v1102 = vmax.f32 %v823, %v827
        %v1103 = vmax.f32 %v1102, %v833
        %v1104 = vmax.f32 %v1103, %v837
        %v1105 = vrot.slane %v1104, 4
        %v1106 = vmax.f32 %v1104, %v1105
        %v1107 = vrot.slane %v1106, 2
        %v1108 = vmax.f32 %v1106, %v1107
        %v1109 = vrot.slane %v1108, 1
        %v1110 = vmax.f32 %v1108, %v1109
        %v1111 = vmax.f32 %v568, %v572
        %v1112 = vmax.f32 %v1111, %v578
        %v1113 = vmax.f32 %v1112, %v582
        %v1114 = vrot.slane %v1113, 4
        %v1115 = vmax.f32 %v1113, %v1114
        %v1116 = vrot.slane %v1115, 2
        %v1117 = vmax.f32 %v1115, %v1116
        %v1118 = vrot.slane %v1117, 1
        %v1119 = vmax.f32 %v1117, %v1118
        %v1120 = vmax.f32 %v570, %v574
        %v1121 = vmax.f32 %v1120, %v580
        %v1122 = vmax.f32 %v1121, %v584
        %v1123 = vrot.slane %v1122, 4
        %v1124 = vmax.f32 %v1122, %v1123
        %v1125 = vrot.slane %v1124, 2
        %v1126 = vmax.f32 %v1124, %v1125
        %v1127 = vrot.slane %v1126, 1
        %v1128 = vmax.f32 %v1126, %v1127
        %v1129 = vmax.f32 %v841, %v845
        %v1130 = vmax.f32 %v1129, %v851
        %v1131 = vmax.f32 %v1130, %v855
        %v1132 = vrot.slane %v1131, 4
        %v1133 = vmax.f32 %v1131, %v1132
        %v1134 = vrot.slane %v1133, 2
        %v1135 = vmax.f32 %v1133, %v1134
        %v1136 = vrot.slane %v1135, 1
        %v1137 = vmax.f32 %v1135, %v1136
        %v1138 = vmax.f32 %v843, %v847
        %v1139 = vmax.f32 %v1138, %v853
        %v1140 = vmax.f32 %v1139, %v857
        %v1141 = vrot.slane %v1140, 4
        %v1142 = vmax.f32 %v1140, %v1141
        %v1143 = vrot.slane %v1142, 2
        %v1144 = vmax.f32 %v1142, %v1143
        %v1145 = vrot.slane %v1144, 1
        %v1146 = vmax.f32 %v1144, %v1145
        %v1147 = vmax.f32 %v588, %v592
        %v1148 = vmax.f32 %v1147, %v598
        %v1149 = vmax.f32 %v1148, %v602
        %v1150 = vrot.slane %v1149, 4
        %v1151 = vmax.f32 %v1149, %v1150
        %v1152 = vrot.slane %v1151, 2
        %v1153 = vmax.f32 %v1151, %v1152
        %v1154 = vrot.slane %v1153, 1
        %v1155 = vmax.f32 %v1153, %v1154
        %v1156 = vmax.f32 %v590, %v594
        %v1157 = vmax.f32 %v1156, %v600
        %v1158 = vmax.f32 %v1157, %v604
        %v1159 = vrot.slane %v1158, 4
        %v1160 = vmax.f32 %v1158, %v1159
        %v1161 = vrot.slane %v1160, 2
        %v1162 = vmax.f32 %v1160, %v1161
        %v1163 = vrot.slane %v1162, 1
        %v1164 = vmax.f32 %v1162, %v1163
        %v1165 = vmax.f32 %v861, %v865
        %v1166 = vmax.f32 %v1165, %v871
        %v1167 = vmax.f32 %v1166, %v875
        %v1168 = vrot.slane %v1167, 4
        %v1169 = vmax.f32 %v1167, %v1168
        %v1170 = vrot.slane %v1169, 2
        %v1171 = vmax.f32 %v1169, %v1170
        %v1172 = vrot.slane %v1171, 1
        %v1173 = vmax.f32 %v1171, %v1172
        %v1174 = vmax.f32 %v863, %v867
        %v1175 = vmax.f32 %v1174, %v873
        %v1176 = vmax.f32 %v1175, %v877
        %v1177 = vrot.slane %v1176, 4
        %v1178 = vmax.f32 %v1176, %v1177
        %v1179 = vrot.slane %v1178, 2
        %v1180 = vmax.f32 %v1178, %v1179
        %v1181 = vrot.slane %v1180, 1
        %v1182 = vmax.f32 %v1180, %v1181
        %v1183 = vsub.f32 %v528, %v1047
        %v1184 = vsub.f32 %v530, %v1056
        %v1185 = vsub.f32 %v801, %v1065
        %v1186 = vsub.f32 %v803, %v1074
        %v1187 = vsub.f32 %v532, %v1047
        %v1188 = vsub.f32 %v534, %v1056
        %v1189 = vsub.f32 %v805, %v1065
        %v1190 = vsub.f32 %v807, %v1074
        %v1191 = vsub.f32 %v538, %v1047
        %v1192 = vsub.f32 %v540, %v1056
        %v1193 = vsub.f32 %v811, %v1065
        %v1194 = vsub.f32 %v813, %v1074
        %v1195 = vsub.f32 %v542, %v1047
        %v1196 = vsub.f32 %v544, %v1056
        %v1197 = vsub.f32 %v815, %v1065
        %v1198 = vsub.f32 %v817, %v1074
        %v1199 = vsub.f32 %v548, %v1083
        %v1200 = vsub.f32 %v550, %v1092
        %v1201 = vsub.f32 %v821, %v1101
        %v1202 = vsub.f32 %v823, %v1110
        %v1203 = vsub.f32 %v552, %v1083
        %v1204 = vsub.f32 %v554, %v1092
        %v1205 = vsub.f32 %v825, %v1101
        %v1206 = vsub.f32 %v827, %v1110
        %v1207 = vsub.f32 %v558, %v1083
        %v1208 = vsub.f32 %v560, %v1092
        %v1209 = vsub.f32 %v831, %v1101
        %v1210 = vsub.f32 %v833, %v1110
        %v1211 = vsub.f32 %v562, %v1083
        %v1212 = vsub.f32 %v564, %v1092
        %v1213 = vsub.f32 %v835, %v1101
        %v1214 = vsub.f32 %v837, %v1110
        %v1215 = vsub.f32 %v568, %v1119
        %v1216 = vsub.f32 %v570, %v1128
        %v1217 = vsub.f32 %v841, %v1137
        %v1218 = vsub.f32 %v843, %v1146
        %v1219 = vsub.f32 %v572, %v1119
        %v1220 = vsub.f32 %v574, %v1128
        %v1221 = vsub.f32 %v845, %v1137
        %v1222 = vsub.f32 %v847, %v1146
        %v1223 = vsub.f32 %v578, %v1119
        %v1224 = vsub.f32 %v580, %v1128
        %v1225 = vsub.f32 %v851, %v1137
        %v1226 = vsub.f32 %v853, %v1146
        %v1227 = vsub.f32 %v582, %v1119
        %v1228 = vsub.f32 %v584, %v1128
        %v1229 = vsub.f32 %v855, %v1137
        %v1230 = vsub.f32 %v857, %v1146
        %v1231 = vsub.f32 %v588, %v1155
        %v1232 = vsub.f32 %v590, %v1164
        %v1233 = vsub.f32 %v861, %v1173
        %v1234 = vsub.f32 %v863, %v1182
        %v1235 = vsub.f32 %v592, %v1155
        %v1236 = vsub.f32 %v594, %v1164
        %v1237 = vsub.f32 %v865, %v1173
        %v1238 = vsub.f32 %v867, %v1182
        %v1239 = vsub.f32 %v598, %v1155
        %v1240 = vsub.f32 %v600, %v1164
        %v1241 = vsub.f32 %v871, %v1173
        %v1242 = vsub.f32 %v873, %v1182
        %v1243 = vsub.f32 %v602, %v1155
        %v1244 = vsub.f32 %v604, %v1164
        %v1245 = vsub.f32 %v875, %v1173
        %v1246 = vsub.f32 %v877, %v1182
        %v1247 = vmul.f32 %v1183, 1.442695
        %v1248 = vpow.pop %v1247
        %v1249 = vmul.f32 %v1184, 1.442695
        %v1250 = vpow.pop %v1249
        %v1251 = vmul.f32 %v1185, 1.442695
        %v1252 = vpow.pop %v1251
        %v1253 = vmul.f32 %v1186, 1.442695
        %v1254 = vpow.pop %v1253
        %v1255 = vmul.f32 %v1187, 1.442695
        %v1256 = vpow.pop %v1255
        %v1257 = vmul.f32 %v1188, 1.442695
        %v1258 = vpow.pop %v1257
        %v1259 = vmul.f32 %v1189, 1.442695
        %v1260 = vpow.pop %v1259
        %v1261 = vmul.f32 %v1190, 1.442695
        %v1262 = vpow.pop %v1261
        %v1263 = vmul.f32 %v1191, 1.442695
        %v1264 = vpow.pop %v1263
        %v1265 = vmul.f32 %v1192, 1.442695
        %v1266 = vpow.pop %v1265
        %v1267 = vmul.f32 %v1193, 1.442695
        %v1268 = vpow.pop %v1267
        %v1269 = vmul.f32 %v1194, 1.442695
        %v1270 = vpow.pop %v1269
        %v1271 = vmul.f32 %v1195, 1.442695
        %v1272 = vpow.pop %v1271
        %v1273 = vmul.f32 %v1196, 1.442695
        %v1274 = vpow.pop %v1273
        %v1275 = vmul.f32 %v1197, 1.442695
        %v1276 = vpow.pop %v1275
        %v1277 = vmul.f32 %v1198, 1.442695
        %v1278 = vpow.pop %v1277
        %v1279 = vmul.f32 %v1199, 1.442695
        %v1280 = vpow.pop %v1279
        %v1281 = vmul.f32 %v1200, 1.442695
        %v1282 = vpow.pop %v1281
        %v1283 = vmul.f32 %v1201, 1.442695
        %v1284 = vpow.pop %v1283
        %v1285 = vmul.f32 %v1202, 1.442695
        %v1286 = vpow.pop %v1285
        %v1287 = vmul.f32 %v1203, 1.442695
        %v1288 = vpow.pop %v1287
        %v1289 = vmul.f32 %v1204, 1.442695
        %v1290 = vpow.pop %v1289
        %v1291 = vmul.f32 %v1205, 1.442695
        %v1292 = vpow.pop %v1291
        %v1293 = vmul.f32 %v1206, 1.442695
        %v1294 = vpow.pop %v1293
        %v1295 = vmul.f32 %v1207, 1.442695
        %v1296 = vpow.pop %v1295
        %v1297 = vmul.f32 %v1208, 1.442695
        %v1298 = vpow.pop %v1297
        %v1299 = vmul.f32 %v1209, 1.442695
        %v1300 = vpow.pop %v1299
        %v1301 = vmul.f32 %v1210, 1.442695
        %v1302 = vpow.pop %v1301
        %v1303 = vmul.f32 %v1211, 1.442695
        %v1304 = vpow.pop %v1303
        %v1305 = vmul.f32 %v1212, 1.442695
        %v1306 = vpow.pop %v1305
        %v1307 = vmul.f32 %v1213, 1.442695
        %v1308 = vpow.pop %v1307
        %v1309 = vmul.f32 %v1214, 1.442695
        %v1310 = vpow.pop %v1309
        %v1311 = vmul.f32 %v1215, 1.442695
        %v1312 = vpow.pop %v1311
        %v1313 = vmul.f32 %v1216, 1.442695
        %v1314 = vpow.pop %v1313
        %v1315 = vmul.f32 %v1217, 1.442695
        %v1316 = vpow.pop %v1315
        %v1317 = vmul.f32 %v1218, 1.442695
        %v1318 = vpow.pop %v1317
        %v1319 = vmul.f32 %v1219, 1.442695
        %v1320 = vpow.pop %v1319
        %v1321 = vmul.f32 %v1220, 1.442695
        %v1322 = vpow.pop %v1321
        %v1323 = vmul.f32 %v1221, 1.442695
        %v1324 = vpow.pop %v1323
        %v1325 = vmul.f32 %v1222, 1.442695
        %v1326 = vpow.pop %v1325
        %v1327 = vmul.f32 %v1223, 1.442695
        %v1328 = vpow.pop %v1327
        %v1329 = vmul.f32 %v1224, 1.442695
        %v1330 = vpow.pop %v1329
        %v1331 = vmul.f32 %v1225, 1.442695
        %v1332 = vpow.pop %v1331
        %v1333 = vmul.f32 %v1226, 1.442695
        %v1334 = vpow.pop %v1333
        %v1335 = vmul.f32 %v1227, 1.442695
        %v1336 = vpow.pop %v1335
        %v1337 = vmul.f32 %v1228, 1.442695
        %v1338 = vpow.pop %v1337
        %v1339 = vmul.f32 %v1229, 1.442695
        %v1340 = vpow.pop %v1339
        %v1341 = vmul.f32 %v1230, 1.442695
        %v1342 = vpow.pop %v1341
        %v1343 = vmul.f32 %v1231, 1.442695
        %v1344 = vpow.pop %v1343
        %v1345 = vmul.f32 %v1232, 1.442695
        %v1346 = vpow.pop %v1345
        %v1347 = vmul.f32 %v1233, 1.442695
        %v1348 = vpow.pop %v1347
        %v1349 = vmul.f32 %v1234, 1.442695
        %v1350 = vpow.pop %v1349
        %v1351 = vmul.f32 %v1235, 1.442695
        %v1352 = vpow.pop %v1351
        %v1353 = vmul.f32 %v1236, 1.442695
        %v1354 = vpow.pop %v1353
        %v1355 = vmul.f32 %v1237, 1.442695
        %v1356 = vpow.pop %v1355
        %v1357 = vmul.f32 %v1238, 1.442695
        %v1358 = vpow.pop %v1357
        %v1359 = vmul.f32 %v1239, 1.442695
        %v1360 = vpow.pop %v1359
        %v1361 = vmul.f32 %v1240, 1.442695
        %v1362 = vpow.pop %v1361
        %v1363 = vmul.f32 %v1241, 1.442695
        %v1364 = vpow.pop %v1363
        %v1365 = vmul.f32 %v1242, 1.442695
        %v1366 = vpow.pop %v1365
        %v1367 = vmul.f32 %v1243, 1.442695
        %v1368 = vpow.pop %v1367
        %v1369 = vmul.f32 %v1244, 1.442695
        %v1370 = vpow.pop %v1369
        %v1371 = vmul.f32 %v1245, 1.442695
        %v1372 = vpow.pop %v1371
        %v1373 = vmul.f32 %v1246, 1.442695
        %v1374 = vpow.pop %v1373
        %v1375 = vadd.f32 %v1248, %v1256
        %v1376 = vadd.f32 %v1375, %v1264
        %v1377 = vadd.f32 %v1376, %v1272
        %v1378 = vrot.slane %v1377, 4
        %v1379 = vadd.f32 %v1377, %v1378
        %v1380 = vrot.slane %v1379, 2
        %v1381 = vadd.f32 %v1379, %v1380
        %v1382 = vrot.slane %v1381, 1
        %v1383 = vadd.f32 %v1381, %v1382
        %v1384 = vadd.f32 %v1250, %v1258
        %v1385 = vadd.f32 %v1384, %v1266
        %v1386 = vadd.f32 %v1385, %v1274
        %v1387 = vrot.slane %v1386, 4
        %v1388 = vadd.f32 %v1386, %v1387
        %v1389 = vrot.slane %v1388, 2
        %v1390 = vadd.f32 %v1388, %v1389
        %v1391 = vrot.slane %v1390, 1
        %v1392 = vadd.f32 %v1390, %v1391
        %v1393 = vadd.f32 %v1252, %v1260
        %v1394 = vadd.f32 %v1393, %v1268
        %v1395 = vadd.f32 %v1394, %v1276
        %v1396 = vrot.slane %v1395, 4
        %v1397 = vadd.f32 %v1395, %v1396
        %v1398 = vrot.slane %v1397, 2
        %v1399 = vadd.f32 %v1397, %v1398
        %v1400 = vrot.slane %v1399, 1
        %v1401 = vadd.f32 %v1399, %v1400
        %v1402 = vadd.f32 %v1254, %v1262
        %v1403 = vadd.f32 %v1402, %v1270
        %v1404 = vadd.f32 %v1403, %v1278
        %v1405 = vrot.slane %v1404, 4
        %v1406 = vadd.f32 %v1404, %v1405
        %v1407 = vrot.slane %v1406, 2
        %v1408 = vadd.f32 %v1406, %v1407
        %v1409 = vrot.slane %v1408, 1
        %v1410 = vadd.f32 %v1408, %v1409
        %v1411 = vadd.f32 %v1280, %v1288
        %v1412 = vadd.f32 %v1411, %v1296
        %v1413 = vadd.f32 %v1412, %v1304
        %v1414 = vrot.slane %v1413, 4
        %v1415 = vadd.f32 %v1413, %v1414
        %v1416 = vrot.slane %v1415, 2
        %v1417 = vadd.f32 %v1415, %v1416
        %v1418 = vrot.slane %v1417, 1
        %v1419 = vadd.f32 %v1417, %v1418
        %v1420 = vadd.f32 %v1282, %v1290
        %v1421 = vadd.f32 %v1420, %v1298
        %v1422 = vadd.f32 %v1421, %v1306
        %v1423 = vrot.slane %v1422, 4
        %v1424 = vadd.f32 %v1422, %v1423
        %v1425 = vrot.slane %v1424, 2
        %v1426 = vadd.f32 %v1424, %v1425
        %v1427 = vrot.slane %v1426, 1
        %v1428 = vadd.f32 %v1426, %v1427
        %v1429 = vadd.f32 %v1284, %v1292
        %v1430 = vadd.f32 %v1429, %v1300
        %v1431 = vadd.f32 %v1430, %v1308
        %v1432 = vrot.slane %v1431, 4
        %v1433 = vadd.f32 %v1431, %v1432
        %v1434 = vrot.slane %v1433, 2
        %v1435 = vadd.f32 %v1433, %v1434
        %v1436 = vrot.slane %v1435, 1
        %v1437 = vadd.f32 %v1435, %v1436
        %v1438 = vadd.f32 %v1286, %v1294
        %v1439 = vadd.f32 %v1438, %v1302
        %v1440 = vadd.f32 %v1439, %v1310
        %v1441 = vrot.slane %v1440, 4
        %v1442 = vadd.f32 %v1440, %v1441
        %v1443 = vrot.slane %v1442, 2
        %v1444 = vadd.f32 %v1442, %v1443
        %v1445 = vrot.slane %v1444, 1
        %v1446 = vadd.f32 %v1444, %v1445
        %v1447 = vadd.f32 %v1312, %v1320
        %v1448 = vadd.f32 %v1447, %v1328
        %v1449 = vadd.f32 %v1448, %v1336
        %v1450 = vrot.slane %v1449, 4
        %v1451 = vadd.f32 %v1449, %v1450
        %v1452 = vrot.slane %v1451, 2
        %v1453 = vadd.f32 %v1451, %v1452
        %v1454 = vrot.slane %v1453, 1
        %v1455 = vadd.f32 %v1453, %v1454
        %v1456 = vadd.f32 %v1314, %v1322
        %v1457 = vadd.f32 %v1456, %v1330
        %v1458 = vadd.f32 %v1457, %v1338
        %v1459 = vrot.slane %v1458, 4
        %v1460 = vadd.f32 %v1458, %v1459
        %v1461 = vrot.slane %v1460, 2
        %v1462 = vadd.f32 %v1460, %v1461
        %v1463 = vrot.slane %v1462, 1
        %v1464 = vadd.f32 %v1462, %v1463
        %v1465 = vadd.f32 %v1316, %v1324
        %v1466 = vadd.f32 %v1465, %v1332
        %v1467 = vadd.f32 %v1466, %v1340
        %v1468 = vrot.slane %v1467, 4
        %v1469 = vadd.f32 %v1467, %v1468
        %v1470 = vrot.slane %v1469, 2
        %v1471 = vadd.f32 %v1469, %v1470
        %v1472 = vrot.slane %v1471, 1
        %v1473 = vadd.f32 %v1471, %v1472
        %v1474 = vadd.f32 %v1318, %v1326
        %v1475 = vadd.f32 %v1474, %v1334
        %v1476 = vadd.f32 %v1475, %v1342
        %v1477 = vrot.slane %v1476, 4
        %v1478 = vadd.f32 %v1476, %v1477
        %v1479 = vrot.slane %v1478, 2
        %v1480 = vadd.f32 %v1478, %v1479
        %v1481 = vrot.slane %v1480, 1
        %v1482 = vadd.f32 %v1480, %v1481
        %v1483 = vadd.f32 %v1344, %v1352
        %v1484 = vadd.f32 %v1483, %v1360
        %v1485 = vadd.f32 %v1484, %v1368
        %v1486 = vrot.slane %v1485, 4
        %v1487 = vadd.f32 %v1485, %v1486
        %v1488 = vrot.slane %v1487, 2
        %v1489 = vadd.f32 %v1487, %v1488
        %v1490 = vrot.slane %v1489, 1
        %v1491 = vadd.f32 %v1489, %v1490
        %v1492 = vadd.f32 %v1346, %v1354
        %v1493 = vadd.f32 %v1492, %v1362
        %v1494 = vadd.f32 %v1493, %v1370
        %v1495 = vrot.slane %v1494, 4
        %v1496 = vadd.f32 %v1494, %v1495
        %v1497 = vrot.slane %v1496, 2
        %v1498 = vadd.f32 %v1496, %v1497
        %v1499 = vrot.slane %v1498, 1
        %v1500 = vadd.f32 %v1498, %v1499
        %v1501 = vadd.f32 %v1348, %v1356
        %v1502 = vadd.f32 %v1501, %v1364
        %v1503 = vadd.f32 %v1502, %v1372
        %v1504 = vrot.slane %v1503, 4
        %v1505 = vadd.f32 %v1503, %v1504
        %v1506 = vrot.slane %v1505, 2
        %v1507 = vadd.f32 %v1505, %v1506
        %v1508 = vrot.slane %v1507, 1
        %v1509 = vadd.f32 %v1507, %v1508
        %v1510 = vadd.f32 %v1350, %v1358
        %v1511 = vadd.f32 %v1510, %v1366
        %v1512 = vadd.f32 %v1511, %v1374
        %v1513 = vrot.slane %v1512, 4
        %v1514 = vadd.f32 %v1512, %v1513
        %v1515 = vrot.slane %v1514, 2
        %v1516 = vadd.f32 %v1514, %v1515
        %v1517 = vrot.slane %v1516, 1
        %v1518 = vadd.f32 %v1516, %v1517
        %v1519 = vrcp.pop %v1383
        %v1520 = vrcp.pop %v1392
        %v1521 = vrcp.pop %v1401
        %v1522 = vrcp.pop %v1410
        %v1523 = vrcp.pop %v1419
        %v1524 = vrcp.pop %v1428
        %v1525 = vrcp.pop %v1437
        %v1526 = vrcp.pop %v1446
        %v1527 = vrcp.pop %v1455
        %v1528 = vrcp.pop %v1464
        %v1529 = vrcp.pop %v1473
        %v1530 = vrcp.pop %v1482
        %v1531 = vrcp.pop %v1491
        %v1532 = vrcp.pop %v1500
        %v1533 = vrcp.pop %v1509
        %v1534 = vrcp.pop %v1518
        %v1535 = vmul.f32 %v1248, %v1519
        %v1536 = vmul.f32 %v1250, %v1520
        %v1537 = vmul.f32 %v1252, %v1521
        %v1538 = vmul.f32 %v1254, %v1522
        %v1539 = vmul.f32 %v1256, %v1519
        %v1540 = vmul.f32 %v1258, %v1520
        %v1541 = vmul.f32 %v1260, %v1521
        %v1542 = vmul.f32 %v1262, %v1522
        %v1543 = vmul.f32 %v1264, %v1519
        %v1544 = vmul.f32 %v1266, %v1520
        %v1545 = vmul.f32 %v1268, %v1521
        %v1546 = vmul.f32 %v1270, %v1522
        %v1547 = vmul.f32 %v1272, %v1519
        %v1548 = vmul.f32 %v1274, %v1520
        %v1549 = vmul.f32 %v1276, %v1521
        %v1550 = vmul.f32 %v1278, %v1522
        %v1551 = vmul.f32 %v1280, %v1523
        %v1552 = vmul.f32 %v1282, %v1524
        %v1553 = vmul.f32 %v1284, %v1525
        %v1554 = vmul.f32 %v1286, %v1526
        %v1555 = vmul.f32 %v1288, %v1523
        %v1556 = vmul.f32 %v1290, %v1524
        %v1557 = vmul.f32 %v1292, %v1525
        %v1558 = vmul.f32 %v1294, %v1526
        %v1559 = vmul.f32 %v1296, %v1523
        %v1560 = vmul.f32 %v1298, %v1524
        %v1561 = vmul.f32 %v1300, %v1525
        %v1562 = vmul.f32 %v1302, %v1526
        %v1563 = vmul.f32 %v1304, %v1523
        %v1564 = vmul.f32 %v1306, %v1524
        %v1565 = vmul.f32 %v1308, %v1525
        %v1566 = vmul.f32 %v1310, %v1526
        %v1567 = vmul.f32 %v1312, %v1527
        %v1568 = vmul.f32 %v1314, %v1528
        %v1569 = vmul.f32 %v1316, %v1529
        %v1570 = vmul.f32 %v1318, %v1530
        %v1571 = vmul.f32 %v1320, %v1527
        %v1572 = vmul.f32 %v1322, %v1528
        %v1573 = vmul.f32 %v1324, %v1529
        %v1574 = vmul.f32 %v1326, %v1530
        %v1575 = vmul.f32 %v1328, %v1527
        %v1576 = vmul.f32 %v1330, %v1528
        %v1577 = vmul.f32 %v1332, %v1529
        %v1578 = vmul.f32 %v1334, %v1530
        %v1579 = vmul.f32 %v1336, %v1527
        %v1580 = vmul.f32 %v1338, %v1528
        %v1581 = vmul.f32 %v1340, %v1529
        %v1582 = vmul.f32 %v1342, %v1530
        %v1583 = vmul.f32 %v1344, %v1531
        %v1584 = vmul.f32 %v1346, %v1532
        %v1585 = vmul.f32 %v1348, %v1533
        %v1586 = vmul.f32 %v1350, %v1534
        %v1587 = vmul.f32 %v1352, %v1531
        %v1588 = vmul.f32 %v1354, %v1532
        %v1589 = vmul.f32 %v1356, %v1533
        %v1590 = vmul.f32 %v1358, %v1534
        %v1591 = vmul.f32 %v1360, %v1531
        %v1592 = vmul.f32 %v1362, %v1532
        %v1593 = vmul.f32 %v1364, %v1533
        %v1594 = vmul.f32 %v1366, %v1534
        %v1595 = vmul.f32 %v1368, %v1531
        %v1596 = vmul.f32 %v1370, %v1532
        %v1597 = vmul.f32 %v1372, %v1533
        %v1598 = vmul.f32 %v1374, %v1534
        %v1599 = vpack.c.bf16 %v1539, %v1535
        %v1600 = vpack.c.bf16 %v1540, %v1536
        %v1601 = vpack.c.bf16 %v1541, %v1537
        %v1602 = vpack.c.bf16 %v1542, %v1538
        %v1603 = vpack.c.bf16 %v1547, %v1543
        %v1604 = vpack.c.bf16 %v1548, %v1544
        %v1605 = vpack.c.bf16 %v1549, %v1545
        %v1606 = vpack.c.bf16 %v1550, %v1546
        %v1607 = vpack.c.bf16 %v1555, %v1551
        %v1608 = vpack.c.bf16 %v1556, %v1552
        %v1609 = vpack.c.bf16 %v1557, %v1553
        %v1610 = vpack.c.bf16 %v1558, %v1554
        %v1611 = vpack.c.bf16 %v1563, %v1559
        %v1612 = vpack.c.bf16 %v1564, %v1560
        %v1613 = vpack.c.bf16 %v1565, %v1561
        %v1614 = vpack.c.bf16 %v1566, %v1562
        %v1615 = vpack.c.bf16 %v1571, %v1567
        %v1616 = vpack.c.bf16 %v1572, %v1568
        %v1617 = vpack.c.bf16 %v1573, %v1569
        %v1618 = vpack.c.bf16 %v1574, %v1570
        %v1619 = vpack.c.bf16 %v1579, %v1575
        %v1620 = vpack.c.bf16 %v1580, %v1576
        %v1621 = vpack.c.bf16 %v1581, %v1577
        %v1622 = vpack.c.bf16 %v1582, %v1578
        %v1623 = vpack.c.bf16 %v1587, %v1583
        %v1624 = vpack.c.bf16 %v1588, %v1584
        %v1625 = vpack.c.bf16 %v1589, %v1585
        %v1626 = vpack.c.bf16 %v1590, %v1586
        %v1627 = vpack.c.bf16 %v1595, %v1591
        %v1628 = vpack.c.bf16 %v1596, %v1592
        %v1629 = vpack.c.bf16 %v1597, %v1593
        %v1630 = vpack.c.bf16 %v1598, %v1594
        %v1663 = vunpack.c.l.b16 %v1599
        %v1664 = vunpack.c.l.b16 %v1600
        %v1665 = vunpack.c.l.b16 %v1601
        %v1666 = vunpack.c.l.b16 %v1602
        %v1667 = vunpack.c.h.b16 %v1599
        %v1668 = vunpack.c.h.b16 %v1600
        %v1669 = vunpack.c.h.b16 %v1601
        %v1670 = vunpack.c.h.b16 %v1602
        %v1671 = vunpack.c.l.b16 %v1603
        %v1672 = vunpack.c.l.b16 %v1604
        %v1673 = vunpack.c.l.b16 %v1605
        %v1674 = vunpack.c.l.b16 %v1606
        %v1675 = vunpack.c.h.b16 %v1603
        %v1676 = vunpack.c.h.b16 %v1604
        %v1677 = vunpack.c.h.b16 %v1605
        %v1678 = vunpack.c.h.b16 %v1606
        %v1679 = vunpack.c.l.b16 %v1607
        %v1680 = vunpack.c.l.b16 %v1608
        %v1681 = vunpack.c.l.b16 %v1609
        %v1682 = vunpack.c.l.b16 %v1610
        %v1683 = vunpack.c.h.b16 %v1607
        %v1684 = vunpack.c.h.b16 %v1608
        %v1685 = vunpack.c.h.b16 %v1609
        %v1686 = vunpack.c.h.b16 %v1610
        %v1687 = vunpack.c.l.b16 %v1611
        %v1688 = vunpack.c.l.b16 %v1612
        %v1689 = vunpack.c.l.b16 %v1613
        %v1690 = vunpack.c.l.b16 %v1614
        %v1691 = vunpack.c.h.b16 %v1611
        %v1692 = vunpack.c.h.b16 %v1612
        %v1693 = vunpack.c.h.b16 %v1613
        %v1694 = vunpack.c.h.b16 %v1614
        %v1695 = vunpack.c.l.b16 %v1615
        %v1696 = vunpack.c.l.b16 %v1616
        %v1697 = vunpack.c.l.b16 %v1617
        %v1698 = vunpack.c.l.b16 %v1618
        %v1699 = vunpack.c.h.b16 %v1615
        %v1700 = vunpack.c.h.b16 %v1616
        %v1701 = vunpack.c.h.b16 %v1617
        %v1702 = vunpack.c.h.b16 %v1618
        %v1703 = vunpack.c.l.b16 %v1619
        %v1704 = vunpack.c.l.b16 %v1620
        %v1705 = vunpack.c.l.b16 %v1621
        %v1706 = vunpack.c.l.b16 %v1622
        %v1707 = vunpack.c.h.b16 %v1619
        %v1708 = vunpack.c.h.b16 %v1620
        %v1709 = vunpack.c.h.b16 %v1621
        %v1710 = vunpack.c.h.b16 %v1622
        %v1711 = vunpack.c.l.b16 %v1623
        %v1712 = vunpack.c.l.b16 %v1624
        %v1713 = vunpack.c.l.b16 %v1625
        %v1714 = vunpack.c.l.b16 %v1626
        %v1715 = vunpack.c.h.b16 %v1623
        %v1716 = vunpack.c.h.b16 %v1624
        %v1717 = vunpack.c.h.b16 %v1625
        %v1718 = vunpack.c.h.b16 %v1626
        %v1719 = vunpack.c.l.b16 %v1627
        %v1720 = vunpack.c.l.b16 %v1628
        %v1721 = vunpack.c.l.b16 %v1629
        %v1722 = vunpack.c.l.b16 %v1630
        %v1723 = vunpack.c.h.b16 %v1627
        %v1724 = vunpack.c.h.b16 %v1628
        %v1725 = vunpack.c.h.b16 %v1629
        %v1726 = vunpack.c.h.b16 %v1630
        %v1727 = vpack.c.b16 %v1664, %v1663
        %v1728 = vpack.c.b16 %v1666, %v1665
        %v1729 = vpack.c.b16 %v1668, %v1667
        %v1730 = vpack.c.b16 %v1670, %v1669
        %v1731 = vpack.c.b16 %v1672, %v1671
        %v1732 = vpack.c.b16 %v1674, %v1673
        %v1733 = vpack.c.b16 %v1676, %v1675
        %v1734 = vpack.c.b16 %v1678, %v1677
        %v1735 = vpack.c.b16 %v1680, %v1679
        %v1736 = vpack.c.b16 %v1682, %v1681
        %v1737 = vpack.c.b16 %v1684, %v1683
        %v1738 = vpack.c.b16 %v1686, %v1685
        %v1739 = vpack.c.b16 %v1688, %v1687
        %v1740 = vpack.c.b16 %v1690, %v1689
        %v1741 = vpack.c.b16 %v1692, %v1691
        %v1742 = vpack.c.b16 %v1694, %v1693
        %v1743 = vpack.c.b16 %v1696, %v1695
        %v1744 = vpack.c.b16 %v1698, %v1697
        %v1745 = vpack.c.b16 %v1700, %v1699
        %v1746 = vpack.c.b16 %v1702, %v1701
        %v1747 = vpack.c.b16 %v1704, %v1703
        %v1748 = vpack.c.b16 %v1706, %v1705
        %v1749 = vpack.c.b16 %v1708, %v1707
        %v1750 = vpack.c.b16 %v1710, %v1709
        %v1751 = vpack.c.b16 %v1712, %v1711
        %v1752 = vpack.c.b16 %v1714, %v1713
        %v1753 = vpack.c.b16 %v1716, %v1715
        %v1754 = vpack.c.b16 %v1718, %v1717
        %v1755 = vpack.c.b16 %v1720, %v1719
        %v1756 = vpack.c.b16 %v1722, %v1721
        %v1757 = vpack.c.b16 %v1724, %v1723
        %v1758 = vpack.c.b16 %v1726, %v1725
        %1791 = vst [vmem:[#allocation2] sm:$0xff] %v1727
        %1792 = vst [vmem:[#allocation2 + $0x8] sm:$0xff] %v1728
        %1793 = vst [vmem:[#allocation2 + $0x10] sm:$0xff] %v1729
        %1794 = vst [vmem:[#allocation2 + $0x18] sm:$0xff] %v1730
        %1795 = vst [vmem:[#allocation2 + $0x20] sm:$0xff] %v1731
        %1796 = vst [vmem:[#allocation2 + $0x28] sm:$0xff] %v1732
        %1797 = vst [vmem:[#allocation2 + $0x30] sm:$0xff] %v1733
        %1798 = vst [vmem:[#allocation2 + $0x38] sm:$0xff] %v1734
        %1799 = vst [vmem:[#allocation2 + $0x40] sm:$0xff] %v1735
        %1800 = vst [vmem:[#allocation2 + $0x48] sm:$0xff] %v1736
        %1801 = vst [vmem:[#allocation2 + $0x50] sm:$0xff] %v1737
        %1802 = vst [vmem:[#allocation2 + $0x58] sm:$0xff] %v1738
        %1803 = vst [vmem:[#allocation2 + $0x60] sm:$0xff] %v1739
        %1804 = vst [vmem:[#allocation2 + $0x68] sm:$0xff] %v1740
        %1805 = vst [vmem:[#allocation2 + $0x70] sm:$0xff] %v1741
        %1806 = vst [vmem:[#allocation2 + $0x78] sm:$0xff] %v1742
        %1807 = vst [vmem:[#allocation2 + $0x80] sm:$0xff] %v1743
        %1808 = vst [vmem:[#allocation2 + $0x88] sm:$0xff] %v1744
        %1809 = vst [vmem:[#allocation2 + $0x90] sm:$0xff] %v1745
        %1810 = vst [vmem:[#allocation2 + $0x98] sm:$0xff] %v1746
        %1811 = vst [vmem:[#allocation2 + $0xa0] sm:$0xff] %v1747
        %1812 = vst [vmem:[#allocation2 + $0xa8] sm:$0xff] %v1748
        %1813 = vst [vmem:[#allocation2 + $0xb0] sm:$0xff] %v1749
        %1814 = vst [vmem:[#allocation2 + $0xb8] sm:$0xff] %v1750
        %1815 = vst [vmem:[#allocation2 + $0xc0] sm:$0xff] %v1751
        %1816 = vst [vmem:[#allocation2 + $0xc8] sm:$0xff] %v1752
        %1817 = vst [vmem:[#allocation2 + $0xd0] sm:$0xff] %v1753
        %1818 = vst [vmem:[#allocation2 + $0xd8] sm:$0xff] %v1754
        %1819 = vst [vmem:[#allocation2 + $0xe0] sm:$0xff] %v1755
        %1820 = vst [vmem:[#allocation2 + $0xe8] sm:$0xff] %v1756
        %1821 = vst [vmem:[#allocation2 + $0xf0] sm:$0xff] %v1757
        %1822 = vst [vmem:[#allocation2 + $0xf8] sm:$0xff] %v1758
        %1823 = vst [vmem:[#allocation3] sm:$0xff] %v608
        %1824 = vst [vmem:[#allocation3 + $0x8] sm:$0xff] %v610
        %1825 = vst [vmem:[#allocation3 + $0x10] sm:$0xff] %v881
        %1826 = vst [vmem:[#allocation3 + $0x18] sm:$0xff] %v883
        %1827 = vst [vmem:[#allocation3 + $0x20] sm:$0xff] %v612
        %1828 = vst [vmem:[#allocation3 + $0x28] sm:$0xff] %v614
        %1829 = vst [vmem:[#allocation3 + $0x30] sm:$0xff] %v885
        %1830 = vst [vmem:[#allocation3 + $0x38] sm:$0xff] %v887
        %1831 = vst [vmem:[#allocation3 + $0x40] sm:$0xff] %v618
        %1832 = vst [vmem:[#allocation3 + $0x48] sm:$0xff] %v620
        %1833 = vst [vmem:[#allocation3 + $0x50] sm:$0xff] %v891
        %1834 = vst [vmem:[#allocation3 + $0x58] sm:$0xff] %v893
        %1835 = vst [vmem:[#allocation3 + $0x60] sm:$0xff] %v622
        %1836 = vst [vmem:[#allocation3 + $0x68] sm:$0xff] %v624
        %1837 = vst [vmem:[#allocation3 + $0x70] sm:$0xff] %v895
        %1838 = vst [vmem:[#allocation3 + $0x78] sm:$0xff] %v897
        %1839 = vst [vmem:[#allocation3 + $0x80] sm:$0xff] %v628
        %1840 = vst [vmem:[#allocation3 + $0x88] sm:$0xff] %v630
        %1841 = vst [vmem:[#allocation3 + $0x90] sm:$0xff] %v901
        %1842 = vst [vmem:[#allocation3 + $0x98] sm:$0xff] %v903
        %1843 = vst [vmem:[#allocation3 + $0xa0] sm:$0xff] %v632
        %1844 = vst [vmem:[#allocation3 + $0xa8] sm:$0xff] %v634
        %1845 = vst [vmem:[#allocation3 + $0xb0] sm:$0xff] %v905
        %1846 = vst [vmem:[#allocation3 + $0xb8] sm:$0xff] %v907
        %1847 = vst [vmem:[#allocation3 + $0xc0] sm:$0xff] %v638
        %1848 = vst [vmem:[#allocation3 + $0xc8] sm:$0xff] %v640
        %1849 = vst [vmem:[#allocation3 + $0xd0] sm:$0xff] %v911
        %1850 = vst [vmem:[#allocation3 + $0xd8] sm:$0xff] %v913
        %1851 = vst [vmem:[#allocation3 + $0xe0] sm:$0xff] %v642
        %1852 = vst [vmem:[#allocation3 + $0xe8] sm:$0xff] %v644
        %1853 = vst [vmem:[#allocation3 + $0xf0] sm:$0xff] %v915
        %1854 = vst [vmem:[#allocation3 + $0xf8] sm:$0xff] %v917
        %1855 = vst [vmem:[#allocation3 + $0x100] sm:$0xff] %v648
        %1856 = vst [vmem:[#allocation3 + $0x108] sm:$0xff] %v650
        %1857 = vst [vmem:[#allocation3 + $0x110] sm:$0xff] %v921
        %1858 = vst [vmem:[#allocation3 + $0x118] sm:$0xff] %v923
        %1859 = vst [vmem:[#allocation3 + $0x120] sm:$0xff] %v652
        %1860 = vst [vmem:[#allocation3 + $0x128] sm:$0xff] %v654
        %1861 = vst [vmem:[#allocation3 + $0x130] sm:$0xff] %v925
        %1862 = vst [vmem:[#allocation3 + $0x138] sm:$0xff] %v927
        %1863 = vst [vmem:[#allocation3 + $0x140] sm:$0xff] %v658
        %1864 = vst [vmem:[#allocation3 + $0x148] sm:$0xff] %v660
        %1865 = vst [vmem:[#allocation3 + $0x150] sm:$0xff] %v931
        %1866 = vst [vmem:[#allocation3 + $0x158] sm:$0xff] %v933
        %1867 = vst [vmem:[#allocation3 + $0x160] sm:$0xff] %v662
        %1868 = vst [vmem:[#allocation3 + $0x168] sm:$0xff] %v664
        %1869 = vst [vmem:[#allocation3 + $0x170] sm:$0xff] %v935
        %1870 = vst [vmem:[#allocation3 + $0x178] sm:$0xff] %v937
        %1871 = vst [vmem:[#allocation3 + $0x180] sm:$0xff] %v668
        %1872 = vst [vmem:[#allocation3 + $0x188] sm:$0xff] %v670
        %1873 = vst [vmem:[#allocation3 + $0x190] sm:$0xff] %v941
        %1874 = vst [vmem:[#allocation3 + $0x198] sm:$0xff] %v943
        %1875 = vst [vmem:[#allocation3 + $0x1a0] sm:$0xff] %v672
        %1876 = vst [vmem:[#allocation3 + $0x1a8] sm:$0xff] %v674
        %1877 = vst [vmem:[#allocation3 + $0x1b0] sm:$0xff] %v945
        %1878 = vst [vmem:[#allocation3 + $0x1b8] sm:$0xff] %v947
        %1879 = vst [vmem:[#allocation3 + $0x1c0] sm:$0xff] %v678
        %1880 = vst [vmem:[#allocation3 + $0x1c8] sm:$0xff] %v680
        %1881 = vst [vmem:[#allocation3 + $0x1d0] sm:$0xff] %v951
        %1882 = vst [vmem:[#allocation3 + $0x1d8] sm:$0xff] %v953
        %1883 = vst [vmem:[#allocation3 + $0x1e0] sm:$0xff] %v682
        %1884 = vst [vmem:[#allocation3 + $0x1e8] sm:$0xff] %v684
        %1885 = vst [vmem:[#allocation3 + $0x1f0] sm:$0xff] %v955
        %1886 = vst [vmem:[#allocation3 + $0x1f8] sm:$0xff] %v957
        %v1887 = vpack.c.bf16 %v692, %v688
        %v1888 = vpack.c.bf16 %v694, %v690
        %v1889 = vpack.c.bf16 %v965, %v961
        %v1890 = vpack.c.bf16 %v967, %v963
        %v1891 = vpack.c.bf16 %v702, %v698
        %v1892 = vpack.c.bf16 %v704, %v700
        %v1893 = vpack.c.bf16 %v975, %v971
        %v1894 = vpack.c.bf16 %v977, %v973
        %v1895 = vpack.c.bf16 %v712, %v708
        %v1896 = vpack.c.bf16 %v714, %v710
        %v1897 = vpack.c.bf16 %v985, %v981
        %v1898 = vpack.c.bf16 %v987, %v983
        %v1899 = vpack.c.bf16 %v722, %v718
        %v1900 = vpack.c.bf16 %v724, %v720
        %v1901 = vpack.c.bf16 %v995, %v991
        %v1902 = vpack.c.bf16 %v997, %v993
        %v1903 = vpack.c.bf16 %v732, %v728
        %v1904 = vpack.c.bf16 %v734, %v730
        %v1905 = vpack.c.bf16 %v1005, %v1001
        %v1906 = vpack.c.bf16 %v1007, %v1003
        %v1907 = vpack.c.bf16 %v742, %v738
        %v1908 = vpack.c.bf16 %v744, %v740
        %v1909 = vpack.c.bf16 %v1015, %v1011
        %v1910 = vpack.c.bf16 %v1017, %v1013
        %v1911 = vpack.c.bf16 %v752, %v748
        %v1912 = vpack.c.bf16 %v754, %v750
        %v1913 = vpack.c.bf16 %v1025, %v1021
        %v1914 = vpack.c.bf16 %v1027, %v1023
        %v1915 = vpack.c.bf16 %v762, %v758
        %v1916 = vpack.c.bf16 %v764, %v760
        %v1917 = vpack.c.bf16 %v1035, %v1031
        %v1918 = vpack.c.bf16 %v1037, %v1033
        %v1951 = vunpack.c.l.b16 %v1887
        %v1952 = vunpack.c.l.b16 %v1888
        %v1953 = vunpack.c.l.b16 %v1889
        %v1954 = vunpack.c.l.b16 %v1890
        %v1955 = vunpack.c.h.b16 %v1887
        %v1956 = vunpack.c.h.b16 %v1888
        %v1957 = vunpack.c.h.b16 %v1889
        %v1958 = vunpack.c.h.b16 %v1890
        %v1959 = vunpack.c.l.b16 %v1891
        %v1960 = vunpack.c.l.b16 %v1892
        %v1961 = vunpack.c.l.b16 %v1893
        %v1962 = vunpack.c.l.b16 %v1894
        %v1963 = vunpack.c.h.b16 %v1891
        %v1964 = vunpack.c.h.b16 %v1892
        %v1965 = vunpack.c.h.b16 %v1893
        %v1966 = vunpack.c.h.b16 %v1894
        %v1967 = vunpack.c.l.b16 %v1895
        %v1968 = vunpack.c.l.b16 %v1896
        %v1969 = vunpack.c.l.b16 %v1897
        %v1970 = vunpack.c.l.b16 %v1898
        %v1971 = vunpack.c.h.b16 %v1895
        %v1972 = vunpack.c.h.b16 %v1896
        %v1973 = vunpack.c.h.b16 %v1897
        %v1974 = vunpack.c.h.b16 %v1898
        %v1975 = vunpack.c.l.b16 %v1899
        %v1976 = vunpack.c.l.b16 %v1900
        %v1977 = vunpack.c.l.b16 %v1901
        %v1978 = vunpack.c.l.b16 %v1902
        %v1979 = vunpack.c.h.b16 %v1899
        %v1980 = vunpack.c.h.b16 %v1900
        %v1981 = vunpack.c.h.b16 %v1901
        %v1982 = vunpack.c.h.b16 %v1902
        %v1983 = vunpack.c.l.b16 %v1903
        %v1984 = vunpack.c.l.b16 %v1904
        %v1985 = vunpack.c.l.b16 %v1905
        %v1986 = vunpack.c.l.b16 %v1906
        %v1987 = vunpack.c.h.b16 %v1903
        %v1988 = vunpack.c.h.b16 %v1904
        %v1989 = vunpack.c.h.b16 %v1905
        %v1990 = vunpack.c.h.b16 %v1906
        %v1991 = vunpack.c.l.b16 %v1907
        %v1992 = vunpack.c.l.b16 %v1908
        %v1993 = vunpack.c.l.b16 %v1909
        %v1994 = vunpack.c.l.b16 %v1910
        %v1995 = vunpack.c.h.b16 %v1907
        %v1996 = vunpack.c.h.b16 %v1908
        %v1997 = vunpack.c.h.b16 %v1909
        %v1998 = vunpack.c.h.b16 %v1910
        %v1999 = vunpack.c.l.b16 %v1911
        %v2000 = vunpack.c.l.b16 %v1912
        %v2001 = vunpack.c.l.b16 %v1913
        %v2002 = vunpack.c.l.b16 %v1914
        %v2003 = vunpack.c.h.b16 %v1911
        %v2004 = vunpack.c.h.b16 %v1912
        %v2005 = vunpack.c.h.b16 %v1913
        %v2006 = vunpack.c.h.b16 %v1914
        %v2007 = vunpack.c.l.b16 %v1915
        %v2008 = vunpack.c.l.b16 %v1916
        %v2009 = vunpack.c.l.b16 %v1917
        %v2010 = vunpack.c.l.b16 %v1918
        %v2011 = vunpack.c.h.b16 %v1915
        %v2012 = vunpack.c.h.b16 %v1916
        %v2013 = vunpack.c.h.b16 %v1917
        %v2014 = vunpack.c.h.b16 %v1918
        %v2015 = vpack.c.b16 %v1952, %v1951
        %v2016 = vpack.c.b16 %v1954, %v1953
        %v2017 = vpack.c.b16 %v1956, %v1955
        %v2018 = vpack.c.b16 %v1958, %v1957
        %v2019 = vpack.c.b16 %v1960, %v1959
        %v2020 = vpack.c.b16 %v1962, %v1961
        %v2021 = vpack.c.b16 %v1964, %v1963
        %v2022 = vpack.c.b16 %v1966, %v1965
        %v2023 = vpack.c.b16 %v1968, %v1967
        %v2024 = vpack.c.b16 %v1970, %v1969
        %v2025 = vpack.c.b16 %v1972, %v1971
        %v2026 = vpack.c.b16 %v1974, %v1973
        %v2027 = vpack.c.b16 %v1976, %v1975
        %v2028 = vpack.c.b16 %v1978, %v1977
        %v2029 = vpack.c.b16 %v1980, %v1979
        %v2030 = vpack.c.b16 %v1982, %v1981
        %v2031 = vpack.c.b16 %v1984, %v1983
        %v2032 = vpack.c.b16 %v1986, %v1985
        %v2033 = vpack.c.b16 %v1988, %v1987
        %v2034 = vpack.c.b16 %v1990, %v1989
        %v2035 = vpack.c.b16 %v1992, %v1991
        %v2036 = vpack.c.b16 %v1994, %v1993
        %v2037 = vpack.c.b16 %v1996, %v1995
        %v2038 = vpack.c.b16 %v1998, %v1997
        %v2039 = vpack.c.b16 %v2000, %v1999
        %v2040 = vpack.c.b16 %v2002, %v2001
        %v2041 = vpack.c.b16 %v2004, %v2003
        %v2042 = vpack.c.b16 %v2006, %v2005
        %v2043 = vpack.c.b16 %v2008, %v2007
        %v2044 = vpack.c.b16 %v2010, %v2009
        %v2045 = vpack.c.b16 %v2012, %v2011
        %v2046 = vpack.c.b16 %v2014, %v2013
        %2079 = vst [vmem:[#allocation4] sm:$0xff] %v2015
        %2080 = vst [vmem:[#allocation4 + $0x8] sm:$0xff] %v2016
        %2081 = vst [vmem:[#allocation4 + $0x10] sm:$0xff] %v2017
        %2082 = vst [vmem:[#allocation4 + $0x18] sm:$0xff] %v2018
        %2083 = vst [vmem:[#allocation4 + $0x20] sm:$0xff] %v2019
        %2084 = vst [vmem:[#allocation4 + $0x28] sm:$0xff] %v2020
        %2085 = vst [vmem:[#allocation4 + $0x30] sm:$0xff] %v2021
        %2086 = vst [vmem:[#allocation4 + $0x38] sm:$0xff] %v2022
        %2087 = vst [vmem:[#allocation4 + $0x40] sm:$0xff] %v2023
        %2088 = vst [vmem:[#allocation4 + $0x48] sm:$0xff] %v2024
        %2089 = vst [vmem:[#allocation4 + $0x50] sm:$0xff] %v2025
        %2090 = vst [vmem:[#allocation4 + $0x58] sm:$0xff] %v2026
        %2091 = vst [vmem:[#allocation4 + $0x60] sm:$0xff] %v2027
        %2092 = vst [vmem:[#allocation4 + $0x68] sm:$0xff] %v2028
        %2093 = vst [vmem:[#allocation4 + $0x70] sm:$0xff] %v2029
        %2094 = vst [vmem:[#allocation4 + $0x78] sm:$0xff] %v2030
        %2095 = vst [vmem:[#allocation4 + $0x80] sm:$0xff] %v2031
        %2096 = vst [vmem:[#allocation4 + $0x88] sm:$0xff] %v2032
        %2097 = vst [vmem:[#allocation4 + $0x90] sm:$0xff] %v2033
        %2098 = vst [vmem:[#allocation4 + $0x98] sm:$0xff] %v2034
        %2099 = vst [vmem:[#allocation4 + $0xa0] sm:$0xff] %v2035
        %2100 = vst [vmem:[#allocation4 + $0xa8] sm:$0xff] %v2036
        %2101 = vst [vmem:[#allocation4 + $0xb0] sm:$0xff] %v2037
        %2102 = vst [vmem:[#allocation4 + $0xb8] sm:$0xff] %v2038
        %2103 = vst [vmem:[#allocation4 + $0xc0] sm:$0xff] %v2039
        %2104 = vst [vmem:[#allocation4 + $0xc8] sm:$0xff] %v2040
        %2105 = vst [vmem:[#allocation4 + $0xd0] sm:$0xff] %v2041
        %2106 = vst [vmem:[#allocation4 + $0xd8] sm:$0xff] %v2042
        %2107 = vst [vmem:[#allocation4 + $0xe0] sm:$0xff] %v2043
        %2108 = vst [vmem:[#allocation4 + $0xe8] sm:$0xff] %v2044
        %2109 = vst [vmem:[#allocation4 + $0xf0] sm:$0xff] %v2045
        %2110 = vst [vmem:[#allocation4 + $0xf8] sm:$0xff] %v2046
        %v2111 = vld [vmem:[%s2] sm:$0x3]
        %v2112 = vld [vmem:[%s4] sm:$0xff]
        %v2113 = vld [vmem:[%s4 + $0x8] sm:$0xff]
        %v2114 = vld [vmem:[%s4 + $0x10] sm:$0xff]
        %v2115 = vld [vmem:[%s4 + $0x18] sm:$0xff]
        %v2116 = vld [vmem:[%s4 + $0x20] sm:$0xff]
        %v2117 = vld [vmem:[%s4 + $0x28] sm:$0xff]
        %v2118 = vld [vmem:[%s4 + $0x30] sm:$0xff]
        %v2119 = vld [vmem:[%s4 + $0x38] sm:$0xff]
        %v2120 = vld [vmem:[%s4 + $0x40] sm:$0xff]
        %v2121 = vld [vmem:[%s4 + $0x48] sm:$0xff]
        %v2122 = vld [vmem:[%s4 + $0x50] sm:$0xff]
        %v2123 = vld [vmem:[%s4 + $0x58] sm:$0xff]
        %v2124 = vld [vmem:[%s4 + $0x60] sm:$0xff]
        %v2125 = vld [vmem:[%s4 + $0x68] sm:$0xff]
        %v2126 = vld [vmem:[%s4 + $0x70] sm:$0xff]
        %v2127 = vld [vmem:[%s4 + $0x78] sm:$0xff]
        %v2128 = vld [vmem:[%s3] sm:$0xf]
        %v2129 = vld [vmem:[#allocation3] sm:$0xff]
        %v2130 = vld [vmem:[#allocation3 + $0x8] sm:$0xff]
        %v2131 = vld [vmem:[#allocation3 + $0x20] sm:$0xff]
        %v2132 = vld [vmem:[#allocation3 + $0x28] sm:$0xff]
        %v2133 = vld [vmem:[#allocation3 + $0x40] sm:$0xff]
        %v2134 = vld [vmem:[#allocation3 + $0x48] sm:$0xff]
        %v2135 = vld [vmem:[#allocation3 + $0x60] sm:$0xff]
        %v2136 = vld [vmem:[#allocation3 + $0x68] sm:$0xff]
        %v2137 = vld [vmem:[#allocation3 + $0x80] sm:$0xff]
        %v2138 = vld [vmem:[#allocation3 + $0x88] sm:$0xff]
        %v2139 = vld [vmem:[#allocation3 + $0xa0] sm:$0xff]
        %v2140 = vld [vmem:[#allocation3 + $0xa8] sm:$0xff]
        %v2141 = vld [vmem:[#allocation3 + $0xc0] sm:$0xff]
        %v2142 = vld [vmem:[#allocation3 + $0xc8] sm:$0xff]
        %v2143 = vld [vmem:[#allocation3 + $0xe0] sm:$0xff]
        %v2144 = vld [vmem:[#allocation3 + $0xe8] sm:$0xff]
        %v2145 = vld [vmem:[#allocation3 + $0x100] sm:$0xff]
        %v2146 = vld [vmem:[#allocation3 + $0x108] sm:$0xff]
        %v2147 = vld [vmem:[#allocation3 + $0x120] sm:$0xff]
        %v2148 = vld [vmem:[#allocation3 + $0x128] sm:$0xff]
        %v2149 = vld [vmem:[#allocation3 + $0x140] sm:$0xff]
        %v2150 = vld [vmem:[#allocation3 + $0x148] sm:$0xff]
        %v2151 = vld [vmem:[#allocation3 + $0x160] sm:$0xff]
        %v2152 = vld [vmem:[#allocation3 + $0x168] sm:$0xff]
        %v2153 = vld [vmem:[#allocation3 + $0x180] sm:$0xff]
        %v2154 = vld [vmem:[#allocation3 + $0x188] sm:$0xff]
        %v2155 = vld [vmem:[#allocation3 + $0x1a0] sm:$0xff]
        %v2156 = vld [vmem:[#allocation3 + $0x1a8] sm:$0xff]
        %v2157 = vld [vmem:[#allocation3 + $0x1c0] sm:$0xff]
        %v2158 = vld [vmem:[#allocation3 + $0x1c8] sm:$0xff]
        %v2159 = vld [vmem:[#allocation3 + $0x1e0] sm:$0xff]
        %v2160 = vld [vmem:[#allocation3 + $0x1e8] sm:$0xff]
        %v2161 = vmax.f32 %v2129, %v2130
        %2162 = vmax.xlane.f32.xlu0 %v2161
        %v2163 = vpop.xlane.xlu0 %2162
        %v2164 = vmax.f32 %v2131, %v2132
        %2165 = vmax.xlane.f32.xlu0 %v2164
        %v2166 = vpop.xlane.xlu0 %2165
        %v2167 = vmax.f32 %v2133, %v2134
        %2168 = vmax.xlane.f32.xlu0 %v2167
        %v2169 = vpop.xlane.xlu0 %2168
        %v2170 = vmax.f32 %v2135, %v2136
        %2171 = vmax.xlane.f32.xlu0 %v2170
        %v2172 = vpop.xlane.xlu0 %2171
        %v2173 = vmax.f32 %v2137, %v2138
        %2174 = vmax.xlane.f32.xlu0 %v2173
        %v2175 = vpop.xlane.xlu0 %2174
        %v2176 = vmax.f32 %v2139, %v2140
        %2177 = vmax.xlane.f32.xlu0 %v2176
        %v2178 = vpop.xlane.xlu0 %2177
        %v2179 = vmax.f32 %v2141, %v2142
        %2180 = vmax.xlane.f32.xlu0 %v2179
        %v2181 = vpop.xlane.xlu0 %2180
        %v2182 = vmax.f32 %v2143, %v2144
        %2183 = vmax.xlane.f32.xlu0 %v2182
        %v2184 = vpop.xlane.xlu0 %2183
        %v2185 = vmax.f32 %v2145, %v2146
        %2186 = vmax.xlane.f32.xlu0 %v2185
        %v2187 = vpop.xlane.xlu0 %2186
        %v2188 = vmax.f32 %v2147, %v2148
        %2189 = vmax.xlane.f32.xlu0 %v2188
        %v2190 = vpop.xlane.xlu0 %2189
        %v2191 = vmax.f32 %v2149, %v2150
        %2192 = vmax.xlane.f32.xlu0 %v2191
        %v2193 = vpop.xlane.xlu0 %2192
        %v2194 = vmax.f32 %v2151, %v2152
        %2195 = vmax.xlane.f32.xlu0 %v2194
        %v2196 = vpop.xlane.xlu0 %2195
        %v2197 = vmax.f32 %v2153, %v2154
        %2198 = vmax.xlane.f32.xlu0 %v2197
        %v2199 = vpop.xlane.xlu0 %2198
        %v2200 = vmax.f32 %v2155, %v2156
        %2201 = vmax.xlane.f32.xlu0 %v2200
        %v2202 = vpop.xlane.xlu0 %2201
        %v2203 = vmax.f32 %v2157, %v2158
        %2204 = vmax.xlane.f32.xlu0 %v2203
        %v2205 = vpop.xlane.xlu0 %2204
        %v2206 = vmax.f32 %v2159, %v2160
        %2207 = vmax.xlane.f32.xlu0 %v2206
        %v2208 = vpop.xlane.xlu0 %2207
        %v2209 = vsub.f32 %v2129, %v2163
        %v2210 = vsub.f32 %v2130, %v2163
        %v2211 = vsub.f32 %v2131, %v2166
        %v2212 = vsub.f32 %v2132, %v2166
        %v2213 = vsub.f32 %v2133, %v2169
        %v2214 = vsub.f32 %v2134, %v2169
        %v2215 = vsub.f32 %v2135, %v2172
        %v2216 = vsub.f32 %v2136, %v2172
        %v2217 = vsub.f32 %v2137, %v2175
        %v2218 = vsub.f32 %v2138, %v2175
        %v2219 = vsub.f32 %v2139, %v2178
        %v2220 = vsub.f32 %v2140, %v2178
        %v2221 = vsub.f32 %v2141, %v2181
        %v2222 = vsub.f32 %v2142, %v2181
        %v2223 = vsub.f32 %v2143, %v2184
        %v2224 = vsub.f32 %v2144, %v2184
        %v2225 = vsub.f32 %v2145, %v2187
        %v2226 = vsub.f32 %v2146, %v2187
        %v2227 = vsub.f32 %v2147, %v2190
        %v2228 = vsub.f32 %v2148, %v2190
        %v2229 = vsub.f32 %v2149, %v2193
        %v2230 = vsub.f32 %v2150, %v2193
        %v2231 = vsub.f32 %v2151, %v2196
        %v2232 = vsub.f32 %v2152, %v2196
        %v2233 = vsub.f32 %v2153, %v2199
        %v2234 = vsub.f32 %v2154, %v2199
        %v2235 = vsub.f32 %v2155, %v2202
        %v2236 = vsub.f32 %v2156, %v2202
        %v2237 = vsub.f32 %v2157, %v2205
        %v2238 = vsub.f32 %v2158, %v2205
        %v2239 = vsub.f32 %v2159, %v2208
        %v2240 = vsub.f32 %v2160, %v2208
        %v2241 = vmul.f32 %v2209, 1.442695
        %v2242 = vpow.pop %v2241
        %v2243 = vmul.f32 %v2210, 1.442695
        %v2244 = vpow.pop %v2243
        %v2245 = vmul.f32 %v2211, 1.442695
        %v2246 = vpow.pop %v2245
        %v2247 = vmul.f32 %v2212, 1.442695
        %v2248 = vpow.pop %v2247
        %v2249 = vmul.f32 %v2213, 1.442695
        %v2250 = vpow.pop %v2249
        %v2251 = vmul.f32 %v2214, 1.442695
        %v2252 = vpow.pop %v2251
        %v2253 = vmul.f32 %v2215, 1.442695
        %v2254 = vpow.pop %v2253
        %v2255 = vmul.f32 %v2216, 1.442695
        %v2256 = vpow.pop %v2255
        %v2257 = vmul.f32 %v2217, 1.442695
        %v2258 = vpow.pop %v2257
        %v2259 = vmul.f32 %v2218, 1.442695
        %v2260 = vpow.pop %v2259
        %v2261 = vmul.f32 %v2219, 1.442695
        %v2262 = vpow.pop %v2261
        %v2263 = vmul.f32 %v2220, 1.442695
        %v2264 = vpow.pop %v2263
        %v2265 = vmul.f32 %v2221, 1.442695
        %v2266 = vpow.pop %v2265
        %v2267 = vmul.f32 %v2222, 1.442695
        %v2268 = vpow.pop %v2267
        %v2269 = vmul.f32 %v2223, 1.442695
        %v2270 = vpow.pop %v2269
        %v2271 = vmul.f32 %v2224, 1.442695
        %v2272 = vpow.pop %v2271
        %v2273 = vmul.f32 %v2225, 1.442695
        %v2274 = vpow.pop %v2273
        %v2275 = vmul.f32 %v2226, 1.442695
        %v2276 = vpow.pop %v2275
        %v2277 = vmul.f32 %v2227, 1.442695
        %v2278 = vpow.pop %v2277
        %v2279 = vmul.f32 %v2228, 1.442695
        %v2280 = vpow.pop %v2279
        %v2281 = vmul.f32 %v2229, 1.442695
        %v2282 = vpow.pop %v2281
        %v2283 = vmul.f32 %v2230, 1.442695
        %v2284 = vpow.pop %v2283
        %v2285 = vmul.f32 %v2231, 1.442695
        %v2286 = vpow.pop %v2285
        %v2287 = vmul.f32 %v2232, 1.442695
        %v2288 = vpow.pop %v2287
        %v2289 = vmul.f32 %v2233, 1.442695
        %v2290 = vpow.pop %v2289
        %v2291 = vmul.f32 %v2234, 1.442695
        %v2292 = vpow.pop %v2291
        %v2293 = vmul.f32 %v2235, 1.442695
        %v2294 = vpow.pop %v2293
        %v2295 = vmul.f32 %v2236, 1.442695
        %v2296 = vpow.pop %v2295
        %v2297 = vmul.f32 %v2237, 1.442695
        %v2298 = vpow.pop %v2297
        %v2299 = vmul.f32 %v2238, 1.442695
        %v2300 = vpow.pop %v2299
        %v2301 = vmul.f32 %v2239, 1.442695
        %v2302 = vpow.pop %v2301
        %v2303 = vmul.f32 %v2240, 1.442695
        %v2304 = vpow.pop %v2303
        %v2305 = vadd.f32 %v2242, %v2244
        %2306 = vadd.xlane.f32.xlu0 %v2305
        %v2307 = vpop.xlane.xlu0 %2306
        %v2308 = vadd.f32 %v2246, %v2248
        %2309 = vadd.xlane.f32.xlu0 %v2308
        %v2310 = vpop.xlane.xlu0 %2309
        %v2311 = vadd.f32 %v2250, %v2252
        %2312 = vadd.xlane.f32.xlu0 %v2311
        %v2313 = vpop.xlane.xlu0 %2312
        %v2314 = vadd.f32 %v2254, %v2256
        %2315 = vadd.xlane.f32.xlu0 %v2314
        %v2316 = vpop.xlane.xlu0 %2315
        %v2317 = vadd.f32 %v2258, %v2260
        %2318 = vadd.xlane.f32.xlu0 %v2317
        %v2319 = vpop.xlane.xlu0 %2318
        %v2320 = vadd.f32 %v2262, %v2264
        %2321 = vadd.xlane.f32.xlu0 %v2320
        %v2322 = vpop.xlane.xlu0 %2321
        %v2323 = vadd.f32 %v2266, %v2268
        %2324 = vadd.xlane.f32.xlu0 %v2323
        %v2325 = vpop.xlane.xlu0 %2324
        %v2326 = vadd.f32 %v2270, %v2272
        %2327 = vadd.xlane.f32.xlu0 %v2326
        %v2328 = vpop.xlane.xlu0 %2327
        %v2329 = vadd.f32 %v2274, %v2276
        %2330 = vadd.xlane.f32.xlu0 %v2329
        %v2331 = vpop.xlane.xlu0 %2330
        %v2332 = vadd.f32 %v2278, %v2280
        %2333 = vadd.xlane.f32.xlu0 %v2332
        %v2334 = vpop.xlane.xlu0 %2333
        %v2335 = vadd.f32 %v2282, %v2284
        %2336 = vadd.xlane.f32.xlu0 %v2335
        %v2337 = vpop.xlane.xlu0 %2336
        %v2338 = vadd.f32 %v2286, %v2288
        %2339 = vadd.xlane.f32.xlu0 %v2338
        %v2340 = vpop.xlane.xlu0 %2339
        %v2341 = vadd.f32 %v2290, %v2292
        %2342 = vadd.xlane.f32.xlu0 %v2341
        %v2343 = vpop.xlane.xlu0 %2342
        %v2344 = vadd.f32 %v2294, %v2296
        %2345 = vadd.xlane.f32.xlu0 %v2344
        %v2346 = vpop.xlane.xlu0 %2345
        %v2347 = vadd.f32 %v2298, %v2300
        %2348 = vadd.xlane.f32.xlu0 %v2347
        %v2349 = vpop.xlane.xlu0 %2348
        %v2350 = vadd.f32 %v2302, %v2304
        %2351 = vadd.xlane.f32.xlu0 %v2350
        %v2352 = vpop.xlane.xlu0 %2351
        %v2353 = vrcp.pop %v2307
        %v2354 = vrcp.pop %v2310
        %v2355 = vrcp.pop %v2313
        %v2356 = vrcp.pop %v2316
        %v2357 = vrcp.pop %v2319
        %v2358 = vrcp.pop %v2322
        %v2359 = vrcp.pop %v2325
        %v2360 = vrcp.pop %v2328
        %v2361 = vrcp.pop %v2331
        %v2362 = vrcp.pop %v2334
        %v2363 = vrcp.pop %v2337
        %v2364 = vrcp.pop %v2340
        %v2365 = vrcp.pop %v2343
        %v2366 = vrcp.pop %v2346
        %v2367 = vrcp.pop %v2349
        %v2368 = vrcp.pop %v2352
        %v2369 = vmul.f32 %v2242, %v2353
        %v2370 = vmul.f32 %v2244, %v2353
        %v2371 = vmul.f32 %v2246, %v2354
        %v2372 = vmul.f32 %v2248, %v2354
        %v2373 = vmul.f32 %v2250, %v2355
        %v2374 = vmul.f32 %v2252, %v2355
        %v2375 = vmul.f32 %v2254, %v2356
        %v2376 = vmul.f32 %v2256, %v2356
        %v2377 = vmul.f32 %v2258, %v2357
        %v2378 = vmul.f32 %v2260, %v2357
        %v2379 = vmul.f32 %v2262, %v2358
        %v2380 = vmul.f32 %v2264, %v2358
        %v2381 = vmul.f32 %v2266, %v2359
        %v2382 = vmul.f32 %v2268, %v2359
        %v2383 = vmul.f32 %v2270, %v2360
        %v2384 = vmul.f32 %v2272, %v2360
        %v2385 = vmul.f32 %v2274, %v2361
        %v2386 = vmul.f32 %v2276, %v2361
        %v2387 = vmul.f32 %v2278, %v2362
        %v2388 = vmul.f32 %v2280, %v2362
        %v2389 = vmul.f32 %v2282, %v2363
        %v2390 = vmul.f32 %v2284, %v2363
        %v2391 = vmul.f32 %v2286, %v2364
        %v2392 = vmul.f32 %v2288, %v2364
        %v2393 = vmul.f32 %v2290, %v2365
        %v2394 = vmul.f32 %v2292, %v2365
        %v2395 = vmul.f32 %v2294, %v2366
        %v2396 = vmul.f32 %v2296, %v2366
        %v2397 = vmul.f32 %v2298, %v2367
        %v2398 = vmul.f32 %v2300, %v2367
        %v2399 = vmul.f32 %v2302, %v2368
        %v2400 = vmul.f32 %v2304, %v2368
        %v2401 = vpack.c.bf16 %v2371, %v2369
        %v2402 = vpack.c.bf16 %v2372, %v2370
        %v2403 = vpack.c.bf16 %v2375, %v2373
        %v2404 = vpack.c.bf16 %v2376, %v2374
        %v2405 = vpack.c.bf16 %v2379, %v2377
        %v2406 = vpack.c.bf16 %v2380, %v2378
        %v2407 = vpack.c.bf16 %v2383, %v2381
        %v2408 = vpack.c.bf16 %v2384, %v2382
        %v2409 = vpack.c.bf16 %v2387, %v2385
        %v2410 = vpack.c.bf16 %v2388, %v2386
        %v2411 = vpack.c.bf16 %v2391, %v2389
        %v2412 = vpack.c.bf16 %v2392, %v2390
        %v2413 = vpack.c.bf16 %v2395, %v2393
        %v2414 = vpack.c.bf16 %v2396, %v2394
        %v2415 = vpack.c.bf16 %v2399, %v2397
        %v2416 = vpack.c.bf16 %v2400, %v2398
        %v2417 = vld [vmem:[#allocation4] sm:$0xff]
        %v2418 = vld [vmem:[#allocation4 + $0x10] sm:$0xff]
        %v2419 = vld [vmem:[#allocation4 + $0x20] sm:$0xff]
        %v2420 = vld [vmem:[#allocation4 + $0x30] sm:$0xff]
        %v2421 = vld [vmem:[#allocation4 + $0x40] sm:$0xff]
        %v2422 = vld [vmem:[#allocation4 + $0x50] sm:$0xff]
        %v2423 = vld [vmem:[#allocation4 + $0x60] sm:$0xff]
        %v2424 = vld [vmem:[#allocation4 + $0x70] sm:$0xff]
        %v2425 = vld [vmem:[#allocation4 + $0x80] sm:$0xff]
        %v2426 = vld [vmem:[#allocation4 + $0x90] sm:$0xff]
        %v2427 = vld [vmem:[#allocation4 + $0xa0] sm:$0xff]
        %v2428 = vld [vmem:[#allocation4 + $0xb0] sm:$0xff]
        %v2429 = vld [vmem:[#allocation4 + $0xc0] sm:$0xff]
        %v2430 = vld [vmem:[#allocation4 + $0xd0] sm:$0xff]
        %v2431 = vld [vmem:[#allocation4 + $0xe0] sm:$0xff]
        %v2432 = vld [vmem:[#allocation4 + $0xf0] sm:$0xff]
        %v2449 = vunpack.c.l.b16 %v2417
        %v2450 = vunpack.c.h.b16 %v2417
        %v2451 = vunpack.c.l.b16 %v2418
        %v2452 = vunpack.c.h.b16 %v2418
        %v2453 = vunpack.c.l.b16 %v2419
        %v2454 = vunpack.c.h.b16 %v2419
        %v2455 = vunpack.c.l.b16 %v2420
        %v2456 = vunpack.c.h.b16 %v2420
        %v2457 = vunpack.c.l.b16 %v2421
        %v2458 = vunpack.c.h.b16 %v2421
        %v2459 = vunpack.c.l.b16 %v2422
        %v2460 = vunpack.c.h.b16 %v2422
        %v2461 = vunpack.c.l.b16 %v2423
        %v2462 = vunpack.c.h.b16 %v2423
        %v2463 = vunpack.c.l.b16 %v2424
        %v2464 = vunpack.c.h.b16 %v2424
        %v2465 = vunpack.c.l.b16 %v2425
        %v2466 = vunpack.c.h.b16 %v2425
        %v2467 = vunpack.c.l.b16 %v2426
        %v2468 = vunpack.c.h.b16 %v2426
        %v2469 = vunpack.c.l.b16 %v2427
        %v2470 = vunpack.c.h.b16 %v2427
        %v2471 = vunpack.c.l.b16 %v2428
        %v2472 = vunpack.c.h.b16 %v2428
        %v2473 = vunpack.c.l.b16 %v2429
        %v2474 = vunpack.c.h.b16 %v2429
        %v2475 = vunpack.c.l.b16 %v2430
        %v2476 = vunpack.c.h.b16 %v2430
        %v2477 = vunpack.c.l.b16 %v2431
        %v2478 = vunpack.c.h.b16 %v2431
        %v2479 = vunpack.c.l.b16 %v2432
        %v2480 = vunpack.c.h.b16 %v2432
        %v2481 = vpack.c.b16 %v2451, %v2449
        %v2482 = vpack.c.b16 %v2452, %v2450
        %v2483 = vpack.c.b16 %v2455, %v2453
        %v2484 = vpack.c.b16 %v2456, %v2454
        %v2485 = vpack.c.b16 %v2459, %v2457
        %v2486 = vpack.c.b16 %v2460, %v2458
        %v2487 = vpack.c.b16 %v2463, %v2461
        %v2488 = vpack.c.b16 %v2464, %v2462
        %v2489 = vpack.c.b16 %v2467, %v2465
        %v2490 = vpack.c.b16 %v2468, %v2466
        %v2491 = vpack.c.b16 %v2471, %v2469
        %v2492 = vpack.c.b16 %v2472, %v2470
        %v2493 = vpack.c.b16 %v2475, %v2473
        %v2494 = vpack.c.b16 %v2476, %v2474
        %v2495 = vpack.c.b16 %v2479, %v2477
        %v2496 = vpack.c.b16 %v2480, %v2478
        %2513 = vmatprep.subr.bf16.mxu0 %v2496
        %2514 = vmatpush1.bf16.xpose.msra.mxu0 %v2495
        %2515 = vmatprep.subr.bf16.mxu0 %v2494
        %2516 = vmatpush1.bf16.xpose.msra.mxu0 %v2493
        %2517 = vmatprep.subr.bf16.mxu0 %v2492
        %2518 = vmatpush1.bf16.xpose.msra.mxu0 %v2491
        %2519 = vmatprep.subr.bf16.mxu0 %v2490
        %2520 = vmatpush1.bf16.xpose.msra.mxu0 %v2489
        %2521 = vmatprep.subr.bf16.mxu0 %v2488
        %2522 = vmatpush1.bf16.xpose.msra.mxu0 %v2487
        %2523 = vmatprep.subr.bf16.mxu0 %v2486
        %2524 = vmatpush1.bf16.xpose.msra.mxu0 %v2485
        %2525 = vmatprep.subr.bf16.mxu0 %v2484
        %2526 = vmatpush1.bf16.xpose.msra.mxu0 %v2483
        %2527 = vmatprep.subr.bf16.mxu0 %v2482
        %2528 = vmatpush1.bf16.xpose.msra.mxu0 %v2481
        %2529 = vmatprep.subr.bf16.mxu0 0
        %2530 = vmatpush2.bf16.xpose.msra.mxu0 0
        %2531 = vmatprep.subr.bf16.mxu0 0
        %2532 = vmatpush2.bf16.xpose.msra.mxu0 0
        %2533 = vmatprep.subr.bf16.mxu0 0
        %2534 = vmatpush2.bf16.xpose.msra.mxu0 0
        %2535 = vmatprep.subr.bf16.mxu0 0
        %2536 = vmatpush2.bf16.xpose.msra.mxu0 0
        %2537 = vmatprep.subr.bf16.mxu0 0
        %2538 = vmatpush2.bf16.xpose.msra.mxu0 0
        %2539 = vmatprep.subr.bf16.mxu0 0
        %2540 = vmatpush2.bf16.xpose.msra.mxu0 0
        %2541 = vmatprep.subr.bf16.mxu0 0
        %2542 = vmatpush2.bf16.xpose.msra.mxu0 0
        %2543 = vmatprep.subr.bf16.mxu0 0
        %2544 = vmatpush2.bf16.xpose.msra.mxu0 0
        %2545 = vmatprep.mubr.bf16.mxu0 %v2402
        %2546 = vmatmul.mubr.bf16.gmra.mxu0 %v2401
        %v2547 = vpop.f32.mrf.mxu0
        %v2548 = vadd.f32 0.0, %v2547
        %v2549 = vpop.f32.mrf.mxu0
        %v2550 = vpop.f32.mrf.mxu0
        %v2551 = vadd.f32 0.0, %v2550
        %v2552 = vpop.f32.mrf.mxu0
        %2553 = vmatprep.mubr.bf16.mxu0 %v2404
        %2554 = vmatmul.mubr.bf16.gmra.mxu0 %v2403
        %v2555 = vpop.f32.mrf.mxu0
        %v2556 = vadd.f32 0.0, %v2555
        %v2557 = vpop.f32.mrf.mxu0
        %v2558 = vpop.f32.mrf.mxu0
        %v2559 = vadd.f32 0.0, %v2558
        %v2560 = vpop.f32.mrf.mxu0
        %2561 = vmatprep.mubr.bf16.mxu0 %v2406
        %2562 = vmatmul.mubr.bf16.gmra.mxu0 %v2405
        %v2563 = vpop.f32.mrf.mxu0
        %v2564 = vadd.f32 0.0, %v2563
        %v2565 = vpop.f32.mrf.mxu0
        %v2566 = vpop.f32.mrf.mxu0
        %v2567 = vadd.f32 0.0, %v2566
        %v2568 = vpop.f32.mrf.mxu0
        %2569 = vmatprep.mubr.bf16.mxu0 %v2408
        %2570 = vmatmul.mubr.bf16.gmra.mxu0 %v2407
        %v2571 = vpop.f32.mrf.mxu0
        %v2572 = vadd.f32 0.0, %v2571
        %v2573 = vpop.f32.mrf.mxu0
        %v2574 = vpop.f32.mrf.mxu0
        %v2575 = vadd.f32 0.0, %v2574
        %v2576 = vpop.f32.mrf.mxu0
        %2577 = vmatprep.mubr.bf16.mxu0 %v2410
        %2578 = vmatmul.mubr.bf16.gmra.mxu0 %v2409
        %v2579 = vpop.f32.mrf.mxu0
        %v2580 = vadd.f32 0.0, %v2579
        %v2581 = vpop.f32.mrf.mxu0
        %v2582 = vpop.f32.mrf.mxu0
        %v2583 = vadd.f32 0.0, %v2582
        %v2584 = vpop.f32.mrf.mxu0
        %2585 = vmatprep.mubr.bf16.mxu0 %v2412
        %2586 = vmatmul.mubr.bf16.gmra.mxu0 %v2411
        %v2587 = vpop.f32.mrf.mxu0
        %v2588 = vadd.f32 0.0, %v2587
        %v2589 = vpop.f32.mrf.mxu0
        %v2590 = vpop.f32.mrf.mxu0
        %v2591 = vadd.f32 0.0, %v2590
        %v2592 = vpop.f32.mrf.mxu0
        %2593 = vmatprep.mubr.bf16.mxu0 %v2414
        %2594 = vmatmul.mubr.bf16.gmra.mxu0 %v2413
        %v2595 = vpop.f32.mrf.mxu0
        %v2596 = vadd.f32 0.0, %v2595
        %v2597 = vpop.f32.mrf.mxu0
        %v2598 = vpop.f32.mrf.mxu0
        %v2599 = vadd.f32 0.0, %v2598
        %v2600 = vpop.f32.mrf.mxu0
        %2601 = vmatprep.mubr.bf16.mxu0 %v2416
        %2602 = vmatmul.mubr.bf16.gmra.mxu0 %v2415
        %v2603 = vpop.f32.mrf.mxu0
        %v2604 = vadd.f32 0.0, %v2603
        %v2605 = vpop.f32.mrf.mxu0
        %v2606 = vpop.f32.mrf.mxu0
        %v2607 = vadd.f32 0.0, %v2606
        %v2608 = vpop.f32.mrf.mxu0
        %2609 = vdwg.mxu0
        %v2610 = vmul.f32 %v2548, %v2112
        %v2611 = vmul.f32 %v2551, %v2113
        %v2612 = vmul.f32 %v2556, %v2114
        %v2613 = vmul.f32 %v2559, %v2115
        %v2614 = vmul.f32 %v2564, %v2116
        %v2615 = vmul.f32 %v2567, %v2117
        %v2616 = vmul.f32 %v2572, %v2118
        %v2617 = vmul.f32 %v2575, %v2119
        %v2618 = vmul.f32 %v2580, %v2120
        %v2619 = vmul.f32 %v2583, %v2121
        %v2620 = vmul.f32 %v2588, %v2122
        %v2621 = vmul.f32 %v2591, %v2123
        %v2622 = vmul.f32 %v2596, %v2124
        %v2623 = vmul.f32 %v2599, %v2125
        %v2624 = vmul.f32 %v2604, %v2126
        %v2625 = vmul.f32 %v2607, %v2127
        %v2626 = vpack.c.bf16 %v2611, %v2610
        %v2627 = vpack.c.bf16 %v2613, %v2612
        %v2628 = vpack.c.bf16 %v2615, %v2614
        %v2629 = vpack.c.bf16 %v2617, %v2616
        %v2630 = vpack.c.bf16 %v2619, %v2618
        %v2631 = vpack.c.bf16 %v2621, %v2620
        %v2632 = vpack.c.bf16 %v2623, %v2622
        %v2633 = vpack.c.bf16 %v2625, %v2624
        %2634 = vmatprep.subr.bf16.mxu0 0
        %2635 = vmatpush1.bf16.xpose.msra.mxu0 %v2633
        %2636 = vmatprep.subr.bf16.mxu0 0
        %2637 = vmatpush1.bf16.xpose.msra.mxu0 %v2632
        %2638 = vmatprep.subr.bf16.mxu0 0
        %2639 = vmatpush1.bf16.xpose.msra.mxu0 %v2631
        %2640 = vmatprep.subr.bf16.mxu0 0
        %2641 = vmatpush1.bf16.xpose.msra.mxu0 %v2630
        %2642 = vmatprep.subr.bf16.mxu0 0
        %2643 = vmatpush1.bf16.xpose.msra.mxu0 %v2629
        %2644 = vmatprep.subr.bf16.mxu0 0
        %2645 = vmatpush1.bf16.xpose.msra.mxu0 %v2628
        %2646 = vmatprep.subr.bf16.mxu0 0
        %2647 = vmatpush1.bf16.xpose.msra.mxu0 %v2627
        %2648 = vmatprep.subr.bf16.mxu0 0
        %2649 = vmatpush1.bf16.xpose.msra.mxu0 %v2626
        %2650 = vmatprep.subr.bf16.mxu0 0
        %2651 = vmatpush2.bf16.xpose.msra.mxu0 0
        %2652 = vmatprep.subr.bf16.mxu0 0
        %2653 = vmatpush2.bf16.xpose.msra.mxu0 0
        %2654 = vmatprep.subr.bf16.mxu0 0
        %2655 = vmatpush2.bf16.xpose.msra.mxu0 0
        %2656 = vmatprep.subr.bf16.mxu0 0
        %2657 = vmatpush2.bf16.xpose.msra.mxu0 0
        %2658 = vmatprep.subr.bf16.mxu0 0
        %2659 = vmatpush2.bf16.xpose.msra.mxu0 0
        %2660 = vmatprep.subr.bf16.mxu0 0
        %2661 = vmatpush2.bf16.xpose.msra.mxu0 0
        %2662 = vmatprep.subr.bf16.mxu0 0
        %2663 = vmatpush2.bf16.xpose.msra.mxu0 0
        %2664 = vmatprep.subr.bf16.mxu0 0
        %2665 = vmatpush2.bf16.xpose.msra.mxu0 0
        %2666 = vmatprep.mubr.bf16.mxu0 0
        %2667 = vmatmul.mubr.bf16.gmra.mxu0 %v2111
        %v2668 = vpop.f32.mrf.mxu0
        %v2669 = vadd.f32 0.0, %v2668
        %v2670 = vpop.f32.mrf.mxu0
        %v2671 = vpop.f32.mrf.mxu0
        %v2672 = vpop.f32.mrf.mxu0
        %2673 = vdwg.mxu0
        %v2674 = vpack.c.bf16 %v2669, %v2669
        %v2675 = vld [vmem:[#allocation2] sm:$0xff]
        %v2676 = vld [vmem:[#allocation2 + $0x10] sm:$0xff]
        %v2677 = vld [vmem:[#allocation2 + $0x20] sm:$0xff]
        %v2678 = vld [vmem:[#allocation2 + $0x30] sm:$0xff]
        %v2679 = vld [vmem:[#allocation2 + $0x40] sm:$0xff]
        %v2680 = vld [vmem:[#allocation2 + $0x50] sm:$0xff]
        %v2681 = vld [vmem:[#allocation2 + $0x60] sm:$0xff]
        %v2682 = vld [vmem:[#allocation2 + $0x70] sm:$0xff]
        %v2683 = vld [vmem:[#allocation2 + $0x80] sm:$0xff]
        %v2684 = vld [vmem:[#allocation2 + $0x90] sm:$0xff]
        %v2685 = vld [vmem:[#allocation2 + $0xa0] sm:$0xff]
        %v2686 = vld [vmem:[#allocation2 + $0xb0] sm:$0xff]
        %v2687 = vld [vmem:[#allocation2 + $0xc0] sm:$0xff]
        %v2688 = vld [vmem:[#allocation2 + $0xd0] sm:$0xff]
        %v2689 = vld [vmem:[#allocation2 + $0xe0] sm:$0xff]
        %v2690 = vld [vmem:[#allocation2 + $0xf0] sm:$0xff]
        %2692 = vset.pattern.permute.xlu0 0
        %2693 = vperm.xlu0 %2692, %v2128
        %v2694 = vpop.permute.xlu0 %2693
        %v2712 = vunpack.c.l.b16 %v2675
        %v2713 = vunpack.c.h.b16 %v2675
        %v2714 = vunpack.c.l.b16 %v2676
        %v2715 = vunpack.c.h.b16 %v2676
        %v2716 = vunpack.c.l.b16 %v2677
        %v2717 = vunpack.c.h.b16 %v2677
        %v2718 = vunpack.c.l.b16 %v2678
        %v2719 = vunpack.c.h.b16 %v2678
        %v2720 = vunpack.c.l.b16 %v2679
        %v2721 = vunpack.c.h.b16 %v2679
        %v2722 = vunpack.c.l.b16 %v2680
        %v2723 = vunpack.c.h.b16 %v2680
        %v2724 = vunpack.c.l.b16 %v2681
        %v2725 = vunpack.c.h.b16 %v2681
        %v2726 = vunpack.c.l.b16 %v2682
        %v2727 = vunpack.c.h.b16 %v2682
        %v2728 = vunpack.c.l.b16 %v2683
        %v2729 = vunpack.c.h.b16 %v2683
        %v2730 = vunpack.c.l.b16 %v2684
        %v2731 = vunpack.c.h.b16 %v2684
        %v2732 = vunpack.c.l.b16 %v2685
        %v2733 = vunpack.c.h.b16 %v2685
        %v2734 = vunpack.c.l.b16 %v2686
        %v2735 = vunpack.c.h.b16 %v2686
        %v2736 = vunpack.c.l.b16 %v2687
        %v2737 = vunpack.c.h.b16 %v2687
        %v2738 = vunpack.c.l.b16 %v2688
        %v2739 = vunpack.c.h.b16 %v2688
        %v2740 = vunpack.c.l.b16 %v2689
        %v2741 = vunpack.c.h.b16 %v2689
        %v2742 = vunpack.c.l.b16 %v2690
        %v2743 = vunpack.c.h.b16 %v2690
        %v2744 = vpack.c.b16 %v2714, %v2712
        %v2745 = vpack.c.b16 %v2715, %v2713
        %v2746 = vpack.c.b16 %v2718, %v2716
        %v2747 = vpack.c.b16 %v2719, %v2717
        %v2748 = vpack.c.b16 %v2722, %v2720
        %v2749 = vpack.c.b16 %v2723, %v2721
        %v2750 = vpack.c.b16 %v2726, %v2724
        %v2751 = vpack.c.b16 %v2727, %v2725
        %v2752 = vpack.c.b16 %v2730, %v2728
        %v2753 = vpack.c.b16 %v2731, %v2729
        %v2754 = vpack.c.b16 %v2734, %v2732
        %v2755 = vpack.c.b16 %v2735, %v2733
        %v2756 = vpack.c.b16 %v2738, %v2736
        %v2757 = vpack.c.b16 %v2739, %v2737
        %v2758 = vpack.c.b16 %v2742, %v2740
        %v2759 = vpack.c.b16 %v2743, %v2741
        %2776 = vmatprep.subr.bf16.mxu0 %v2759
        %2777 = vmatpush1.bf16.msra.mxu0 %v2758
        %2778 = vmatprep.subr.bf16.mxu0 %v2757
        %2779 = vmatpush1.bf16.msra.mxu0 %v2756
        %2780 = vmatprep.subr.bf16.mxu0 %v2755
        %2781 = vmatpush1.bf16.msra.mxu0 %v2754
        %2782 = vmatprep.subr.bf16.mxu0 %v2753
        %2783 = vmatpush1.bf16.msra.mxu0 %v2752
        %2784 = vmatprep.subr.bf16.mxu0 %v2751
        %2785 = vmatpush1.bf16.msra.mxu0 %v2750
        %2786 = vmatprep.subr.bf16.mxu0 %v2749
        %2787 = vmatpush1.bf16.msra.mxu0 %v2748
        %2788 = vmatprep.subr.bf16.mxu0 %v2747
        %2789 = vmatpush1.bf16.msra.mxu0 %v2746
        %2790 = vmatprep.subr.bf16.mxu0 %v2745
        %2791 = vmatpush1.bf16.msra.mxu0 %v2744
        %2792 = vmatprep.subr.bf16.mxu0 0
        %2793 = vmatpush2.bf16.msra.mxu0 0
        %2794 = vmatprep.subr.bf16.mxu0 0
        %2795 = vmatpush2.bf16.msra.mxu0 0
        %2796 = vmatprep.subr.bf16.mxu0 0
        %2797 = vmatpush2.bf16.msra.mxu0 0
        %2798 = vmatprep.subr.bf16.mxu0 0
        %2799 = vmatpush2.bf16.msra.mxu0 0
        %2800 = vmatprep.subr.bf16.mxu0 0
        %2801 = vmatpush2.bf16.msra.mxu0 0
        %2802 = vmatprep.subr.bf16.mxu0 0
        %2803 = vmatpush2.bf16.msra.mxu0 0
        %2804 = vmatprep.subr.bf16.mxu0 0
        %2805 = vmatpush2.bf16.msra.mxu0 0
        %2806 = vmatprep.subr.bf16.mxu0 0
        %2807 = vmatpush2.bf16.msra.mxu0 0
        %2808 = vmatprep.mubr.bf16.mxu0 0
        %2809 = vmatmul.mubr.bf16.gmra.mxu0 %v2674
        %v2810 = vpop.f32.mrf.mxu0
        %v2811 = vadd.f32 %v2694, %v2810
        %v2812 = vpop.f32.mrf.mxu0
        %v2813 = vadd.f32 %v2694, %v2812
        %v2814 = vpop.f32.mrf.mxu0
        %v2815 = vpop.f32.mrf.mxu0
        %2816 = vdwg.mxu0
        %v2819 = vcombine.low %v2811, %v2813
        %2821 = vst [vmem:[%s218] sm:$0xff] %v2819
        %s2822 = scalar_lea.vmem [#allocation3], 16
        %v2823 = vld [vmem:[%s2822] sm:$0xff]
        %v2824 = vld [vmem:[%s2822 + $0x8] sm:$0xff]
        %v2825 = vld [vmem:[%s2822 + $0x20] sm:$0xff]
        %v2826 = vld [vmem:[%s2822 + $0x28] sm:$0xff]
        %v2827 = vld [vmem:[%s2822 + $0x40] sm:$0xff]
        %v2828 = vld [vmem:[%s2822 + $0x48] sm:$0xff]
        %v2829 = vld [vmem:[%s2822 + $0x60] sm:$0xff]
        %v2830 = vld [vmem:[%s2822 + $0x68] sm:$0xff]
        %v2831 = vld [vmem:[%s2822 + $0x80] sm:$0xff]
        %v2832 = vld [vmem:[%s2822 + $0x88] sm:$0xff]
        %v2833 = vld [vmem:[%s2822 + $0xa0] sm:$0xff]
        %v2834 = vld [vmem:[%s2822 + $0xa8] sm:$0xff]
        %v2835 = vld [vmem:[%s2822 + $0xc0] sm:$0xff]
        %v2836 = vld [vmem:[%s2822 + $0xc8] sm:$0xff]
        %v2837 = vld [vmem:[%s2822 + $0xe0] sm:$0xff]
        %v2838 = vld [vmem:[%s2822 + $0xe8] sm:$0xff]
        %v2839 = vld [vmem:[%s2822 + $0x100] sm:$0xff]
        %v2840 = vld [vmem:[%s2822 + $0x108] sm:$0xff]
        %v2841 = vld [vmem:[%s2822 + $0x120] sm:$0xff]
        %v2842 = vld [vmem:[%s2822 + $0x128] sm:$0xff]
        %v2843 = vld [vmem:[%s2822 + $0x140] sm:$0xff]
        %v2844 = vld [vmem:[%s2822 + $0x148] sm:$0xff]
        %v2845 = vld [vmem:[%s2822 + $0x160] sm:$0xff]
        %v2846 = vld [vmem:[%s2822 + $0x168] sm:$0xff]
        %v2847 = vld [vmem:[%s2822 + $0x180] sm:$0xff]
        %v2848 = vld [vmem:[%s2822 + $0x188] sm:$0xff]
        %v2849 = vld [vmem:[%s2822 + $0x1a0] sm:$0xff]
        %v2850 = vld [vmem:[%s2822 + $0x1a8] sm:$0xff]
        %v2851 = vld [vmem:[%s2822 + $0x1c0] sm:$0xff]
        %v2852 = vld [vmem:[%s2822 + $0x1c8] sm:$0xff]
        %v2853 = vld [vmem:[%s2822 + $0x1e0] sm:$0xff]
        %v2854 = vld [vmem:[%s2822 + $0x1e8] sm:$0xff]
        %v2855 = vmax.f32 %v2823, %v2824
        %2856 = vmax.xlane.f32.xlu0 %v2855
        %v2857 = vpop.xlane.xlu0 %2856
        %v2858 = vmax.f32 %v2825, %v2826
        %2859 = vmax.xlane.f32.xlu0 %v2858
        %v2860 = vpop.xlane.xlu0 %2859
        %v2861 = vmax.f32 %v2827, %v2828
        %2862 = vmax.xlane.f32.xlu0 %v2861
        %v2863 = vpop.xlane.xlu0 %2862
        %v2864 = vmax.f32 %v2829, %v2830
        %2865 = vmax.xlane.f32.xlu0 %v2864
        %v2866 = vpop.xlane.xlu0 %2865
        %v2867 = vmax.f32 %v2831, %v2832
        %2868 = vmax.xlane.f32.xlu0 %v2867
        %v2869 = vpop.xlane.xlu0 %2868
        %v2870 = vmax.f32 %v2833, %v2834
        %2871 = vmax.xlane.f32.xlu0 %v2870
        %v2872 = vpop.xlane.xlu0 %2871
        %v2873 = vmax.f32 %v2835, %v2836
        %2874 = vmax.xlane.f32.xlu0 %v2873
        %v2875 = vpop.xlane.xlu0 %2874
        %v2876 = vmax.f32 %v2837, %v2838
        %2877 = vmax.xlane.f32.xlu0 %v2876
        %v2878 = vpop.xlane.xlu0 %2877
        %v2879 = vmax.f32 %v2839, %v2840
        %2880 = vmax.xlane.f32.xlu0 %v2879
        %v2881 = vpop.xlane.xlu0 %2880
        %v2882 = vmax.f32 %v2841, %v2842
        %2883 = vmax.xlane.f32.xlu0 %v2882
        %v2884 = vpop.xlane.xlu0 %2883
        %v2885 = vmax.f32 %v2843, %v2844
        %2886 = vmax.xlane.f32.xlu0 %v2885
        %v2887 = vpop.xlane.xlu0 %2886
        %v2888 = vmax.f32 %v2845, %v2846
        %2889 = vmax.xlane.f32.xlu0 %v2888
        %v2890 = vpop.xlane.xlu0 %2889
        %v2891 = vmax.f32 %v2847, %v2848
        %2892 = vmax.xlane.f32.xlu0 %v2891
        %v2893 = vpop.xlane.xlu0 %2892
        %v2894 = vmax.f32 %v2849, %v2850
        %2895 = vmax.xlane.f32.xlu0 %v2894
        %v2896 = vpop.xlane.xlu0 %2895
        %v2897 = vmax.f32 %v2851, %v2852
        %2898 = vmax.xlane.f32.xlu0 %v2897
        %v2899 = vpop.xlane.xlu0 %2898
        %v2900 = vmax.f32 %v2853, %v2854
        %2901 = vmax.xlane.f32.xlu0 %v2900
        %v2902 = vpop.xlane.xlu0 %2901
        %v2903 = vsub.f32 %v2823, %v2857
        %v2904 = vsub.f32 %v2824, %v2857
        %v2905 = vsub.f32 %v2825, %v2860
        %v2906 = vsub.f32 %v2826, %v2860
        %v2907 = vsub.f32 %v2827, %v2863
        %v2908 = vsub.f32 %v2828, %v2863
        %v2909 = vsub.f32 %v2829, %v2866
        %v2910 = vsub.f32 %v2830, %v2866
        %v2911 = vsub.f32 %v2831, %v2869
        %v2912 = vsub.f32 %v2832, %v2869
        %v2913 = vsub.f32 %v2833, %v2872
        %v2914 = vsub.f32 %v2834, %v2872
        %v2915 = vsub.f32 %v2835, %v2875
        %v2916 = vsub.f32 %v2836, %v2875
        %v2917 = vsub.f32 %v2837, %v2878
        %v2918 = vsub.f32 %v2838, %v2878
        %v2919 = vsub.f32 %v2839, %v2881
        %v2920 = vsub.f32 %v2840, %v2881
        %v2921 = vsub.f32 %v2841, %v2884
        %v2922 = vsub.f32 %v2842, %v2884
        %v2923 = vsub.f32 %v2843, %v2887
        %v2924 = vsub.f32 %v2844, %v2887
        %v2925 = vsub.f32 %v2845, %v2890
        %v2926 = vsub.f32 %v2846, %v2890
        %v2927 = vsub.f32 %v2847, %v2893
        %v2928 = vsub.f32 %v2848, %v2893
        %v2929 = vsub.f32 %v2849, %v2896
        %v2930 = vsub.f32 %v2850, %v2896
        %v2931 = vsub.f32 %v2851, %v2899
        %v2932 = vsub.f32 %v2852, %v2899
        %v2933 = vsub.f32 %v2853, %v2902
        %v2934 = vsub.f32 %v2854, %v2902
        %v2935 = vmul.f32 %v2903, 1.442695
        %v2936 = vpow.pop %v2935
        %v2937 = vmul.f32 %v2904, 1.442695
        %v2938 = vpow.pop %v2937
        %v2939 = vmul.f32 %v2905, 1.442695
        %v2940 = vpow.pop %v2939
        %v2941 = vmul.f32 %v2906, 1.442695
        %v2942 = vpow.pop %v2941
        %v2943 = vmul.f32 %v2907, 1.442695
        %v2944 = vpow.pop %v2943
        %v2945 = vmul.f32 %v2908, 1.442695
        %v2946 = vpow.pop %v2945
        %v2947 = vmul.f32 %v2909, 1.442695
        %v2948 = vpow.pop %v2947
        %v2949 = vmul.f32 %v2910, 1.442695
        %v2950 = vpow.pop %v2949
        %v2951 = vmul.f32 %v2911, 1.442695
        %v2952 = vpow.pop %v2951
        %v2953 = vmul.f32 %v2912, 1.442695
        %v2954 = vpow.pop %v2953
        %v2955 = vmul.f32 %v2913, 1.442695
        %v2956 = vpow.pop %v2955
        %v2957 = vmul.f32 %v2914, 1.442695
        %v2958 = vpow.pop %v2957
        %v2959 = vmul.f32 %v2915, 1.442695
        %v2960 = vpow.pop %v2959
        %v2961 = vmul.f32 %v2916, 1.442695
        %v2962 = vpow.pop %v2961
        %v2963 = vmul.f32 %v2917, 1.442695
        %v2964 = vpow.pop %v2963
        %v2965 = vmul.f32 %v2918, 1.442695
        %v2966 = vpow.pop %v2965
        %v2967 = vmul.f32 %v2919, 1.442695
        %v2968 = vpow.pop %v2967
        %v2969 = vmul.f32 %v2920, 1.442695
        %v2970 = vpow.pop %v2969
        %v2971 = vmul.f32 %v2921, 1.442695
        %v2972 = vpow.pop %v2971
        %v2973 = vmul.f32 %v2922, 1.442695
        %v2974 = vpow.pop %v2973
        %v2975 = vmul.f32 %v2923, 1.442695
        %v2976 = vpow.pop %v2975
        %v2977 = vmul.f32 %v2924, 1.442695
        %v2978 = vpow.pop %v2977
        %v2979 = vmul.f32 %v2925, 1.442695
        %v2980 = vpow.pop %v2979
        %v2981 = vmul.f32 %v2926, 1.442695
        %v2982 = vpow.pop %v2981
        %v2983 = vmul.f32 %v2927, 1.442695
        %v2984 = vpow.pop %v2983
        %v2985 = vmul.f32 %v2928, 1.442695
        %v2986 = vpow.pop %v2985
        %v2987 = vmul.f32 %v2929, 1.442695
        %v2988 = vpow.pop %v2987
        %v2989 = vmul.f32 %v2930, 1.442695
        %v2990 = vpow.pop %v2989
        %v2991 = vmul.f32 %v2931, 1.442695
        %v2992 = vpow.pop %v2991
        %v2993 = vmul.f32 %v2932, 1.442695
        %v2994 = vpow.pop %v2993
        %v2995 = vmul.f32 %v2933, 1.442695
        %v2996 = vpow.pop %v2995
        %v2997 = vmul.f32 %v2934, 1.442695
        %v2998 = vpow.pop %v2997
        %v2999 = vadd.f32 %v2936, %v2938
        %3000 = vadd.xlane.f32.xlu0 %v2999
        %v3001 = vpop.xlane.xlu0 %3000
        %v3002 = vadd.f32 %v2940, %v2942
        %3003 = vadd.xlane.f32.xlu0 %v3002
        %v3004 = vpop.xlane.xlu0 %3003
        %v3005 = vadd.f32 %v2944, %v2946
        %3006 = vadd.xlane.f32.xlu0 %v3005
        %v3007 = vpop.xlane.xlu0 %3006
        %v3008 = vadd.f32 %v2948, %v2950
        %3009 = vadd.xlane.f32.xlu0 %v3008
        %v3010 = vpop.xlane.xlu0 %3009
        %v3011 = vadd.f32 %v2952, %v2954
        %3012 = vadd.xlane.f32.xlu0 %v3011
        %v3013 = vpop.xlane.xlu0 %3012
        %v3014 = vadd.f32 %v2956, %v2958
        %3015 = vadd.xlane.f32.xlu0 %v3014
        %v3016 = vpop.xlane.xlu0 %3015
        %v3017 = vadd.f32 %v2960, %v2962
        %3018 = vadd.xlane.f32.xlu0 %v3017
        %v3019 = vpop.xlane.xlu0 %3018
        %v3020 = vadd.f32 %v2964, %v2966
        %3021 = vadd.xlane.f32.xlu0 %v3020
        %v3022 = vpop.xlane.xlu0 %3021
        %v3023 = vadd.f32 %v2968, %v2970
        %3024 = vadd.xlane.f32.xlu0 %v3023
        %v3025 = vpop.xlane.xlu0 %3024
        %v3026 = vadd.f32 %v2972, %v2974
        %3027 = vadd.xlane.f32.xlu0 %v3026
        %v3028 = vpop.xlane.xlu0 %3027
        %v3029 = vadd.f32 %v2976, %v2978
        %3030 = vadd.xlane.f32.xlu0 %v3029
        %v3031 = vpop.xlane.xlu0 %3030
        %v3032 = vadd.f32 %v2980, %v2982
        %3033 = vadd.xlane.f32.xlu0 %v3032
        %v3034 = vpop.xlane.xlu0 %3033
        %v3035 = vadd.f32 %v2984, %v2986
        %3036 = vadd.xlane.f32.xlu0 %v3035
        %v3037 = vpop.xlane.xlu0 %3036
        %v3038 = vadd.f32 %v2988, %v2990
        %3039 = vadd.xlane.f32.xlu0 %v3038
        %v3040 = vpop.xlane.xlu0 %3039
        %v3041 = vadd.f32 %v2992, %v2994
        %3042 = vadd.xlane.f32.xlu0 %v3041
        %v3043 = vpop.xlane.xlu0 %3042
        %v3044 = vadd.f32 %v2996, %v2998
        %3045 = vadd.xlane.f32.xlu0 %v3044
        %v3046 = vpop.xlane.xlu0 %3045
        %v3047 = vrcp.pop %v3001
        %v3048 = vrcp.pop %v3004
        %v3049 = vrcp.pop %v3007
        %v3050 = vrcp.pop %v3010
        %v3051 = vrcp.pop %v3013
        %v3052 = vrcp.pop %v3016
        %v3053 = vrcp.pop %v3019
        %v3054 = vrcp.pop %v3022
        %v3055 = vrcp.pop %v3025
        %v3056 = vrcp.pop %v3028
        %v3057 = vrcp.pop %v3031
        %v3058 = vrcp.pop %v3034
        %v3059 = vrcp.pop %v3037
        %v3060 = vrcp.pop %v3040
        %v3061 = vrcp.pop %v3043
        %v3062 = vrcp.pop %v3046
        %v3063 = vmul.f32 %v2936, %v3047
        %v3064 = vmul.f32 %v2938, %v3047
        %v3065 = vmul.f32 %v2940, %v3048
        %v3066 = vmul.f32 %v2942, %v3048
        %v3067 = vmul.f32 %v2944, %v3049
        %v3068 = vmul.f32 %v2946, %v3049
        %v3069 = vmul.f32 %v2948, %v3050
        %v3070 = vmul.f32 %v2950, %v3050
        %v3071 = vmul.f32 %v2952, %v3051
        %v3072 = vmul.f32 %v2954, %v3051
        %v3073 = vmul.f32 %v2956, %v3052
        %v3074 = vmul.f32 %v2958, %v3052
        %v3075 = vmul.f32 %v2960, %v3053
        %v3076 = vmul.f32 %v2962, %v3053
        %v3077 = vmul.f32 %v2964, %v3054
        %v3078 = vmul.f32 %v2966, %v3054
        %v3079 = vmul.f32 %v2968, %v3055
        %v3080 = vmul.f32 %v2970, %v3055
        %v3081 = vmul.f32 %v2972, %v3056
        %v3082 = vmul.f32 %v2974, %v3056
        %v3083 = vmul.f32 %v2976, %v3057
        %v3084 = vmul.f32 %v2978, %v3057
        %v3085 = vmul.f32 %v2980, %v3058
        %v3086 = vmul.f32 %v2982, %v3058
        %v3087 = vmul.f32 %v2984, %v3059
        %v3088 = vmul.f32 %v2986, %v3059
        %v3089 = vmul.f32 %v2988, %v3060
        %v3090 = vmul.f32 %v2990, %v3060
        %v3091 = vmul.f32 %v2992, %v3061
        %v3092 = vmul.f32 %v2994, %v3061
        %v3093 = vmul.f32 %v2996, %v3062
        %v3094 = vmul.f32 %v2998, %v3062
        %v3095 = vpack.c.bf16 %v3065, %v3063
        %v3096 = vpack.c.bf16 %v3066, %v3064
        %v3097 = vpack.c.bf16 %v3069, %v3067
        %v3098 = vpack.c.bf16 %v3070, %v3068
        %v3099 = vpack.c.bf16 %v3073, %v3071
        %v3100 = vpack.c.bf16 %v3074, %v3072
        %v3101 = vpack.c.bf16 %v3077, %v3075
        %v3102 = vpack.c.bf16 %v3078, %v3076
        %v3103 = vpack.c.bf16 %v3081, %v3079
        %v3104 = vpack.c.bf16 %v3082, %v3080
        %v3105 = vpack.c.bf16 %v3085, %v3083
        %v3106 = vpack.c.bf16 %v3086, %v3084
        %v3107 = vpack.c.bf16 %v3089, %v3087
        %v3108 = vpack.c.bf16 %v3090, %v3088
        %v3109 = vpack.c.bf16 %v3093, %v3091
        %v3110 = vpack.c.bf16 %v3094, %v3092
        %s3111 = scalar_lea.vmem [#allocation4], 8
        %v3112 = vld [vmem:[%s3111] sm:$0xff]
        %v3113 = vld [vmem:[%s3111 + $0x10] sm:$0xff]
        %v3114 = vld [vmem:[%s3111 + $0x20] sm:$0xff]
        %v3115 = vld [vmem:[%s3111 + $0x30] sm:$0xff]
        %v3116 = vld [vmem:[%s3111 + $0x40] sm:$0xff]
        %v3117 = vld [vmem:[%s3111 + $0x50] sm:$0xff]
        %v3118 = vld [vmem:[%s3111 + $0x60] sm:$0xff]
        %v3119 = vld [vmem:[%s3111 + $0x70] sm:$0xff]
        %v3120 = vld [vmem:[%s3111 + $0x80] sm:$0xff]
        %v3121 = vld [vmem:[%s3111 + $0x90] sm:$0xff]
        %v3122 = vld [vmem:[%s3111 + $0xa0] sm:$0xff]
        %v3123 = vld [vmem:[%s3111 + $0xb0] sm:$0xff]
        %v3124 = vld [vmem:[%s3111 + $0xc0] sm:$0xff]
        %v3125 = vld [vmem:[%s3111 + $0xd0] sm:$0xff]
        %v3126 = vld [vmem:[%s3111 + $0xe0] sm:$0xff]
        %v3127 = vld [vmem:[%s3111 + $0xf0] sm:$0xff]
        %v3144 = vunpack.c.l.b16 %v3112
        %v3145 = vunpack.c.h.b16 %v3112
        %v3146 = vunpack.c.l.b16 %v3113
        %v3147 = vunpack.c.h.b16 %v3113
        %v3148 = vunpack.c.l.b16 %v3114
        %v3149 = vunpack.c.h.b16 %v3114
        %v3150 = vunpack.c.l.b16 %v3115
        %v3151 = vunpack.c.h.b16 %v3115
        %v3152 = vunpack.c.l.b16 %v3116
        %v3153 = vunpack.c.h.b16 %v3116
        %v3154 = vunpack.c.l.b16 %v3117
        %v3155 = vunpack.c.h.b16 %v3117
        %v3156 = vunpack.c.l.b16 %v3118
        %v3157 = vunpack.c.h.b16 %v3118
        %v3158 = vunpack.c.l.b16 %v3119
        %v3159 = vunpack.c.h.b16 %v3119
        %v3160 = vunpack.c.l.b16 %v3120
        %v3161 = vunpack.c.h.b16 %v3120
        %v3162 = vunpack.c.l.b16 %v3121
        %v3163 = vunpack.c.h.b16 %v3121
        %v3164 = vunpack.c.l.b16 %v3122
        %v3165 = vunpack.c.h.b16 %v3122
        %v3166 = vunpack.c.l.b16 %v3123
        %v3167 = vunpack.c.h.b16 %v3123
        %v3168 = vunpack.c.l.b16 %v3124
        %v3169 = vunpack.c.h.b16 %v3124
        %v3170 = vunpack.c.l.b16 %v3125
        %v3171 = vunpack.c.h.b16 %v3125
        %v3172 = vunpack.c.l.b16 %v3126
        %v3173 = vunpack.c.h.b16 %v3126
        %v3174 = vunpack.c.l.b16 %v3127
        %v3175 = vunpack.c.h.b16 %v3127
        %v3176 = vpack.c.b16 %v3146, %v3144
        %v3177 = vpack.c.b16 %v3147, %v3145
        %v3178 = vpack.c.b16 %v3150, %v3148
        %v3179 = vpack.c.b16 %v3151, %v3149
        %v3180 = vpack.c.b16 %v3154, %v3152
        %v3181 = vpack.c.b16 %v3155, %v3153
        %v3182 = vpack.c.b16 %v3158, %v3156
        %v3183 = vpack.c.b16 %v3159, %v3157
        %v3184 = vpack.c.b16 %v3162, %v3160
        %v3185 = vpack.c.b16 %v3163, %v3161
        %v3186 = vpack.c.b16 %v3166, %v3164
        %v3187 = vpack.c.b16 %v3167, %v3165
        %v3188 = vpack.c.b16 %v3170, %v3168
        %v3189 = vpack.c.b16 %v3171, %v3169
        %v3190 = vpack.c.b16 %v3174, %v3172
        %v3191 = vpack.c.b16 %v3175, %v3173
        %3208 = vmatprep.subr.bf16.mxu0 %v3191
        %3209 = vmatpush1.bf16.xpose.msra.mxu0 %v3190
        %3210 = vmatprep.subr.bf16.mxu0 %v3189
        %3211 = vmatpush1.bf16.xpose.msra.mxu0 %v3188
        %3212 = vmatprep.subr.bf16.mxu0 %v3187
        %3213 = vmatpush1.bf16.xpose.msra.mxu0 %v3186
        %3214 = vmatprep.subr.bf16.mxu0 %v3185
        %3215 = vmatpush1.bf16.xpose.msra.mxu0 %v3184
        %3216 = vmatprep.subr.bf16.mxu0 %v3183
        %3217 = vmatpush1.bf16.xpose.msra.mxu0 %v3182
        %3218 = vmatprep.subr.bf16.mxu0 %v3181
        %3219 = vmatpush1.bf16.xpose.msra.mxu0 %v3180
        %3220 = vmatprep.subr.bf16.mxu0 %v3179
        %3221 = vmatpush1.bf16.xpose.msra.mxu0 %v3178
        %3222 = vmatprep.subr.bf16.mxu0 %v3177
        %3223 = vmatpush1.bf16.xpose.msra.mxu0 %v3176
        %3224 = vmatprep.subr.bf16.mxu0 0
        %3225 = vmatpush2.bf16.xpose.msra.mxu0 0
        %3226 = vmatprep.subr.bf16.mxu0 0
        %3227 = vmatpush2.bf16.xpose.msra.mxu0 0
        %3228 = vmatprep.subr.bf16.mxu0 0
        %3229 = vmatpush2.bf16.xpose.msra.mxu0 0
        %3230 = vmatprep.subr.bf16.mxu0 0
        %3231 = vmatpush2.bf16.xpose.msra.mxu0 0
        %3232 = vmatprep.subr.bf16.mxu0 0
        %3233 = vmatpush2.bf16.xpose.msra.mxu0 0
        %3234 = vmatprep.subr.bf16.mxu0 0
        %3235 = vmatpush2.bf16.xpose.msra.mxu0 0
        %3236 = vmatprep.subr.bf16.mxu0 0
        %3237 = vmatpush2.bf16.xpose.msra.mxu0 0
        %3238 = vmatprep.subr.bf16.mxu0 0
        %3239 = vmatpush2.bf16.xpose.msra.mxu0 0
        %3240 = vmatprep.mubr.bf16.mxu0 %v3096
        %3241 = vmatmul.mubr.bf16.gmra.mxu0 %v3095
        %v3242 = vpop.f32.mrf.mxu0
        %v3243 = vadd.f32 0.0, %v3242
        %v3244 = vpop.f32.mrf.mxu0
        %v3245 = vpop.f32.mrf.mxu0
        %v3246 = vadd.f32 0.0, %v3245
        %v3247 = vpop.f32.mrf.mxu0
        %3248 = vmatprep.mubr.bf16.mxu0 %v3098
        %3249 = vmatmul.mubr.bf16.gmra.mxu0 %v3097
        %v3250 = vpop.f32.mrf.mxu0
        %v3251 = vadd.f32 0.0, %v3250
        %v3252 = vpop.f32.mrf.mxu0
        %v3253 = vpop.f32.mrf.mxu0
        %v3254 = vadd.f32 0.0, %v3253
        %v3255 = vpop.f32.mrf.mxu0
        %3256 = vmatprep.mubr.bf16.mxu0 %v3100
        %3257 = vmatmul.mubr.bf16.gmra.mxu0 %v3099
        %v3258 = vpop.f32.mrf.mxu0
        %v3259 = vadd.f32 0.0, %v3258
        %v3260 = vpop.f32.mrf.mxu0
        %v3261 = vpop.f32.mrf.mxu0
        %v3262 = vadd.f32 0.0, %v3261
        %v3263 = vpop.f32.mrf.mxu0
        %3264 = vmatprep.mubr.bf16.mxu0 %v3102
        %3265 = vmatmul.mubr.bf16.gmra.mxu0 %v3101
        %v3266 = vpop.f32.mrf.mxu0
        %v3267 = vadd.f32 0.0, %v3266
        %v3268 = vpop.f32.mrf.mxu0
        %v3269 = vpop.f32.mrf.mxu0
        %v3270 = vadd.f32 0.0, %v3269
        %v3271 = vpop.f32.mrf.mxu0
        %3272 = vmatprep.mubr.bf16.mxu0 %v3104
        %3273 = vmatmul.mubr.bf16.gmra.mxu0 %v3103
        %v3274 = vpop.f32.mrf.mxu0
        %v3275 = vadd.f32 0.0, %v3274
        %v3276 = vpop.f32.mrf.mxu0
        %v3277 = vpop.f32.mrf.mxu0
        %v3278 = vadd.f32 0.0, %v3277
        %v3279 = vpop.f32.mrf.mxu0
        %3280 = vmatprep.mubr.bf16.mxu0 %v3106
        %3281 = vmatmul.mubr.bf16.gmra.mxu0 %v3105
        %v3282 = vpop.f32.mrf.mxu0
        %v3283 = vadd.f32 0.0, %v3282
        %v3284 = vpop.f32.mrf.mxu0
        %v3285 = vpop.f32.mrf.mxu0
        %v3286 = vadd.f32 0.0, %v3285
        %v3287 = vpop.f32.mrf.mxu0
        %3288 = vmatprep.mubr.bf16.mxu0 %v3108
        %3289 = vmatmul.mubr.bf16.gmra.mxu0 %v3107
        %v3290 = vpop.f32.mrf.mxu0
        %v3291 = vadd.f32 0.0, %v3290
        %v3292 = vpop.f32.mrf.mxu0
        %v3293 = vpop.f32.mrf.mxu0
        %v3294 = vadd.f32 0.0, %v3293
        %v3295 = vpop.f32.mrf.mxu0
        %3296 = vmatprep.mubr.bf16.mxu0 %v3110
        %3297 = vmatmul.mubr.bf16.gmra.mxu0 %v3109
        %v3298 = vpop.f32.mrf.mxu0
        %v3299 = vadd.f32 0.0, %v3298
        %v3300 = vpop.f32.mrf.mxu0
        %v3301 = vpop.f32.mrf.mxu0
        %v3302 = vadd.f32 0.0, %v3301
        %v3303 = vpop.f32.mrf.mxu0
        %3304 = vdwg.mxu0
        %v3305 = vmul.f32 %v3243, %v2112
        %v3306 = vmul.f32 %v3246, %v2113
        %v3307 = vmul.f32 %v3251, %v2114
        %v3308 = vmul.f32 %v3254, %v2115
        %v3309 = vmul.f32 %v3259, %v2116
        %v3310 = vmul.f32 %v3262, %v2117
        %v3311 = vmul.f32 %v3267, %v2118
        %v3312 = vmul.f32 %v3270, %v2119
        %v3313 = vmul.f32 %v3275, %v2120
        %v3314 = vmul.f32 %v3278, %v2121
        %v3315 = vmul.f32 %v3283, %v2122
        %v3316 = vmul.f32 %v3286, %v2123
        %v3317 = vmul.f32 %v3291, %v2124
        %v3318 = vmul.f32 %v3294, %v2125
        %v3319 = vmul.f32 %v3299, %v2126
        %v3320 = vmul.f32 %v3302, %v2127
        %v3321 = vpack.c.bf16 %v3306, %v3305
        %v3322 = vpack.c.bf16 %v3308, %v3307
        %v3323 = vpack.c.bf16 %v3310, %v3309
        %v3324 = vpack.c.bf16 %v3312, %v3311
        %v3325 = vpack.c.bf16 %v3314, %v3313
        %v3326 = vpack.c.bf16 %v3316, %v3315
        %v3327 = vpack.c.bf16 %v3318, %v3317
        %v3328 = vpack.c.bf16 %v3320, %v3319
        %3329 = vmatprep.subr.bf16.mxu0 0
        %3330 = vmatpush1.bf16.xpose.msra.mxu0 %v3328
        %3331 = vmatprep.subr.bf16.mxu0 0
        %3332 = vmatpush1.bf16.xpose.msra.mxu0 %v3327
        %3333 = vmatprep.subr.bf16.mxu0 0
        %3334 = vmatpush1.bf16.xpose.msra.mxu0 %v3326
        %3335 = vmatprep.subr.bf16.mxu0 0
        %3336 = vmatpush1.bf16.xpose.msra.mxu0 %v3325
        %3337 = vmatprep.subr.bf16.mxu0 0
        %3338 = vmatpush1.bf16.xpose.msra.mxu0 %v3324
        %3339 = vmatprep.subr.bf16.mxu0 0
        %3340 = vmatpush1.bf16.xpose.msra.mxu0 %v3323
        %3341 = vmatprep.subr.bf16.mxu0 0
        %3342 = vmatpush1.bf16.xpose.msra.mxu0 %v3322
        %3343 = vmatprep.subr.bf16.mxu0 0
        %3344 = vmatpush1.bf16.xpose.msra.mxu0 %v3321
        %3345 = vmatprep.subr.bf16.mxu0 0
        %3346 = vmatpush2.bf16.xpose.msra.mxu0 0
        %3347 = vmatprep.subr.bf16.mxu0 0
        %3348 = vmatpush2.bf16.xpose.msra.mxu0 0
        %3349 = vmatprep.subr.bf16.mxu0 0
        %3350 = vmatpush2.bf16.xpose.msra.mxu0 0
        %3351 = vmatprep.subr.bf16.mxu0 0
        %3352 = vmatpush2.bf16.xpose.msra.mxu0 0
        %3353 = vmatprep.subr.bf16.mxu0 0
        %3354 = vmatpush2.bf16.xpose.msra.mxu0 0
        %3355 = vmatprep.subr.bf16.mxu0 0
        %3356 = vmatpush2.bf16.xpose.msra.mxu0 0
        %3357 = vmatprep.subr.bf16.mxu0 0
        %3358 = vmatpush2.bf16.xpose.msra.mxu0 0
        %3359 = vmatprep.subr.bf16.mxu0 0
        %3360 = vmatpush2.bf16.xpose.msra.mxu0 0
        %3361 = vmatprep.mubr.bf16.mxu0 0
        %3362 = vmatmul.mubr.bf16.gmra.mxu0 %v2111
        %v3363 = vpop.f32.mrf.mxu0
        %v3364 = vadd.f32 0.0, %v3363
        %v3365 = vpop.f32.mrf.mxu0
        %v3366 = vpop.f32.mrf.mxu0
        %v3367 = vpop.f32.mrf.mxu0
        %3368 = vdwg.mxu0
        %v3369 = vpack.c.bf16 %v3364, %v3364
        %s3370 = scalar_lea.vmem [#allocation2], 8
        %v3371 = vld [vmem:[%s3370] sm:$0xff]
        %v3372 = vld [vmem:[%s3370 + $0x10] sm:$0xff]
        %v3373 = vld [vmem:[%s3370 + $0x20] sm:$0xff]
        %v3374 = vld [vmem:[%s3370 + $0x30] sm:$0xff]
        %v3375 = vld [vmem:[%s3370 + $0x40] sm:$0xff]
        %v3376 = vld [vmem:[%s3370 + $0x50] sm:$0xff]
        %v3377 = vld [vmem:[%s3370 + $0x60] sm:$0xff]
        %v3378 = vld [vmem:[%s3370 + $0x70] sm:$0xff]
        %v3379 = vld [vmem:[%s3370 + $0x80] sm:$0xff]
        %v3380 = vld [vmem:[%s3370 + $0x90] sm:$0xff]
        %v3381 = vld [vmem:[%s3370 + $0xa0] sm:$0xff]
        %v3382 = vld [vmem:[%s3370 + $0xb0] sm:$0xff]
        %v3383 = vld [vmem:[%s3370 + $0xc0] sm:$0xff]
        %v3384 = vld [vmem:[%s3370 + $0xd0] sm:$0xff]
        %v3385 = vld [vmem:[%s3370 + $0xe0] sm:$0xff]
        %v3386 = vld [vmem:[%s3370 + $0xf0] sm:$0xff]
        %v3403 = vunpack.c.l.b16 %v3371
        %v3404 = vunpack.c.h.b16 %v3371
        %v3405 = vunpack.c.l.b16 %v3372
        %v3406 = vunpack.c.h.b16 %v3372
        %v3407 = vunpack.c.l.b16 %v3373
        %v3408 = vunpack.c.h.b16 %v3373
        %v3409 = vunpack.c.l.b16 %v3374
        %v3410 = vunpack.c.h.b16 %v3374
        %v3411 = vunpack.c.l.b16 %v3375
        %v3412 = vunpack.c.h.b16 %v3375
        %v3413 = vunpack.c.l.b16 %v3376
        %v3414 = vunpack.c.h.b16 %v3376
        %v3415 = vunpack.c.l.b16 %v3377
        %v3416 = vunpack.c.h.b16 %v3377
        %v3417 = vunpack.c.l.b16 %v3378
        %v3418 = vunpack.c.h.b16 %v3378
        %v3419 = vunpack.c.l.b16 %v3379
        %v3420 = vunpack.c.h.b16 %v3379
        %v3421 = vunpack.c.l.b16 %v3380
        %v3422 = vunpack.c.h.b16 %v3380
        %v3423 = vunpack.c.l.b16 %v3381
        %v3424 = vunpack.c.h.b16 %v3381
        %v3425 = vunpack.c.l.b16 %v3382
        %v3426 = vunpack.c.h.b16 %v3382
        %v3427 = vunpack.c.l.b16 %v3383
        %v3428 = vunpack.c.h.b16 %v3383
        %v3429 = vunpack.c.l.b16 %v3384
        %v3430 = vunpack.c.h.b16 %v3384
        %v3431 = vunpack.c.l.b16 %v3385
        %v3432 = vunpack.c.h.b16 %v3385
        %v3433 = vunpack.c.l.b16 %v3386
        %v3434 = vunpack.c.h.b16 %v3386
        %v3435 = vpack.c.b16 %v3405, %v3403
        %v3436 = vpack.c.b16 %v3406, %v3404
        %v3437 = vpack.c.b16 %v3409, %v3407
        %v3438 = vpack.c.b16 %v3410, %v3408
        %v3439 = vpack.c.b16 %v3413, %v3411
        %v3440 = vpack.c.b16 %v3414, %v3412
        %v3441 = vpack.c.b16 %v3417, %v3415
        %v3442 = vpack.c.b16 %v3418, %v3416
        %v3443 = vpack.c.b16 %v3421, %v3419
        %v3444 = vpack.c.b16 %v3422, %v3420
        %v3445 = vpack.c.b16 %v3425, %v3423
        %v3446 = vpack.c.b16 %v3426, %v3424
        %v3447 = vpack.c.b16 %v3429, %v3427
        %v3448 = vpack.c.b16 %v3430, %v3428
        %v3449 = vpack.c.b16 %v3433, %v3431
        %v3450 = vpack.c.b16 %v3434, %v3432
        %3467 = vmatprep.subr.bf16.mxu0 %v3450
        %3468 = vmatpush1.bf16.msra.mxu0 %v3449
        %3469 = vmatprep.subr.bf16.mxu0 %v3448
        %3470 = vmatpush1.bf16.msra.mxu0 %v3447
        %3471 = vmatprep.subr.bf16.mxu0 %v3446
        %3472 = vmatpush1.bf16.msra.mxu0 %v3445
        %3473 = vmatprep.subr.bf16.mxu0 %v3444
        %3474 = vmatpush1.bf16.msra.mxu0 %v3443
        %3475 = vmatprep.subr.bf16.mxu0 %v3442
        %3476 = vmatpush1.bf16.msra.mxu0 %v3441
        %3477 = vmatprep.subr.bf16.mxu0 %v3440
        %3478 = vmatpush1.bf16.msra.mxu0 %v3439
        %3479 = vmatprep.subr.bf16.mxu0 %v3438
        %3480 = vmatpush1.bf16.msra.mxu0 %v3437
        %3481 = vmatprep.subr.bf16.mxu0 %v3436
        %3482 = vmatpush1.bf16.msra.mxu0 %v3435
        %3483 = vmatprep.subr.bf16.mxu0 0
        %3484 = vmatpush2.bf16.msra.mxu0 0
        %3485 = vmatprep.subr.bf16.mxu0 0
        %3486 = vmatpush2.bf16.msra.mxu0 0
        %3487 = vmatprep.subr.bf16.mxu0 0
        %3488 = vmatpush2.bf16.msra.mxu0 0
        %3489 = vmatprep.subr.bf16.mxu0 0
        %3490 = vmatpush2.bf16.msra.mxu0 0
        %3491 = vmatprep.subr.bf16.mxu0 0
        %3492 = vmatpush2.bf16.msra.mxu0 0
        %3493 = vmatprep.subr.bf16.mxu0 0
        %3494 = vmatpush2.bf16.msra.mxu0 0
        %3495 = vmatprep.subr.bf16.mxu0 0
        %3496 = vmatpush2.bf16.msra.mxu0 0
        %3497 = vmatprep.subr.bf16.mxu0 0
        %3498 = vmatpush2.bf16.msra.mxu0 0
        %3499 = vmatprep.mubr.bf16.mxu0 0
        %3500 = vmatmul.mubr.bf16.gmra.mxu0 %v3369
        %v3501 = vpop.f32.mrf.mxu0
        %v3502 = vadd.f32 %v2694, %v3501
        %v3503 = vpop.f32.mrf.mxu0
        %v3504 = vadd.f32 %v2694, %v3503
        %v3505 = vpop.f32.mrf.mxu0
        %v3506 = vpop.f32.mrf.mxu0
        %3507 = vdwg.mxu0
        %v3510 = vcombine.low %v3502, %v3504
        %s3512 = scalar_lea.vmem %s218, 8 [#allocation5]
        %3513 = vst [vmem:[%s3512] sm:$0xff] %v3510
        %s3514 = sand.u32 %s137, 1
        %s3515 = scalar_lea.sflag [#allocation6], %s3514
        %s3516 = sand.u32 %s137, 1
        %s3517 = smul.addr %s3516, 16
        %s3518 = scalar_lea.vmem [#allocation5], %s3517
        // Predicated region
        $region41: #{tpu_custom_call.1} parent=39 // pred_check
          %p3519 = pneg %p147
        $region42: #{tpu_custom_call.1} parent=39 // pred_check_branch
          %3521 = sbr.rel (%p3519) target = $region44
        $region43: #{tpu_custom_call.1} parent=39 // pred_region
          %s3522 = smul.u32 4, %s19
          %s3524 = ssub.s32 256, 256
          %3525 = vsyncadd %s3515, %s3524
          %s3526 = smul.addr %s3522, 64
          %s3527 = scalar_lea.hbm %s5, %s3526
          %s3529 = sshll.u32 %s3518, 4
          %s3530 = int_to_ptr.vmem [resolvable:$true] %s3529
          %3532 = dma.vmem_to_hbm [thread:$0]  %s3530, 256, %s3527, %s3515
        $region44: #{tpu_custom_call.1} parent=39 // pred_fallthru
          _
      $region40: #{tpu_custom_call.1} parent=5 // pred_fallthru
        _
      %p3533 = scmp.le.s32.totalorder 2, %s14
      // Predicated region
      $region45: #{tpu_custom_call.1} parent=5 // pred_check
        %p3534 = pneg %p3533
      $region46: #{tpu_custom_call.1} parent=5 // pred_check_branch
        %3536 = sbr.rel (%p3534) target = $region48
      $region47: #{tpu_custom_call.1} parent=5 // pred_region
        %s3537 = ssub.s32 %s14, 2
        // Predicated region
        $region49: #{tpu_custom_call.1} parent=47 // pred_check
          %p3538 = pneg %p153
        $region50: #{tpu_custom_call.1} parent=47 // pred_check_branch
          %3540 = sbr.rel (%p3538) target = $region52
        $region51: #{tpu_custom_call.1} parent=47 // pred_region
          %s3541 = sand.u32 %s138, 1
          %s3542 = scalar_lea.sflag [#allocation6], %s3541
          %s3543 = sand.u32 %s138, 1
          %s3544 = smul.addr %s3543, 16
          %s3545 = scalar_lea.vmem [#allocation5], %s3544
          %3546 = dma.done %s3542, 256
        $region52: #{tpu_custom_call.1} parent=47 // pred_fallthru
          _
      $region48: #{tpu_custom_call.1} parent=5 // pred_fallthru
        _
    $region6: #{tpu_custom_call.1} parent=1 // loop_footer
      %s18 = sadd.s32 1, %s14
    $region7: #{tpu_custom_call.1} parent=1 // loop_footer_branch
      %13 = sbr.rel target = $region3
    $region8: #{tpu_custom_call.1} parent=1 // loop_exit
      _
    %3547 = vsyncpa [#allocation6], 1
    %s3548 = scalar_lea.sflag [#allocation6], 1
    %3549 = vsyncpa %s3548, 1

</llo_original>
